<compile_context>
chip_gen: v7x
topology: tpu7x:2x2x1
jax: 0.10.0
libtpu: 0.0.40
codegen_flags: <defaults>
</compile_context>

<pallas_src>
import functools

import jax
import jax.numpy as jnp
import numpy as np
from jax.experimental import pallas as pl
from jax.experimental.pallas import tpu as pltpu


def _mha_kernel(q_ref, k_ref, v_ref, wq_ref, wk_ref, wv_ref, wo_ref, bo_ref,
                o_ref, av_ref, *, num_heads, scale):
    """One grid step processes `bb` batch elements.

    q_ref:   (bb, N, C)  compute dtype (bf16 by default)
    k_ref:   (bb, M, C)
    v_ref:   (bb, M, C)
    w*_ref:  (C, C)      weights already transposed to (in, out); lane-dense
    bo_ref:  (1, C)      float32 projection bias
    o_ref:   (bb, N, C)  input dtype
    av_ref:  (bb, N, C)  VMEM scratch (compute dtype) = concat of per-head AV results
    """
    bb, N, C = q_ref.shape
    M = k_ref.shape[1]
    H = num_heads
    hd = C // H
    cdt = q_ref.dtype

    # ---- Input projections: full-width, lane-dense matmuls (fp32 accumulation).
    q2 = q_ref[...].reshape(bb * N, C)
    k2 = k_ref[...].reshape(bb * M, C)
    v2 = v_ref[...].reshape(bb * M, C)
    qh = jnp.dot(q2, wq_ref[...],
                 preferred_element_type=jnp.float32).astype(cdt).reshape(bb, N, C)
    kh = jnp.dot(k2, wk_ref[...],
                 preferred_element_type=jnp.float32).astype(cdt).reshape(bb, M, C)
    vh = jnp.dot(v2, wv_ref[...],
                 preferred_element_type=jnp.float32).astype(cdt).reshape(bb, M, C)

    # ---- Per-head attention (fp32 scores / softmax), each head's AV result written
    #      to its lane offset of the (bb, N, C) scratch.  The per-head matmul shapes
    #      (contraction depth hd, output width M/hd) are inherent to MHA.
    for h in range(H):
        sl = slice(h * hd, (h + 1) * hd)
        q_h = qh[:, :, sl]                                             # (bb, N, hd)
        k_h = kh[:, :, sl]                                             # (bb, M, hd)
        v_h = vh[:, :, sl]                                             # (bb, M, hd)
        s = jnp.einsum('bnd,bmd->bnm', q_h, k_h,
                       preferred_element_type=jnp.float32) * scale     # (bb, N, M) fp32
        s = s - jnp.max(s, axis=-1, keepdims=True)
        p = jnp.exp(s)
        p = p * pl.reciprocal(jnp.sum(p, axis=-1, keepdims=True), approx=True)
        # attn_drop: identity (p = 0.0, eval mode)
        o_h = jnp.einsum('bnm,bmd->bnd', p.astype(cdt), v_h,
                         preferred_element_type=jnp.float32)           # (bb, N, hd) fp32
        av_ref[:, :, sl] = o_h.astype(cdt)

    # ---- Output projection: ONE full-contraction matmul + bias (fp32 accumulation).
    #      sum over all lanes of av @ Wo.T  ==  concat_h(AV_h) @ Wo.T  (exact).
    av = av_ref[...].reshape(bb * N, C)
    out = jnp.dot(av, wo_ref[...], preferred_element_type=jnp.float32) + bo_ref[...]
    # proj_drop: identity (eval mode)
    o_ref[...] = out.reshape(bb, N, C).astype(o_ref.dtype)


def mha_forward(q, k, v, wq, wk, wv, wo, bo, *, num_heads, scale=None,
                compute_dtype=jnp.bfloat16, batch_block=None):
    """q: (B, N, C); k, v: (B, M, C); weights in PyTorch (out, in) layout; bo: (C,).

    compute_dtype: MXU operand dtype (bf16 default; fp32 accumulation & softmax stats).
    batch_block:   batch elements per grid step.  Default = whole batch in one step
                   (best on 1-TC v5e/v6e).  Pass 1 on v7x to feed both TensorCores.
    """
    B, N, C = q.shape
    _, M, _ = k.shape
    assert C % num_heads == 0
    if scale is None:
        scale = (C // num_heads) ** (-0.5)
    cdt = compute_dtype
    out_dtype = q.dtype

    bb = B if batch_block is None else batch_block
    assert B % bb == 0, "batch_block must divide B"

    # One-time wrapper-side (XLA) weight relayout: PyTorch (out, in) -> (in, out)
    # so the kernel does plain x @ W with lane-dense, C-wide outputs.
    wq_t = wq.T.astype(cdt)
    wk_t = wk.T.astype(cdt)
    wv_t = wv.T.astype(cdt)
    wo_t = wo.T.astype(cdt)
    bo2d = bo.reshape(1, C).astype(jnp.float32)

    qc = q.astype(cdt)
    kc = k.astype(cdt)
    vc = v.astype(cdt)

    kernel = functools.partial(_mha_kernel, num_heads=num_heads, scale=float(scale))

    return pl.pallas_call(
        kernel,
        out_shape=jax.ShapeDtypeStruct((B, N, C), out_dtype),
        grid_spec=pltpu.PrefetchScalarGridSpec(
            num_scalar_prefetch=0,
            grid=(B // bb,),
            in_specs=[
                pl.BlockSpec((bb, N, C), lambda b: (b, 0, 0)),   # q
                pl.BlockSpec((bb, M, C), lambda b: (b, 0, 0)),   # k
                pl.BlockSpec((bb, M, C), lambda b: (b, 0, 0)),   # v
                pl.BlockSpec((C, C), lambda b: (0, 0)),          # Wq.T
                pl.BlockSpec((C, C), lambda b: (0, 0)),          # Wk.T
                pl.BlockSpec((C, C), lambda b: (0, 0)),          # Wv.T
                pl.BlockSpec((C, C), lambda b: (0, 0)),          # Wo.T
                pl.BlockSpec((1, C), lambda b: (0, 0)),          # proj bias (fp32)
            ],
            out_specs=pl.BlockSpec((bb, N, C), lambda b: (b, 0, 0)),
            scratch_shapes=[pltpu.VMEM((bb, N, C), cdt)],
        ),
        compiler_params=pltpu.CompilerParams(
            dimension_semantics=("parallel",)),
    )(qc, kc, vc, wq_t, wk_t, wv_t, wo_t, bo2d)


def mha_reference(q, k, v, wq, wk, wv, wo, bo, *, num_heads, scale):
    """Pure-JAX reference mirroring the PyTorch forward exactly (fp32)."""
    B, N, C = q.shape
    _, M, _ = k.shape
    hd = C // num_heads
    qp = (q @ wq.T).reshape(B, N, num_heads, hd).transpose(0, 2, 1, 3)
    kp = (k @ wk.T).reshape(B, M, num_heads, hd).transpose(0, 2, 1, 3)
    vp = (v @ wv.T).reshape(B, M, num_heads, hd).transpose(0, 2, 1, 3)
    attn = jnp.einsum("bhnd,bhmd->bhnm", qp, kp) * scale
    attn = jax.nn.softmax(attn, axis=-1)
    x = jnp.einsum("bhnm,bhmd->bhnd", attn, vp)
    x = x.transpose(0, 2, 1, 3).reshape(B, N, C)
    return x @ wo.T + bo


if __name__ == "__main__":
    # Small shapes consistent with the module: dim=C=32, num_heads=8 (head_dim=4)
    B, N, M, C = 2, 8, 8, 32
    num_heads = 8
    scale = (C // num_heads) ** (-0.5)   # qk_scale=None -> head_dim ** -0.5

    key = jax.random.PRNGKey(0)
    kq, kk, kv, kwq, kwk, kwv, kwo, kbo = jax.random.split(key, 8)

    q = jax.random.normal(kq, (B, N, C), jnp.float32)
    k = jax.random.normal(kk, (B, M, C), jnp.float32)
    v = jax.random.normal(kv, (B, M, C), jnp.float32)

    # Deterministic synthetic parameters (qkv_bias=False -> no q/k/v bias).
    wq = jax.random.normal(kwq, (C, C), jnp.float32) * 0.05
    wk = jax.random.normal(kwk, (C, C), jnp.float32) * 0.05
    wv = jax.random.normal(kwv, (C, C), jnp.float32) * 0.05
    wo = jax.random.normal(kwo, (C, C), jnp.float32) * 0.05
    bo = jax.random.normal(kbo, (C,), jnp.float32) * 0.05

    ref = mha_reference(q, k, v, wq, wk, wv, wo, bo,
                        num_heads=num_heads, scale=scale)

    # fp32 compute path: strict parity check (tolerance covers the approx EUP reciprocal).
    out_f32 = jax.block_until_ready(
        mha_forward(q, k, v, wq, wk, wv, wo, bo,
                    num_heads=num_heads, scale=scale,
                    compute_dtype=jnp.float32))
    np.testing.assert_allclose(np.asarray(out_f32), np.asarray(ref),
                               rtol=5e-3, atol=5e-4)

    # Default path: bf16 MXU operands, fp32 accumulation / softmax, fp32 output dtype.
    out_bf16 = jax.block_until_ready(
        mha_forward(q, k, v, wq, wk, wv, wo, bo,
                    num_heads=num_heads, scale=scale))
    assert out_bf16.dtype == q.dtype
    np.testing.assert_allclose(np.asarray(out_bf16), np.asarray(ref),
                               rtol=5e-2, atol=1e-2)

    # v7x-style multi-step parallel batch axis also works.
    out_b1 = jax.block_until_ready(
        mha_forward(q, k, v, wq, wk, wv, wo, bo,
                    num_heads=num_heads, scale=scale, batch_block=1))
    np.testing.assert_allclose(np.asarray(out_b1), np.asarray(ref),
                               rtol=5e-2, atol=1e-2)

    print("KERNEL_OK")
</pallas_src>

<mosaic_0001>
module attributes {stable_mosaic.version = 11 : i64} {
  func.func @_mha_kernel(%arg0: i32, %arg1: memref<2x8x32xf32, #tpu.memory_space<vmem>>, %arg2: memref<2x8x32xf32, #tpu.memory_space<vmem>>, %arg3: memref<2x8x32xf32, #tpu.memory_space<vmem>>, %arg4: memref<32x32xf32, #tpu.memory_space<vmem>>, %arg5: memref<32x32xf32, #tpu.memory_space<vmem>>, %arg6: memref<32x32xf32, #tpu.memory_space<vmem>>, %arg7: memref<32x32xf32, #tpu.memory_space<vmem>>, %arg8: memref<1x32xf32, #tpu.memory_space<vmem>>, %arg9: memref<2x8x32xf32, #tpu.memory_space<vmem>>, %arg10: memref<2x8x32xf32, #tpu.memory_space<vmem>>) attributes {dimension_semantics = [#tpu.dimension_semantics<parallel>], iteration_bounds = array<i64: 1>, scalar_prefetch = 0 : i64, scratch_operands = 1 : i64, tpu.core_type = #tpu.core_type<tc>, window_params = [{transform_indices = @transform_0, window_bounds = array<i64: 2, 8, 32>}, {transform_indices = @transform_1, window_bounds = array<i64: 2, 8, 32>}, {transform_indices = @transform_2, window_bounds = array<i64: 2, 8, 32>}, {pipeline_mode = #tpu.pipeline_mode<synchronous>, transform_indices = @transform_3, window_bounds = array<i64: 32, 32>}, {pipeline_mode = #tpu.pipeline_mode<synchronous>, transform_indices = @transform_4, window_bounds = array<i64: 32, 32>}, {pipeline_mode = #tpu.pipeline_mode<synchronous>, transform_indices = @transform_5, window_bounds = array<i64: 32, 32>}, {pipeline_mode = #tpu.pipeline_mode<synchronous>, transform_indices = @transform_6, window_bounds = array<i64: 32, 32>}, {pipeline_mode = #tpu.pipeline_mode<synchronous>, transform_indices = @transform_7, window_bounds = array<i64: 1, 32>}, {transform_indices = @transform_8, window_bounds = array<i64: 2, 8, 32>}]} {
    %c0 = arith.constant 0 : index
    %c0_0 = arith.constant 0 : index
    %c0_1 = arith.constant 0 : index
    %0 = vector.load %arg1[%c0, %c0_0, %c0_1] : memref<2x8x32xf32, #tpu.memory_space<vmem>>, vector<2x8x32xf32>
    %1 = vector.shape_cast %0 : vector<2x8x32xf32> to vector<16x32xf32>
    %c0_2 = arith.constant 0 : index
    %c0_3 = arith.constant 0 : index
    %c0_4 = arith.constant 0 : index
    %2 = vector.load %arg2[%c0_2, %c0_3, %c0_4] : memref<2x8x32xf32, #tpu.memory_space<vmem>>, vector<2x8x32xf32>
    %3 = vector.shape_cast %2 : vector<2x8x32xf32> to vector<16x32xf32>
    %c0_5 = arith.constant 0 : index
    %c0_6 = arith.constant 0 : index
    %c0_7 = arith.constant 0 : index
    %4 = vector.load %arg3[%c0_5, %c0_6, %c0_7] : memref<2x8x32xf32, #tpu.memory_space<vmem>>, vector<2x8x32xf32>
    %5 = vector.shape_cast %4 : vector<2x8x32xf32> to vector<16x32xf32>
    %c0_8 = arith.constant 0 : index
    %c0_9 = arith.constant 0 : index
    %6 = vector.load %arg4[%c0_8, %c0_9] : memref<32x32xf32, #tpu.memory_space<vmem>>, vector<32x32xf32>
    %cst = arith.constant dense<0.000000e+00> : vector<16x32xf32>
    %7 = tpu.matmul %1, %6, %cst {dimension_numbers = #tpu.dot_dimension_numbers<[1], [0], [0], [1], [0, 0, 1, 1], [], []>} : vector<16x32xf32>, vector<32x32xf32>, vector<16x32xf32> -> vector<16x32xf32>
    %8 = vector.shape_cast %7 : vector<16x32xf32> to vector<2x8x32xf32>
    %c0_10 = arith.constant 0 : index
    %c0_11 = arith.constant 0 : index
    %9 = vector.load %arg5[%c0_10, %c0_11] : memref<32x32xf32, #tpu.memory_space<vmem>>, vector<32x32xf32>
    %cst_12 = arith.constant dense<0.000000e+00> : vector<16x32xf32>
    %10 = tpu.matmul %3, %9, %cst_12 {dimension_numbers = #tpu.dot_dimension_numbers<[1], [0], [0], [1], [0, 0, 1, 1], [], []>} : vector<16x32xf32>, vector<32x32xf32>, vector<16x32xf32> -> vector<16x32xf32>
    %11 = vector.shape_cast %10 : vector<16x32xf32> to vector<2x8x32xf32>
    %c0_13 = arith.constant 0 : index
    %c0_14 = arith.constant 0 : index
    %12 = vector.load %arg6[%c0_13, %c0_14] : memref<32x32xf32, #tpu.memory_space<vmem>>, vector<32x32xf32>
    %cst_15 = arith.constant dense<0.000000e+00> : vector<16x32xf32>
    %13 = tpu.matmul %5, %12, %cst_15 {dimension_numbers = #tpu.dot_dimension_numbers<[1], [0], [0], [1], [0, 0, 1, 1], [], []>} : vector<16x32xf32>, vector<32x32xf32>, vector<16x32xf32> -> vector<16x32xf32>
    %14 = vector.shape_cast %13 : vector<16x32xf32> to vector<2x8x32xf32>
    %15 = vector.extract_strided_slice %8 {offsets = [0, 0, 0], sizes = [2, 8, 4], strides = [1, 1, 1]} : vector<2x8x32xf32> to vector<2x8x4xf32>
    %16 = vector.extract_strided_slice %11 {offsets = [0, 0, 0], sizes = [2, 8, 4], strides = [1, 1, 1]} : vector<2x8x32xf32> to vector<2x8x4xf32>
    %17 = vector.extract_strided_slice %14 {offsets = [0, 0, 0], sizes = [2, 8, 4], strides = [1, 1, 1]} : vector<2x8x32xf32> to vector<2x8x4xf32>
    "tpu.trace_start"() <{level = 10 : i32, message = "bnd,bmd->bnm"}> : () -> ()
    %cst_16 = arith.constant dense<0.000000e+00> : vector<2x8x8xf32>
    %18 = tpu.matmul %15, %16, %cst_16 {dimension_numbers = #tpu.dot_dimension_numbers<[2], [2], [1], [1], [0, 0, 0, 1, 1, 1], [0], [0]>} : vector<2x8x4xf32>, vector<2x8x4xf32>, vector<2x8x8xf32> -> vector<2x8x8xf32>
    "tpu.trace_stop"() : () -> ()
    %cst_17 = arith.constant 5.000000e-01 : f32
    %19 = vector.broadcast %cst_17 : f32 to vector<2x8x8xf32>
    %20 = arith.mulf %18, %19 : vector<2x8x8xf32>
    %cst_18 = arith.constant dense<0xFF800000> : vector<2x8xf32>
    %21 = vector.multi_reduction <maximumf>, %20, %cst_18 [2] : vector<2x8x8xf32> to vector<2x8xf32>
    %22 = vector.shape_cast %21 : vector<2x8xf32> to vector<2x8x1xf32>
    %23 = vector.broadcast %22 : vector<2x8x1xf32> to vector<2x8x8xf32>
    %24 = arith.subf %20, %23 : vector<2x8x8xf32>
    %25 = math.exp %24 : vector<2x8x8xf32>
    %cst_19 = arith.constant dense<0.000000e+00> : vector<2x8xf32>
    %26 = vector.multi_reduction <add>, %25, %cst_19 [2] : vector<2x8x8xf32> to vector<2x8xf32>
    %27 = vector.shape_cast %26 : vector<2x8xf32> to vector<2x8x1xf32>
    %28 = tpu.reciprocal %27 {approx = true} : vector<2x8x1xf32> -> vector<2x8x1xf32>
    %29 = vector.broadcast %28 : vector<2x8x1xf32> to vector<2x8x8xf32>
    %30 = arith.mulf %25, %29 : vector<2x8x8xf32>
    "tpu.trace_start"() <{level = 10 : i32, message = "bnm,bmd->bnd"}> : () -> ()
    %cst_20 = arith.constant dense<0.000000e+00> : vector<2x8x4xf32>
    %31 = tpu.matmul %30, %17, %cst_20 {dimension_numbers = #tpu.dot_dimension_numbers<[2], [1], [1], [2], [0, 0, 0, 1, 1, 2], [0], [0]>} : vector<2x8x8xf32>, vector<2x8x4xf32>, vector<2x8x4xf32> -> vector<2x8x4xf32>
    "tpu.trace_stop"() : () -> ()
    %c0_21 = arith.constant 0 : index
    %c0_22 = arith.constant 0 : index
    %c0_23 = arith.constant 0 : index
    %32 = vector.load %arg10[%c0_21, %c0_22, %c0_23] : memref<2x8x32xf32, #tpu.memory_space<vmem>>, vector<2x8x4xf32>
    tpu.vector_store %arg10[%c0_21, %c0_22, %c0_23], %31 {strides = array<i32>} : memref<2x8x32xf32, #tpu.memory_space<vmem>>, vector<2x8x4xf32>,
    %33 = vector.extract_strided_slice %8 {offsets = [0, 0, 4], sizes = [2, 8, 4], strides = [1, 1, 1]} : vector<2x8x32xf32> to vector<2x8x4xf32>
    %34 = vector.extract_strided_slice %11 {offsets = [0, 0, 4], sizes = [2, 8, 4], strides = [1, 1, 1]} : vector<2x8x32xf32> to vector<2x8x4xf32>
    %35 = vector.extract_strided_slice %14 {offsets = [0, 0, 4], sizes = [2, 8, 4], strides = [1, 1, 1]} : vector<2x8x32xf32> to vector<2x8x4xf32>
    "tpu.trace_start"() <{level = 10 : i32, message = "bnd,bmd->bnm"}> : () -> ()
    %cst_24 = arith.constant dense<0.000000e+00> : vector<2x8x8xf32>
    %36 = tpu.matmul %33, %34, %cst_24 {dimension_numbers = #tpu.dot_dimension_numbers<[2], [2], [1], [1], [0, 0, 0, 1, 1, 1], [0], [0]>} : vector<2x8x4xf32>, vector<2x8x4xf32>, vector<2x8x8xf32> -> vector<2x8x8xf32>
    "tpu.trace_stop"() : () -> ()
    %cst_25 = arith.constant 5.000000e-01 : f32
    %37 = vector.broadcast %cst_25 : f32 to vector<2x8x8xf32>
    %38 = arith.mulf %36, %37 : vector<2x8x8xf32>
    %cst_26 = arith.constant dense<0xFF800000> : vector<2x8xf32>
    %39 = vector.multi_reduction <maximumf>, %38, %cst_26 [2] : vector<2x8x8xf32> to vector<2x8xf32>
    %40 = vector.shape_cast %39 : vector<2x8xf32> to vector<2x8x1xf32>
    %41 = vector.broadcast %40 : vector<2x8x1xf32> to vector<2x8x8xf32>
    %42 = arith.subf %38, %41 : vector<2x8x8xf32>
    %43 = math.exp %42 : vector<2x8x8xf32>
    %cst_27 = arith.constant dense<0.000000e+00> : vector<2x8xf32>
    %44 = vector.multi_reduction <add>, %43, %cst_27 [2] : vector<2x8x8xf32> to vector<2x8xf32>
    %45 = vector.shape_cast %44 : vector<2x8xf32> to vector<2x8x1xf32>
    %46 = tpu.reciprocal %45 {approx = true} : vector<2x8x1xf32> -> vector<2x8x1xf32>
    %47 = vector.broadcast %46 : vector<2x8x1xf32> to vector<2x8x8xf32>
    %48 = arith.mulf %43, %47 : vector<2x8x8xf32>
    "tpu.trace_start"() <{level = 10 : i32, message = "bnm,bmd->bnd"}> : () -> ()
    %cst_28 = arith.constant dense<0.000000e+00> : vector<2x8x4xf32>
    %49 = tpu.matmul %48, %35, %cst_28 {dimension_numbers = #tpu.dot_dimension_numbers<[2], [1], [1], [2], [0, 0, 0, 1, 1, 2], [0], [0]>} : vector<2x8x8xf32>, vector<2x8x4xf32>, vector<2x8x4xf32> -> vector<2x8x4xf32>
    "tpu.trace_stop"() : () -> ()
    %c0_29 = arith.constant 0 : index
    %c0_30 = arith.constant 0 : index
    %c4 = arith.constant 4 : index
    %50 = vector.load %arg10[%c0_29, %c0_30, %c4] : memref<2x8x32xf32, #tpu.memory_space<vmem>>, vector<2x8x4xf32>
    tpu.vector_store %arg10[%c0_29, %c0_30, %c4], %49 {strides = array<i32>} : memref<2x8x32xf32, #tpu.memory_space<vmem>>, vector<2x8x4xf32>,
    %51 = vector.extract_strided_slice %8 {offsets = [0, 0, 8], sizes = [2, 8, 4], strides = [1, 1, 1]} : vector<2x8x32xf32> to vector<2x8x4xf32>
    %52 = vector.extract_strided_slice %11 {offsets = [0, 0, 8], sizes = [2, 8, 4], strides = [1, 1, 1]} : vector<2x8x32xf32> to vector<2x8x4xf32>
    %53 = vector.extract_strided_slice %14 {offsets = [0, 0, 8], sizes = [2, 8, 4], strides = [1, 1, 1]} : vector<2x8x32xf32> to vector<2x8x4xf32>
    "tpu.trace_start"() <{level = 10 : i32, message = "bnd,bmd->bnm"}> : () -> ()
    %cst_31 = arith.constant dense<0.000000e+00> : vector<2x8x8xf32>
    %54 = tpu.matmul %51, %52, %cst_31 {dimension_numbers = #tpu.dot_dimension_numbers<[2], [2], [1], [1], [0, 0, 0, 1, 1, 1], [0], [0]>} : vector<2x8x4xf32>, vector<2x8x4xf32>, vector<2x8x8xf32> -> vector<2x8x8xf32>
    "tpu.trace_stop"() : () -> ()
    %cst_32 = arith.constant 5.000000e-01 : f32
    %55 = vector.broadcast %cst_32 : f32 to vector<2x8x8xf32>
    %56 = arith.mulf %54, %55 : vector<2x8x8xf32>
    %cst_33 = arith.constant dense<0xFF800000> : vector<2x8xf32>
    %57 = vector.multi_reduction <maximumf>, %56, %cst_33 [2] : vector<2x8x8xf32> to vector<2x8xf32>
    %58 = vector.shape_cast %57 : vector<2x8xf32> to vector<2x8x1xf32>
    %59 = vector.broadcast %58 : vector<2x8x1xf32> to vector<2x8x8xf32>
    %60 = arith.subf %56, %59 : vector<2x8x8xf32>
    %61 = math.exp %60 : vector<2x8x8xf32>
    %cst_34 = arith.constant dense<0.000000e+00> : vector<2x8xf32>
    %62 = vector.multi_reduction <add>, %61, %cst_34 [2] : vector<2x8x8xf32> to vector<2x8xf32>
    %63 = vector.shape_cast %62 : vector<2x8xf32> to vector<2x8x1xf32>
    %64 = tpu.reciprocal %63 {approx = true} : vector<2x8x1xf32> -> vector<2x8x1xf32>
    %65 = vector.broadcast %64 : vector<2x8x1xf32> to vector<2x8x8xf32>
    %66 = arith.mulf %61, %65 : vector<2x8x8xf32>
    "tpu.trace_start"() <{level = 10 : i32, message = "bnm,bmd->bnd"}> : () -> ()
    %cst_35 = arith.constant dense<0.000000e+00> : vector<2x8x4xf32>
    %67 = tpu.matmul %66, %53, %cst_35 {dimension_numbers = #tpu.dot_dimension_numbers<[2], [1], [1], [2], [0, 0, 0, 1, 1, 2], [0], [0]>} : vector<2x8x8xf32>, vector<2x8x4xf32>, vector<2x8x4xf32> -> vector<2x8x4xf32>
    "tpu.trace_stop"() : () -> ()
    %c0_36 = arith.constant 0 : index
    %c0_37 = arith.constant 0 : index
    %c8 = arith.constant 8 : index
    %68 = vector.load %arg10[%c0_36, %c0_37, %c8] : memref<2x8x32xf32, #tpu.memory_space<vmem>>, vector<2x8x4xf32>
    tpu.vector_store %arg10[%c0_36, %c0_37, %c8], %67 {strides = array<i32>} : memref<2x8x32xf32, #tpu.memory_space<vmem>>, vector<2x8x4xf32>,
    %69 = vector.extract_strided_slice %8 {offsets = [0, 0, 12], sizes = [2, 8, 4], strides = [1, 1, 1]} : vector<2x8x32xf32> to vector<2x8x4xf32>
    %70 = vector.extract_strided_slice %11 {offsets = [0, 0, 12], sizes = [2, 8, 4], strides = [1, 1, 1]} : vector<2x8x32xf32> to vector<2x8x4xf32>
    %71 = vector.extract_strided_slice %14 {offsets = [0, 0, 12], sizes = [2, 8, 4], strides = [1, 1, 1]} : vector<2x8x32xf32> to vector<2x8x4xf32>
    "tpu.trace_start"() <{level = 10 : i32, message = "bnd,bmd->bnm"}> : () -> ()
    %cst_38 = arith.constant dense<0.000000e+00> : vector<2x8x8xf32>
    %72 = tpu.matmul %69, %70, %cst_38 {dimension_numbers = #tpu.dot_dimension_numbers<[2], [2], [1], [1], [0, 0, 0, 1, 1, 1], [0], [0]>} : vector<2x8x4xf32>, vector<2x8x4xf32>, vector<2x8x8xf32> -> vector<2x8x8xf32>
    "tpu.trace_stop"() : () -> ()
    %cst_39 = arith.constant 5.000000e-01 : f32
    %73 = vector.broadcast %cst_39 : f32 to vector<2x8x8xf32>
    %74 = arith.mulf %72, %73 : vector<2x8x8xf32>
    %cst_40 = arith.constant dense<0xFF800000> : vector<2x8xf32>
    %75 = vector.multi_reduction <maximumf>, %74, %cst_40 [2] : vector<2x8x8xf32> to vector<2x8xf32>
    %76 = vector.shape_cast %75 : vector<2x8xf32> to vector<2x8x1xf32>
    %77 = vector.broadcast %76 : vector<2x8x1xf32> to vector<2x8x8xf32>
    %78 = arith.subf %74, %77 : vector<2x8x8xf32>
    %79 = math.exp %78 : vector<2x8x8xf32>
    %cst_41 = arith.constant dense<0.000000e+00> : vector<2x8xf32>
    %80 = vector.multi_reduction <add>, %79, %cst_41 [2] : vector<2x8x8xf32> to vector<2x8xf32>
    %81 = vector.shape_cast %80 : vector<2x8xf32> to vector<2x8x1xf32>
    %82 = tpu.reciprocal %81 {approx = true} : vector<2x8x1xf32> -> vector<2x8x1xf32>
    %83 = vector.broadcast %82 : vector<2x8x1xf32> to vector<2x8x8xf32>
    %84 = arith.mulf %79, %83 : vector<2x8x8xf32>
    "tpu.trace_start"() <{level = 10 : i32, message = "bnm,bmd->bnd"}> : () -> ()
    %cst_42 = arith.constant dense<0.000000e+00> : vector<2x8x4xf32>
    %85 = tpu.matmul %84, %71, %cst_42 {dimension_numbers = #tpu.dot_dimension_numbers<[2], [1], [1], [2], [0, 0, 0, 1, 1, 2], [0], [0]>} : vector<2x8x8xf32>, vector<2x8x4xf32>, vector<2x8x4xf32> -> vector<2x8x4xf32>
    "tpu.trace_stop"() : () -> ()
    %c0_43 = arith.constant 0 : index
    %c0_44 = arith.constant 0 : index
    %c12 = arith.constant 12 : index
    %86 = vector.load %arg10[%c0_43, %c0_44, %c12] : memref<2x8x32xf32, #tpu.memory_space<vmem>>, vector<2x8x4xf32>
    tpu.vector_store %arg10[%c0_43, %c0_44, %c12], %85 {strides = array<i32>} : memref<2x8x32xf32, #tpu.memory_space<vmem>>, vector<2x8x4xf32>,
    %87 = vector.extract_strided_slice %8 {offsets = [0, 0, 16], sizes = [2, 8, 4], strides = [1, 1, 1]} : vector<2x8x32xf32> to vector<2x8x4xf32>
    %88 = vector.extract_strided_slice %11 {offsets = [0, 0, 16], sizes = [2, 8, 4], strides = [1, 1, 1]} : vector<2x8x32xf32> to vector<2x8x4xf32>
    %89 = vector.extract_strided_slice %14 {offsets = [0, 0, 16], sizes = [2, 8, 4], strides = [1, 1, 1]} : vector<2x8x32xf32> to vector<2x8x4xf32>
    "tpu.trace_start"() <{level = 10 : i32, message = "bnd,bmd->bnm"}> : () -> ()
    %cst_45 = arith.constant dense<0.000000e+00> : vector<2x8x8xf32>
    %90 = tpu.matmul %87, %88, %cst_45 {dimension_numbers = #tpu.dot_dimension_numbers<[2], [2], [1], [1], [0, 0, 0, 1, 1, 1], [0], [0]>} : vector<2x8x4xf32>, vector<2x8x4xf32>, vector<2x8x8xf32> -> vector<2x8x8xf32>
    "tpu.trace_stop"() : () -> ()
    %cst_46 = arith.constant 5.000000e-01 : f32
    %91 = vector.broadcast %cst_46 : f32 to vector<2x8x8xf32>
    %92 = arith.mulf %90, %91 : vector<2x8x8xf32>
    %cst_47 = arith.constant dense<0xFF800000> : vector<2x8xf32>
    %93 = vector.multi_reduction <maximumf>, %92, %cst_47 [2] : vector<2x8x8xf32> to vector<2x8xf32>
    %94 = vector.shape_cast %93 : vector<2x8xf32> to vector<2x8x1xf32>
    %95 = vector.broadcast %94 : vector<2x8x1xf32> to vector<2x8x8xf32>
    %96 = arith.subf %92, %95 : vector<2x8x8xf32>
    %97 = math.exp %96 : vector<2x8x8xf32>
    %cst_48 = arith.constant dense<0.000000e+00> : vector<2x8xf32>
    %98 = vector.multi_reduction <add>, %97, %cst_48 [2] : vector<2x8x8xf32> to vector<2x8xf32>
    %99 = vector.shape_cast %98 : vector<2x8xf32> to vector<2x8x1xf32>
    %100 = tpu.reciprocal %99 {approx = true} : vector<2x8x1xf32> -> vector<2x8x1xf32>
    %101 = vector.broadcast %100 : vector<2x8x1xf32> to vector<2x8x8xf32>
    %102 = arith.mulf %97, %101 : vector<2x8x8xf32>
    "tpu.trace_start"() <{level = 10 : i32, message = "bnm,bmd->bnd"}> : () -> ()
    %cst_49 = arith.constant dense<0.000000e+00> : vector<2x8x4xf32>
    %103 = tpu.matmul %102, %89, %cst_49 {dimension_numbers = #tpu.dot_dimension_numbers<[2], [1], [1], [2], [0, 0, 0, 1, 1, 2], [0], [0]>} : vector<2x8x8xf32>, vector<2x8x4xf32>, vector<2x8x4xf32> -> vector<2x8x4xf32>
    "tpu.trace_stop"() : () -> ()
    %c0_50 = arith.constant 0 : index
    %c0_51 = arith.constant 0 : index
    %c16 = arith.constant 16 : index
    %104 = vector.load %arg10[%c0_50, %c0_51, %c16] : memref<2x8x32xf32, #tpu.memory_space<vmem>>, vector<2x8x4xf32>
    tpu.vector_store %arg10[%c0_50, %c0_51, %c16], %103 {strides = array<i32>} : memref<2x8x32xf32, #tpu.memory_space<vmem>>, vector<2x8x4xf32>,
    %105 = vector.extract_strided_slice %8 {offsets = [0, 0, 20], sizes = [2, 8, 4], strides = [1, 1, 1]} : vector<2x8x32xf32> to vector<2x8x4xf32>
    %106 = vector.extract_strided_slice %11 {offsets = [0, 0, 20], sizes = [2, 8, 4], strides = [1, 1, 1]} : vector<2x8x32xf32> to vector<2x8x4xf32>
    %107 = vector.extract_strided_slice %14 {offsets = [0, 0, 20], sizes = [2, 8, 4], strides = [1, 1, 1]} : vector<2x8x32xf32> to vector<2x8x4xf32>
    "tpu.trace_start"() <{level = 10 : i32, message = "bnd,bmd->bnm"}> : () -> ()
    %cst_52 = arith.constant dense<0.000000e+00> : vector<2x8x8xf32>
    %108 = tpu.matmul %105, %106, %cst_52 {dimension_numbers = #tpu.dot_dimension_numbers<[2], [2], [1], [1], [0, 0, 0, 1, 1, 1], [0], [0]>} : vector<2x8x4xf32>, vector<2x8x4xf32>, vector<2x8x8xf32> -> vector<2x8x8xf32>
    "tpu.trace_stop"() : () -> ()
    %cst_53 = arith.constant 5.000000e-01 : f32
    %109 = vector.broadcast %cst_53 : f32 to vector<2x8x8xf32>
    %110 = arith.mulf %108, %109 : vector<2x8x8xf32>
    %cst_54 = arith.constant dense<0xFF800000> : vector<2x8xf32>
    %111 = vector.multi_reduction <maximumf>, %110, %cst_54 [2] : vector<2x8x8xf32> to vector<2x8xf32>
    %112 = vector.shape_cast %111 : vector<2x8xf32> to vector<2x8x1xf32>
    %113 = vector.broadcast %112 : vector<2x8x1xf32> to vector<2x8x8xf32>
    %114 = arith.subf %110, %113 : vector<2x8x8xf32>
    %115 = math.exp %114 : vector<2x8x8xf32>
    %cst_55 = arith.constant dense<0.000000e+00> : vector<2x8xf32>
    %116 = vector.multi_reduction <add>, %115, %cst_55 [2] : vector<2x8x8xf32> to vector<2x8xf32>
    %117 = vector.shape_cast %116 : vector<2x8xf32> to vector<2x8x1xf32>
    %118 = tpu.reciprocal %117 {approx = true} : vector<2x8x1xf32> -> vector<2x8x1xf32>
    %119 = vector.broadcast %118 : vector<2x8x1xf32> to vector<2x8x8xf32>
    %120 = arith.mulf %115, %119 : vector<2x8x8xf32>
    "tpu.trace_start"() <{level = 10 : i32, message = "bnm,bmd->bnd"}> : () -> ()
    %cst_56 = arith.constant dense<0.000000e+00> : vector<2x8x4xf32>
    %121 = tpu.matmul %120, %107, %cst_56 {dimension_numbers = #tpu.dot_dimension_numbers<[2], [1], [1], [2], [0, 0, 0, 1, 1, 2], [0], [0]>} : vector<2x8x8xf32>, vector<2x8x4xf32>, vector<2x8x4xf32> -> vector<2x8x4xf32>
    "tpu.trace_stop"() : () -> ()
    %c0_57 = arith.constant 0 : index
    %c0_58 = arith.constant 0 : index
    %c20 = arith.constant 20 : index
    %122 = vector.load %arg10[%c0_57, %c0_58, %c20] : memref<2x8x32xf32, #tpu.memory_space<vmem>>, vector<2x8x4xf32>
    tpu.vector_store %arg10[%c0_57, %c0_58, %c20], %121 {strides = array<i32>} : memref<2x8x32xf32, #tpu.memory_space<vmem>>, vector<2x8x4xf32>,
    %123 = vector.extract_strided_slice %8 {offsets = [0, 0, 24], sizes = [2, 8, 4], strides = [1, 1, 1]} : vector<2x8x32xf32> to vector<2x8x4xf32>
    %124 = vector.extract_strided_slice %11 {offsets = [0, 0, 24], sizes = [2, 8, 4], strides = [1, 1, 1]} : vector<2x8x32xf32> to vector<2x8x4xf32>
    %125 = vector.extract_strided_slice %14 {offsets = [0, 0, 24], sizes = [2, 8, 4], strides = [1, 1, 1]} : vector<2x8x32xf32> to vector<2x8x4xf32>
    "tpu.trace_start"() <{level = 10 : i32, message = "bnd,bmd->bnm"}> : () -> ()
    %cst_59 = arith.constant dense<0.000000e+00> : vector<2x8x8xf32>
    %126 = tpu.matmul %123, %124, %cst_59 {dimension_numbers = #tpu.dot_dimension_numbers<[2], [2], [1], [1], [0, 0, 0, 1, 1, 1], [0], [0]>} : vector<2x8x4xf32>, vector<2x8x4xf32>, vector<2x8x8xf32> -> vector<2x8x8xf32>
    "tpu.trace_stop"() : () -> ()
    %cst_60 = arith.constant 5.000000e-01 : f32
    %127 = vector.broadcast %cst_60 : f32 to vector<2x8x8xf32>
    %128 = arith.mulf %126, %127 : vector<2x8x8xf32>
    %cst_61 = arith.constant dense<0xFF800000> : vector<2x8xf32>
    %129 = vector.multi_reduction <maximumf>, %128, %cst_61 [2] : vector<2x8x8xf32> to vector<2x8xf32>
    %130 = vector.shape_cast %129 : vector<2x8xf32> to vector<2x8x1xf32>
    %131 = vector.broadcast %130 : vector<2x8x1xf32> to vector<2x8x8xf32>
    %132 = arith.subf %128, %131 : vector<2x8x8xf32>
    %133 = math.exp %132 : vector<2x8x8xf32>
    %cst_62 = arith.constant dense<0.000000e+00> : vector<2x8xf32>
    %134 = vector.multi_reduction <add>, %133, %cst_62 [2] : vector<2x8x8xf32> to vector<2x8xf32>
    %135 = vector.shape_cast %134 : vector<2x8xf32> to vector<2x8x1xf32>
    %136 = tpu.reciprocal %135 {approx = true} : vector<2x8x1xf32> -> vector<2x8x1xf32>
    %137 = vector.broadcast %136 : vector<2x8x1xf32> to vector<2x8x8xf32>
    %138 = arith.mulf %133, %137 : vector<2x8x8xf32>
    "tpu.trace_start"() <{level = 10 : i32, message = "bnm,bmd->bnd"}> : () -> ()
    %cst_63 = arith.constant dense<0.000000e+00> : vector<2x8x4xf32>
    %139 = tpu.matmul %138, %125, %cst_63 {dimension_numbers = #tpu.dot_dimension_numbers<[2], [1], [1], [2], [0, 0, 0, 1, 1, 2], [0], [0]>} : vector<2x8x8xf32>, vector<2x8x4xf32>, vector<2x8x4xf32> -> vector<2x8x4xf32>
    "tpu.trace_stop"() : () -> ()
    %c0_64 = arith.constant 0 : index
    %c0_65 = arith.constant 0 : index
    %c24 = arith.constant 24 : index
    %140 = vector.load %arg10[%c0_64, %c0_65, %c24] : memref<2x8x32xf32, #tpu.memory_space<vmem>>, vector<2x8x4xf32>
    tpu.vector_store %arg10[%c0_64, %c0_65, %c24], %139 {strides = array<i32>} : memref<2x8x32xf32, #tpu.memory_space<vmem>>, vector<2x8x4xf32>,
    %141 = vector.extract_strided_slice %8 {offsets = [0, 0, 28], sizes = [2, 8, 4], strides = [1, 1, 1]} : vector<2x8x32xf32> to vector<2x8x4xf32>
    %142 = vector.extract_strided_slice %11 {offsets = [0, 0, 28], sizes = [2, 8, 4], strides = [1, 1, 1]} : vector<2x8x32xf32> to vector<2x8x4xf32>
    %143 = vector.extract_strided_slice %14 {offsets = [0, 0, 28], sizes = [2, 8, 4], strides = [1, 1, 1]} : vector<2x8x32xf32> to vector<2x8x4xf32>
    "tpu.trace_start"() <{level = 10 : i32, message = "bnd,bmd->bnm"}> : () -> ()
    %cst_66 = arith.constant dense<0.000000e+00> : vector<2x8x8xf32>
    %144 = tpu.matmul %141, %142, %cst_66 {dimension_numbers = #tpu.dot_dimension_numbers<[2], [2], [1], [1], [0, 0, 0, 1, 1, 1], [0], [0]>} : vector<2x8x4xf32>, vector<2x8x4xf32>, vector<2x8x8xf32> -> vector<2x8x8xf32>
    "tpu.trace_stop"() : () -> ()
    %cst_67 = arith.constant 5.000000e-01 : f32
    %145 = vector.broadcast %cst_67 : f32 to vector<2x8x8xf32>
    %146 = arith.mulf %144, %145 : vector<2x8x8xf32>
    %cst_68 = arith.constant dense<0xFF800000> : vector<2x8xf32>
    %147 = vector.multi_reduction <maximumf>, %146, %cst_68 [2] : vector<2x8x8xf32> to vector<2x8xf32>
    %148 = vector.shape_cast %147 : vector<2x8xf32> to vector<2x8x1xf32>
    %149 = vector.broadcast %148 : vector<2x8x1xf32> to vector<2x8x8xf32>
    %150 = arith.subf %146, %149 : vector<2x8x8xf32>
    %151 = math.exp %150 : vector<2x8x8xf32>
    %cst_69 = arith.constant dense<0.000000e+00> : vector<2x8xf32>
    %152 = vector.multi_reduction <add>, %151, %cst_69 [2] : vector<2x8x8xf32> to vector<2x8xf32>
    %153 = vector.shape_cast %152 : vector<2x8xf32> to vector<2x8x1xf32>
    %154 = tpu.reciprocal %153 {approx = true} : vector<2x8x1xf32> -> vector<2x8x1xf32>
    %155 = vector.broadcast %154 : vector<2x8x1xf32> to vector<2x8x8xf32>
    %156 = arith.mulf %151, %155 : vector<2x8x8xf32>
    "tpu.trace_start"() <{level = 10 : i32, message = "bnm,bmd->bnd"}> : () -> ()
    %cst_70 = arith.constant dense<0.000000e+00> : vector<2x8x4xf32>
    %157 = tpu.matmul %156, %143, %cst_70 {dimension_numbers = #tpu.dot_dimension_numbers<[2], [1], [1], [2], [0, 0, 0, 1, 1, 2], [0], [0]>} : vector<2x8x8xf32>, vector<2x8x4xf32>, vector<2x8x4xf32> -> vector<2x8x4xf32>
    "tpu.trace_stop"() : () -> ()
    %c0_71 = arith.constant 0 : index
    %c0_72 = arith.constant 0 : index
    %c28 = arith.constant 28 : index
    %158 = vector.load %arg10[%c0_71, %c0_72, %c28] : memref<2x8x32xf32, #tpu.memory_space<vmem>>, vector<2x8x4xf32>
    tpu.vector_store %arg10[%c0_71, %c0_72, %c28], %157 {strides = array<i32>} : memref<2x8x32xf32, #tpu.memory_space<vmem>>, vector<2x8x4xf32>,
    %c0_73 = arith.constant 0 : index
    %c0_74 = arith.constant 0 : index
    %c0_75 = arith.constant 0 : index
    %159 = vector.load %arg10[%c0_73, %c0_74, %c0_75] : memref<2x8x32xf32, #tpu.memory_space<vmem>>, vector<2x8x32xf32>
    %160 = vector.shape_cast %159 : vector<2x8x32xf32> to vector<16x32xf32>
    %c0_76 = arith.constant 0 : index
    %c0_77 = arith.constant 0 : index
    %161 = vector.load %arg7[%c0_76, %c0_77] : memref<32x32xf32, #tpu.memory_space<vmem>>, vector<32x32xf32>
    %cst_78 = arith.constant dense<0.000000e+00> : vector<16x32xf32>
    %162 = tpu.matmul %160, %161, %cst_78 {dimension_numbers = #tpu.dot_dimension_numbers<[1], [0], [0], [1], [0, 0, 1, 1], [], []>} : vector<16x32xf32>, vector<32x32xf32>, vector<16x32xf32> -> vector<16x32xf32>
    %c0_79 = arith.constant 0 : index
    %c0_80 = arith.constant 0 : index
    %163 = vector.load %arg8[%c0_79, %c0_80] : memref<1x32xf32, #tpu.memory_space<vmem>>, vector<1x32xf32>
    %164 = vector.broadcast %163 : vector<1x32xf32> to vector<16x32xf32>
    %165 = arith.addf %162, %164 : vector<16x32xf32>
    %166 = vector.shape_cast %165 : vector<16x32xf32> to vector<2x8x32xf32>
    %c0_81 = arith.constant 0 : index
    %c0_82 = arith.constant 0 : index
    %c0_83 = arith.constant 0 : index
    %167 = vector.load %arg9[%c0_81, %c0_82, %c0_83] : memref<2x8x32xf32, #tpu.memory_space<vmem>>, vector<2x8x32xf32>
    tpu.vector_store %arg9[%c0_81, %c0_82, %c0_83], %166 {strides = array<i32>} : memref<2x8x32xf32, #tpu.memory_space<vmem>>, vector<2x8x32xf32>,
    return
  }
  func.func @transform_0(%arg0: i32) -> (i32, i32, i32) {
    %c0_i32 = arith.constant 0 : i32
    %c0_i32_0 = arith.constant 0 : i32
    %c0_i32_1 = arith.constant 0 : i32
    return %arg0, %c0_i32, %c0_i32_0 : i32, i32, i32
  }
  func.func @transform_1(%arg0: i32) -> (i32, i32, i32) {
    %c0_i32 = arith.constant 0 : i32
    %c0_i32_0 = arith.constant 0 : i32
    %c0_i32_1 = arith.constant 0 : i32
    return %arg0, %c0_i32, %c0_i32_0 : i32, i32, i32
  }
  func.func @transform_2(%arg0: i32) -> (i32, i32, i32) {
    %c0_i32 = arith.constant 0 : i32
    %c0_i32_0 = arith.constant 0 : i32
    %c0_i32_1 = arith.constant 0 : i32
    return %arg0, %c0_i32, %c0_i32_0 : i32, i32, i32
  }
  func.func @transform_3(%arg0: i32) -> (i32, i32) {
    %c0_i32 = arith.constant 0 : i32
    %c0_i32_0 = arith.constant 0 : i32
    %c0_i32_1 = arith.constant 0 : i32
    return %c0_i32, %c0_i32_0 : i32, i32
  }
  func.func @transform_4(%arg0: i32) -> (i32, i32) {
    %c0_i32 = arith.constant 0 : i32
    %c0_i32_0 = arith.constant 0 : i32
    %c0_i32_1 = arith.constant 0 : i32
    return %c0_i32, %c0_i32_0 : i32, i32
  }
  func.func @transform_5(%arg0: i32) -> (i32, i32) {
    %c0_i32 = arith.constant 0 : i32
    %c0_i32_0 = arith.constant 0 : i32
    %c0_i32_1 = arith.constant 0 : i32
    return %c0_i32, %c0_i32_0 : i32, i32
  }
  func.func @transform_6(%arg0: i32) -> (i32, i32) {
    %c0_i32 = arith.constant 0 : i32
    %c0_i32_0 = arith.constant 0 : i32
    %c0_i32_1 = arith.constant 0 : i32
    return %c0_i32, %c0_i32_0 : i32, i32
  }
  func.func @transform_7(%arg0: i32) -> (i32, i32) {
    %c0_i32 = arith.constant 0 : i32
    %c0_i32_0 = arith.constant 0 : i32
    %c0_i32_1 = arith.constant 0 : i32
    return %c0_i32, %c0_i32_0 : i32, i32
  }
  func.func @transform_8(%arg0: i32) -> (i32, i32, i32) {
    %c0_i32 = arith.constant 0 : i32
    %c0_i32_0 = arith.constant 0 : i32
    %c0_i32_1 = arith.constant 0 : i32
    return %arg0, %c0_i32, %c0_i32_0 : i32, i32, i32
  }
}

</mosaic_0001>

<llo_original>
// kernel: tpu_custom_call.1
$region0: #{tpu_custom_call.1}
  #allocation0 [shape = 'u32[]', space=smem, size = 0x4, offset = 0x4, fixed_abs, tag = 'smem constant byte address 0x4 - core index']
  #allocation1 [shape = 'u32[144,128]{1,0:T(1,128)}', space=vmem, size = 0x12000, scoped, tag = 'internal scratch']
  #allocation2 [shape = 'f32[2,8,32]{2,1,0:T(8,128)}', space=vmem, size = 0x2000, scoped, tag = 'scratch operand']
  %s0 = inlined_call_operand.hbm [shape: f32[2,8,32], index: 0, kind: input, shape index: {}]
  %s1 = inlined_call_operand.hbm [shape: f32[2,8,32], index: 1, kind: input, shape index: {}]
  %s2 = inlined_call_operand.hbm [shape: f32[2,8,32], index: 2, kind: input, shape index: {}]
  %s3 = inlined_call_operand.hbm [shape: f32[32,32], index: 3, kind: input, shape index: {}]
  %s4 = inlined_call_operand.hbm [shape: f32[32,32], index: 4, kind: input, shape index: {}]
  %s5 = inlined_call_operand.hbm [shape: f32[32,32], index: 5, kind: input, shape index: {}]
  %s6 = inlined_call_operand.hbm [shape: f32[32,32], index: 6, kind: input, shape index: {}]
  %s7 = inlined_call_operand.vmem [shape: f32[1,32], index: 7, kind: input, shape index: {}]
  %s8 = inlined_call_operand.hbm [shape: f32[2,8,32], index: 8, kind: output, shape index: {}]
  %s9 = sld [smem:[#allocation0]]
  $region70: #{tpu_custom_call.1} parent=0
    _
  %s11 = ssub.s32 1, %s9
  %s12 = scalar_select 0, %s11, %s9
  $region1: #{tpu_custom_call.1} parent=0
    #allocation3 [shape = 'u8[8192]{0}', space=vmem, size = 0x2000, scoped, tag = 'input window, operand 0, single buffered']
    #allocation4 [shape = 's32[1]{0}', space=sflag, size = 0x4, scoped, tag = 'scoped memory for tpu_custom_call.1']
    #allocation5 [shape = 's32[1]{0}', space=sflag, size = 0x4, scoped, tag = 'scoped memory for tpu_custom_call.1']
    #allocation6 [shape = 'u8[8192]{0}', space=vmem, size = 0x2000, scoped, tag = 'input window, operand 1, single buffered']
    #allocation7 [shape = 's32[1]{0}', space=sflag, size = 0x4, scoped, tag = 'scoped memory for tpu_custom_call.1']
    #allocation8 [shape = 'u8[8192]{0}', space=vmem, size = 0x2000, scoped, tag = 'input window, operand 2, single buffered']
    #allocation9 [shape = 'u8[16384]{0}', space=vmem, size = 0x4000, scoped, tag = 'input window, operand 3, single buffered']
    #allocation10 [shape = 's32[1]{0}', space=sflag, size = 0x4, scoped, tag = 'scoped memory for tpu_custom_call.1']
    #allocation11 [shape = 'u8[16384]{0}', space=vmem, size = 0x4000, scoped, tag = 'input window, operand 4, single buffered']
    #allocation12 [shape = 'u8[16384]{0}', space=vmem, size = 0x4000, scoped, tag = 'input window, operand 5, single buffered']
    #allocation13 [shape = 's32[1]{0}', space=sflag, size = 0x4, scoped, tag = 'scoped memory for tpu_custom_call.1']
    #allocation14 [shape = 'u8[16384]{0}', space=vmem, size = 0x4000, scoped, tag = 'input window, operand 6, single buffered']
    #allocation15 [shape = 'u8[8192]{0}', space=vmem, size = 0x2000, scoped, tag = 'output window, operand 0, single buffered']
    %13 = vsyncpa [#allocation4], 0
    %14 = vsyncpa [#allocation7], 0
    %15 = vsyncpa [#allocation10], 0
    %16 = vsyncpa [#allocation13], 0
    %17 = vsyncpa [#allocation5], 0
    // Predicated region
    $region2: #{tpu_custom_call.1} parent=1 // pred_check
      _
    $region3: #{tpu_custom_call.1} parent=1 // pred_check_branch
      %19 = sbr.rel (0) target = $region5
    $region4: #{tpu_custom_call.1} parent=1 // pred_region
      %s21 = ssub.s32 256, 256
      %22 = vsyncadd [#allocation4], %s21
      %s23 = sshll.u32 [#allocation3], 4
      %s24 = int_to_ptr.vmem [resolvable:$true] %s23
      %29 = dma.hbm_to_vmem [thread:$0]  %s0, 256, %s24, [#allocation4], 128, 128, 8
    $region5: #{tpu_custom_call.1} parent=1 // pred_fallthru
      _
    // Predicated region
    $region6: #{tpu_custom_call.1} parent=1 // pred_check
      _
    $region7: #{tpu_custom_call.1} parent=1 // pred_check_branch
      %31 = sbr.rel (0) target = $region9
    $region8: #{tpu_custom_call.1} parent=1 // pred_region
      %s33 = ssub.s32 256, 256
      %34 = vsyncadd [#allocation7], %s33
      %s35 = sshll.u32 [#allocation6], 4
      %s36 = int_to_ptr.vmem [resolvable:$true] %s35
      %41 = dma.hbm_to_vmem [thread:$0]  %s1, 256, %s36, [#allocation7], 128, 128, 8
    $region9: #{tpu_custom_call.1} parent=1 // pred_fallthru
      _
    // Predicated region
    $region10: #{tpu_custom_call.1} parent=1 // pred_check
      _
    $region11: #{tpu_custom_call.1} parent=1 // pred_check_branch
      %43 = sbr.rel (0) target = $region13
    $region12: #{tpu_custom_call.1} parent=1 // pred_region
      %s45 = ssub.s32 256, 256
      %46 = vsyncadd [#allocation7], %s45
      %s47 = sshll.u32 [#allocation8], 4
      %s48 = int_to_ptr.vmem [resolvable:$true] %s47
      %53 = dma.hbm_to_vmem [thread:$0]  %s2, 256, %s48, [#allocation7], 128, 128, 8
    $region13: #{tpu_custom_call.1} parent=1 // pred_fallthru
      _
    // Predicated region
    $region14: #{tpu_custom_call.1} parent=1 // pred_check
      _
    $region15: #{tpu_custom_call.1} parent=1 // pred_check_branch
      %55 = sbr.rel (0) target = $region17
    $region16: #{tpu_custom_call.1} parent=1 // pred_region
      %s57 = ssub.s32 512, 512
      %58 = vsyncadd [#allocation10], %s57
      %s59 = sshll.u32 [#allocation9], 4
      %s60 = int_to_ptr.vmem [resolvable:$true] %s59
      %65 = dma.hbm_to_vmem [thread:$0]  %s3, 512, %s60, [#allocation10], 128, 128, 8
    $region17: #{tpu_custom_call.1} parent=1 // pred_fallthru
      _
    // Predicated region
    $region18: #{tpu_custom_call.1} parent=1 // pred_check
      _
    $region19: #{tpu_custom_call.1} parent=1 // pred_check_branch
      %67 = sbr.rel (0) target = $region21
    $region20: #{tpu_custom_call.1} parent=1 // pred_region
      %s69 = ssub.s32 512, 512
      %70 = vsyncadd [#allocation10], %s69
      %s71 = sshll.u32 [#allocation11], 4
      %s72 = int_to_ptr.vmem [resolvable:$true] %s71
      %77 = dma.hbm_to_vmem [thread:$0]  %s4, 512, %s72, [#allocation10], 128, 128, 8
    $region21: #{tpu_custom_call.1} parent=1 // pred_fallthru
      _
    // Predicated region
    $region22: #{tpu_custom_call.1} parent=1 // pred_check
      _
    $region23: #{tpu_custom_call.1} parent=1 // pred_check_branch
      %79 = sbr.rel (0) target = $region25
    $region24: #{tpu_custom_call.1} parent=1 // pred_region
      %s81 = ssub.s32 512, 512
      %82 = vsyncadd [#allocation13], %s81
      %s83 = sshll.u32 [#allocation12], 4
      %s84 = int_to_ptr.vmem [resolvable:$true] %s83
      %89 = dma.hbm_to_vmem [thread:$0]  %s5, 512, %s84, [#allocation13], 128, 128, 8
    $region25: #{tpu_custom_call.1} parent=1 // pred_fallthru
      _
    // Predicated region
    $region26: #{tpu_custom_call.1} parent=1 // pred_check
      _
    $region27: #{tpu_custom_call.1} parent=1 // pred_check_branch
      %91 = sbr.rel (0) target = $region29
    $region28: #{tpu_custom_call.1} parent=1 // pred_region
      %s93 = ssub.s32 512, 512
      %94 = vsyncadd [#allocation13], %s93
      %s95 = sshll.u32 [#allocation14], 4
      %s96 = int_to_ptr.vmem [resolvable:$true] %s95
      %101 = dma.hbm_to_vmem [thread:$0]  %s6, 512, %s96, [#allocation13], 128, 128, 8
    $region29: #{tpu_custom_call.1} parent=1 // pred_fallthru
      _
    // Predicated region
    $region30: #{tpu_custom_call.1} parent=1 // pred_check
      _
    $region31: #{tpu_custom_call.1} parent=1 // pred_check_branch
      %103 = sbr.rel (0) target = $region33
    $region32: #{tpu_custom_call.1} parent=1 // pred_region
      _
    $region33: #{tpu_custom_call.1} parent=1 // pred_fallthru
      _
    // Predicated region
    $region34: #{tpu_custom_call.1} parent=1 // pred_check
      _
    $region35: #{tpu_custom_call.1} parent=1 // pred_check_branch
      %105 = sbr.rel (0) target = $region37
    $region36: #{tpu_custom_call.1} parent=1 // pred_region
      %106 = dma.done [#allocation4], 256
    $region37: #{tpu_custom_call.1} parent=1 // pred_fallthru
      _
    // Predicated region
    $region38: #{tpu_custom_call.1} parent=1 // pred_check
      _
    $region39: #{tpu_custom_call.1} parent=1 // pred_check_branch
      %108 = sbr.rel (0) target = $region41
    $region40: #{tpu_custom_call.1} parent=1 // pred_region
      %109 = dma.done [#allocation7], 256
    $region41: #{tpu_custom_call.1} parent=1 // pred_fallthru
      _
    // Predicated region
    $region42: #{tpu_custom_call.1} parent=1 // pred_check
      _
    $region43: #{tpu_custom_call.1} parent=1 // pred_check_branch
      %111 = sbr.rel (0) target = $region45
    $region44: #{tpu_custom_call.1} parent=1 // pred_region
      %112 = dma.done [#allocation7], 256
    $region45: #{tpu_custom_call.1} parent=1 // pred_fallthru
      _
    // Predicated region
    $region46: #{tpu_custom_call.1} parent=1 // pred_check
      _
    $region47: #{tpu_custom_call.1} parent=1 // pred_check_branch
      %114 = sbr.rel (0) target = $region49
    $region48: #{tpu_custom_call.1} parent=1 // pred_region
      %115 = dma.done [#allocation10], 512
    $region49: #{tpu_custom_call.1} parent=1 // pred_fallthru
      _
    // Predicated region
    $region50: #{tpu_custom_call.1} parent=1 // pred_check
      _
    $region51: #{tpu_custom_call.1} parent=1 // pred_check_branch
      %117 = sbr.rel (0) target = $region53
    $region52: #{tpu_custom_call.1} parent=1 // pred_region
      %118 = dma.done [#allocation10], 512
    $region53: #{tpu_custom_call.1} parent=1 // pred_fallthru
      _
    // Predicated region
    $region54: #{tpu_custom_call.1} parent=1 // pred_check
      _
    $region55: #{tpu_custom_call.1} parent=1 // pred_check_branch
      %120 = sbr.rel (0) target = $region57
    $region56: #{tpu_custom_call.1} parent=1 // pred_region
      %121 = dma.done [#allocation13], 512
    $region57: #{tpu_custom_call.1} parent=1 // pred_fallthru
      _
    // Predicated region
    $region58: #{tpu_custom_call.1} parent=1 // pred_check
      _
    $region59: #{tpu_custom_call.1} parent=1 // pred_check_branch
      %123 = sbr.rel (0) target = $region61
    $region60: #{tpu_custom_call.1} parent=1 // pred_region
      %124 = dma.done [#allocation13], 512
    $region61: #{tpu_custom_call.1} parent=1 // pred_fallthru
      _
    %v125 = vld [vmem:[#allocation3] sm:$0xff]
    %v126 = vld [vmem:[#allocation3 + $0x8] sm:$0xff]
    %v127 = vld [vmem:[#allocation6] sm:$0xff]
    %v128 = vld [vmem:[#allocation6 + $0x8] sm:$0xff]
    %v129 = vld [vmem:[#allocation8] sm:$0xff]
    %v130 = vld [vmem:[#allocation8 + $0x8] sm:$0xff]
    %v131 = vld [vmem:[#allocation9] sm:$0xff]
    %v132 = vld [vmem:[#allocation9 + $0x8] sm:$0xff]
    %v133 = vld [vmem:[#allocation9 + $0x10] sm:$0xff]
    %v134 = vld [vmem:[#allocation9 + $0x18] sm:$0xff]
    %vm135 = vcmask 261120
    %v137 = vsel %vm135, %v125, 0
    %v140 = vsel %vm135, %v126, 0
    %142 = vmatprep.subr.mxu0 0.0
    %143 = vmatpush1.msra.mxu0 %v131
    %144 = vmatprep.subr.mxu0 0.0
    %145 = vmatpush1.msra.mxu0 %v132
    %146 = vmatprep.subr.mxu0 0.0
    %147 = vmatpush1.msra.mxu0 %v133
    %148 = vmatprep.subr.mxu0 0.0
    %149 = vmatpush1.msra.mxu0 %v134
    %150 = vmatprep.subr.mxu0 0.0
    %151 = vmatpush1.msra.mxu0 0.0
    %152 = vmatprep.subr.mxu0 0.0
    %153 = vmatpush1.msra.mxu0 0.0
    %154 = vmatprep.subr.mxu0 0.0
    %155 = vmatpush1.msra.mxu0 0.0
    %156 = vmatprep.subr.mxu0 0.0
    %157 = vmatpush1.msra.mxu0 0.0
    %158 = vmatprep.subr.mxu0 0.0
    %159 = vmatpush1.msra.mxu0 0.0
    %160 = vmatprep.subr.mxu0 0.0
    %161 = vmatpush1.msra.mxu0 0.0
    %162 = vmatprep.subr.mxu0 0.0
    %163 = vmatpush1.msra.mxu0 0.0
    %164 = vmatprep.subr.mxu0 0.0
    %165 = vmatpush1.msra.mxu0 0.0
    %166 = vmatprep.subr.mxu0 0.0
    %167 = vmatpush1.msra.mxu0 0.0
    %168 = vmatprep.subr.mxu0 0.0
    %169 = vmatpush1.msra.mxu0 0.0
    %170 = vmatprep.subr.mxu0 0.0
    %171 = vmatpush1.msra.mxu0 0.0
    %172 = vmatprep.subr.mxu0 0.0
    %173 = vmatpush1.msra.mxu0 0.0
    %174 = vmatprep.subr.mxu0 0.0
    %175 = vmatpush1.msra.mxu0 0.0
    %176 = vmatprep.subr.mxu0 0.0
    %177 = vmatpush1.msra.mxu0 0.0
    %178 = vmatprep.subr.mxu0 0.0
    %179 = vmatpush1.msra.mxu0 0.0
    %180 = vmatprep.subr.mxu0 0.0
    %181 = vmatpush1.msra.mxu0 0.0
    %182 = vmatprep.subr.mxu0 0.0
    %183 = vmatpush1.msra.mxu0 0.0
    %184 = vmatprep.subr.mxu0 0.0
    %185 = vmatpush1.msra.mxu0 0.0
    %186 = vmatprep.subr.mxu0 0.0
    %187 = vmatpush1.msra.mxu0 0.0
    %188 = vmatprep.subr.mxu0 0.0
    %189 = vmatpush1.msra.mxu0 0.0
    %190 = vmatprep.subr.mxu0 0.0
    %191 = vmatpush1.msra.mxu0 0.0
    %192 = vmatprep.subr.mxu0 0.0
    %193 = vmatpush1.msra.mxu0 0.0
    %194 = vmatprep.subr.mxu0 0.0
    %195 = vmatpush1.msra.mxu0 0.0
    %196 = vmatprep.subr.mxu0 0.0
    %197 = vmatpush1.msra.mxu0 0.0
    %198 = vmatprep.subr.mxu0 0.0
    %199 = vmatpush1.msra.mxu0 0.0
    %200 = vmatprep.subr.mxu0 0.0
    %201 = vmatpush1.msra.mxu0 0.0
    %202 = vmatprep.subr.mxu0 0.0
    %203 = vmatpush1.msra.mxu0 0.0
    %204 = vmatprep.subr.mxu0 0.0
    %205 = vmatpush1.msra.mxu0 0.0
    %206 = vmatprep.mubr.f32.mxu0 0.0
    %207 = vmatmul.mubr.f32.gmra.mrb[0].mxu0 %v137
    %v208 = vpop.f32.mrb[0].mxu0
    %v209 = vadd.f32 0.0, %v208
    %v210 = vpop.f32.mrb[0].mxu0
    %211 = vmatprep.mubr.f32.mxu0 0.0
    %212 = vmatmul.mubr.f32.gmra.mrb[0].mxu0 %v140
    %v213 = vpop.f32.mrb[0].mxu0
    %v214 = vadd.f32 0.0, %v213
    %v215 = vpop.f32.mrb[0].mxu0
    %216 = vdwg.mxu0
    %v217 = vld [vmem:[#allocation11] sm:$0xff]
    %v218 = vld [vmem:[#allocation11 + $0x8] sm:$0xff]
    %v219 = vld [vmem:[#allocation11 + $0x10] sm:$0xff]
    %v220 = vld [vmem:[#allocation11 + $0x18] sm:$0xff]
    %v222 = vsel %vm135, %v127, 0
    %v225 = vsel %vm135, %v128, 0
    %227 = vmatprep.subr.mxu0 0.0
    %228 = vmatpush1.msra.mxu0 %v217
    %229 = vmatprep.subr.mxu0 0.0
    %230 = vmatpush1.msra.mxu0 %v218
    %231 = vmatprep.subr.mxu0 0.0
    %232 = vmatpush1.msra.mxu0 %v219
    %233 = vmatprep.subr.mxu0 0.0
    %234 = vmatpush1.msra.mxu0 %v220
    %235 = vmatprep.subr.mxu0 0.0
    %236 = vmatpush1.msra.mxu0 0.0
    %237 = vmatprep.subr.mxu0 0.0
    %238 = vmatpush1.msra.mxu0 0.0
    %239 = vmatprep.subr.mxu0 0.0
    %240 = vmatpush1.msra.mxu0 0.0
    %241 = vmatprep.subr.mxu0 0.0
    %242 = vmatpush1.msra.mxu0 0.0
    %243 = vmatprep.subr.mxu0 0.0
    %244 = vmatpush1.msra.mxu0 0.0
    %245 = vmatprep.subr.mxu0 0.0
    %246 = vmatpush1.msra.mxu0 0.0
    %247 = vmatprep.subr.mxu0 0.0
    %248 = vmatpush1.msra.mxu0 0.0
    %249 = vmatprep.subr.mxu0 0.0
    %250 = vmatpush1.msra.mxu0 0.0
    %251 = vmatprep.subr.mxu0 0.0
    %252 = vmatpush1.msra.mxu0 0.0
    %253 = vmatprep.subr.mxu0 0.0
    %254 = vmatpush1.msra.mxu0 0.0
    %255 = vmatprep.subr.mxu0 0.0
    %256 = vmatpush1.msra.mxu0 0.0
    %257 = vmatprep.subr.mxu0 0.0
    %258 = vmatpush1.msra.mxu0 0.0
    %259 = vmatprep.subr.mxu0 0.0
    %260 = vmatpush1.msra.mxu0 0.0
    %261 = vmatprep.subr.mxu0 0.0
    %262 = vmatpush1.msra.mxu0 0.0
    %263 = vmatprep.subr.mxu0 0.0
    %264 = vmatpush1.msra.mxu0 0.0
    %265 = vmatprep.subr.mxu0 0.0
    %266 = vmatpush1.msra.mxu0 0.0
    %267 = vmatprep.subr.mxu0 0.0
    %268 = vmatpush1.msra.mxu0 0.0
    %269 = vmatprep.subr.mxu0 0.0
    %270 = vmatpush1.msra.mxu0 0.0
    %271 = vmatprep.subr.mxu0 0.0
    %272 = vmatpush1.msra.mxu0 0.0
    %273 = vmatprep.subr.mxu0 0.0
    %274 = vmatpush1.msra.mxu0 0.0
    %275 = vmatprep.subr.mxu0 0.0
    %276 = vmatpush1.msra.mxu0 0.0
    %277 = vmatprep.subr.mxu0 0.0
    %278 = vmatpush1.msra.mxu0 0.0
    %279 = vmatprep.subr.mxu0 0.0
    %280 = vmatpush1.msra.mxu0 0.0
    %281 = vmatprep.subr.mxu0 0.0
    %282 = vmatpush1.msra.mxu0 0.0
    %283 = vmatprep.subr.mxu0 0.0
    %284 = vmatpush1.msra.mxu0 0.0
    %285 = vmatprep.subr.mxu0 0.0
    %286 = vmatpush1.msra.mxu0 0.0
    %287 = vmatprep.subr.mxu0 0.0
    %288 = vmatpush1.msra.mxu0 0.0
    %289 = vmatprep.subr.mxu0 0.0
    %290 = vmatpush1.msra.mxu0 0.0
    %291 = vmatprep.mubr.f32.mxu0 0.0
    %292 = vmatmul.mubr.f32.gmra.mrb[0].mxu0 %v222
    %v293 = vpop.f32.mrb[0].mxu0
    %v294 = vadd.f32 0.0, %v293
    %v295 = vpop.f32.mrb[0].mxu0
    %296 = vmatprep.mubr.f32.mxu0 0.0
    %297 = vmatmul.mubr.f32.gmra.mrb[0].mxu0 %v225
    %v298 = vpop.f32.mrb[0].mxu0
    %v299 = vadd.f32 0.0, %v298
    %v300 = vpop.f32.mrb[0].mxu0
    %301 = vdwg.mxu0
    %v302 = vld [vmem:[#allocation12] sm:$0xff]
    %v303 = vld [vmem:[#allocation12 + $0x8] sm:$0xff]
    %v304 = vld [vmem:[#allocation12 + $0x10] sm:$0xff]
    %v305 = vld [vmem:[#allocation12 + $0x18] sm:$0xff]
    %v307 = vsel %vm135, %v129, 0
    %v310 = vsel %vm135, %v130, 0
    %312 = vmatprep.subr.mxu0 0.0
    %313 = vmatpush1.msra.mxu0 %v302
    %314 = vmatprep.subr.mxu0 0.0
    %315 = vmatpush1.msra.mxu0 %v303
    %316 = vmatprep.subr.mxu0 0.0
    %317 = vmatpush1.msra.mxu0 %v304
    %318 = vmatprep.subr.mxu0 0.0
    %319 = vmatpush1.msra.mxu0 %v305
    %320 = vmatprep.subr.mxu0 0.0
    %321 = vmatpush1.msra.mxu0 0.0
    %322 = vmatprep.subr.mxu0 0.0
    %323 = vmatpush1.msra.mxu0 0.0
    %324 = vmatprep.subr.mxu0 0.0
    %325 = vmatpush1.msra.mxu0 0.0
    %326 = vmatprep.subr.mxu0 0.0
    %327 = vmatpush1.msra.mxu0 0.0
    %328 = vmatprep.subr.mxu0 0.0
    %329 = vmatpush1.msra.mxu0 0.0
    %330 = vmatprep.subr.mxu0 0.0
    %331 = vmatpush1.msra.mxu0 0.0
    %332 = vmatprep.subr.mxu0 0.0
    %333 = vmatpush1.msra.mxu0 0.0
    %334 = vmatprep.subr.mxu0 0.0
    %335 = vmatpush1.msra.mxu0 0.0
    %336 = vmatprep.subr.mxu0 0.0
    %337 = vmatpush1.msra.mxu0 0.0
    %338 = vmatprep.subr.mxu0 0.0
    %339 = vmatpush1.msra.mxu0 0.0
    %340 = vmatprep.subr.mxu0 0.0
    %341 = vmatpush1.msra.mxu0 0.0
    %342 = vmatprep.subr.mxu0 0.0
    %343 = vmatpush1.msra.mxu0 0.0
    %344 = vmatprep.subr.mxu0 0.0
    %345 = vmatpush1.msra.mxu0 0.0
    %346 = vmatprep.subr.mxu0 0.0
    %347 = vmatpush1.msra.mxu0 0.0
    %348 = vmatprep.subr.mxu0 0.0
    %349 = vmatpush1.msra.mxu0 0.0
    %350 = vmatprep.subr.mxu0 0.0
    %351 = vmatpush1.msra.mxu0 0.0
    %352 = vmatprep.subr.mxu0 0.0
    %353 = vmatpush1.msra.mxu0 0.0
    %354 = vmatprep.subr.mxu0 0.0
    %355 = vmatpush1.msra.mxu0 0.0
    %356 = vmatprep.subr.mxu0 0.0
    %357 = vmatpush1.msra.mxu0 0.0
    %358 = vmatprep.subr.mxu0 0.0
    %359 = vmatpush1.msra.mxu0 0.0
    %360 = vmatprep.subr.mxu0 0.0
    %361 = vmatpush1.msra.mxu0 0.0
    %362 = vmatprep.subr.mxu0 0.0
    %363 = vmatpush1.msra.mxu0 0.0
    %364 = vmatprep.subr.mxu0 0.0
    %365 = vmatpush1.msra.mxu0 0.0
    %366 = vmatprep.subr.mxu0 0.0
    %367 = vmatpush1.msra.mxu0 0.0
    %368 = vmatprep.subr.mxu0 0.0
    %369 = vmatpush1.msra.mxu0 0.0
    %370 = vmatprep.subr.mxu0 0.0
    %371 = vmatpush1.msra.mxu0 0.0
    %372 = vmatprep.subr.mxu0 0.0
    %373 = vmatpush1.msra.mxu0 0.0
    %374 = vmatprep.subr.mxu0 0.0
    %375 = vmatpush1.msra.mxu0 0.0
    %376 = vmatprep.mubr.f32.mxu0 0.0
    %377 = vmatmul.mubr.f32.gmra.mrb[0].mxu0 %v307
    %v378 = vpop.f32.mrb[0].mxu0
    %v379 = vadd.f32 0.0, %v378
    %v380 = vpop.f32.mrb[0].mxu0
    %381 = vmatprep.mubr.f32.mxu0 0.0
    %382 = vmatmul.mubr.f32.gmra.mrb[0].mxu0 %v310
    %v383 = vpop.f32.mrb[0].mxu0
    %v384 = vadd.f32 0.0, %v383
    %v385 = vpop.f32.mrb[0].mxu0
    %386 = vdwg.mxu0
    %vm387 = vcmask 31744
    %v389 = vsel %vm387, %v209, 0
    %v392 = vsel %vm387, %v294, 0
    %394 = vmatprep.subr.mxu0 0.0
    %395 = vmatpush1.xpose.msra.mxu0 %v392
    %396 = vmatprep.subr.mxu0 0.0
    %397 = vmatpush1.xpose.msra.mxu0 0.0
    %398 = vmatprep.subr.mxu0 0.0
    %399 = vmatpush1.xpose.msra.mxu0 0.0
    %400 = vmatprep.subr.mxu0 0.0
    %401 = vmatpush1.xpose.msra.mxu0 0.0
    %402 = vmatprep.subr.mxu0 0.0
    %403 = vmatpush1.xpose.msra.mxu0 0.0
    %404 = vmatprep.subr.mxu0 0.0
    %405 = vmatpush1.xpose.msra.mxu0 0.0
    %406 = vmatprep.subr.mxu0 0.0
    %407 = vmatpush1.xpose.msra.mxu0 0.0
    %408 = vmatprep.subr.mxu0 0.0
    %409 = vmatpush1.xpose.msra.mxu0 0.0
    %410 = vmatprep.subr.mxu0 0.0
    %411 = vmatpush1.xpose.msra.mxu0 0.0
    %412 = vmatprep.subr.mxu0 0.0
    %413 = vmatpush1.xpose.msra.mxu0 0.0
    %414 = vmatprep.subr.mxu0 0.0
    %415 = vmatpush1.xpose.msra.mxu0 0.0
    %416 = vmatprep.subr.mxu0 0.0
    %417 = vmatpush1.xpose.msra.mxu0 0.0
    %418 = vmatprep.subr.mxu0 0.0
    %419 = vmatpush1.xpose.msra.mxu0 0.0
    %420 = vmatprep.subr.mxu0 0.0
    %421 = vmatpush1.xpose.msra.mxu0 0.0
    %422 = vmatprep.subr.mxu0 0.0
    %423 = vmatpush1.xpose.msra.mxu0 0.0
    %424 = vmatprep.subr.mxu0 0.0
    %425 = vmatpush1.xpose.msra.mxu0 0.0
    %426 = vmatprep.subr.mxu0 0.0
    %427 = vmatpush1.xpose.msra.mxu0 0.0
    %428 = vmatprep.subr.mxu0 0.0
    %429 = vmatpush1.xpose.msra.mxu0 0.0
    %430 = vmatprep.subr.mxu0 0.0
    %431 = vmatpush1.xpose.msra.mxu0 0.0
    %432 = vmatprep.subr.mxu0 0.0
    %433 = vmatpush1.xpose.msra.mxu0 0.0
    %434 = vmatprep.subr.mxu0 0.0
    %435 = vmatpush1.xpose.msra.mxu0 0.0
    %436 = vmatprep.subr.mxu0 0.0
    %437 = vmatpush1.xpose.msra.mxu0 0.0
    %438 = vmatprep.subr.mxu0 0.0
    %439 = vmatpush1.xpose.msra.mxu0 0.0
    %440 = vmatprep.subr.mxu0 0.0
    %441 = vmatpush1.xpose.msra.mxu0 0.0
    %442 = vmatprep.subr.mxu0 0.0
    %443 = vmatpush1.xpose.msra.mxu0 0.0
    %444 = vmatprep.subr.mxu0 0.0
    %445 = vmatpush1.xpose.msra.mxu0 0.0
    %446 = vmatprep.subr.mxu0 0.0
    %447 = vmatpush1.xpose.msra.mxu0 0.0
    %448 = vmatprep.subr.mxu0 0.0
    %449 = vmatpush1.xpose.msra.mxu0 0.0
    %450 = vmatprep.subr.mxu0 0.0
    %451 = vmatpush1.xpose.msra.mxu0 0.0
    %452 = vmatprep.subr.mxu0 0.0
    %453 = vmatpush1.xpose.msra.mxu0 0.0
    %454 = vmatprep.subr.mxu0 0.0
    %455 = vmatpush1.xpose.msra.mxu0 0.0
    %456 = vmatprep.subr.mxu0 0.0
    %457 = vmatpush1.xpose.msra.mxu0 0.0
    %458 = vmatprep.mubr.f32.mxu0 0.0
    %459 = vmatmul.mubr.f32.gmra.mrb[0].mxu0 %v389
    %v460 = vpop.f32.mrb[0].mxu0
    %v461 = vadd.f32 0.0, %v460
    %v462 = vpop.f32.mrb[0].mxu0
    %463 = vdwg.mxu0
    %v465 = vsel %vm387, %v214, 0
    %v468 = vsel %vm387, %v299, 0
    %470 = vmatprep.subr.mxu0 0.0
    %471 = vmatpush1.xpose.msra.mxu0 %v468
    %472 = vmatprep.subr.mxu0 0.0
    %473 = vmatpush1.xpose.msra.mxu0 0.0
    %474 = vmatprep.subr.mxu0 0.0
    %475 = vmatpush1.xpose.msra.mxu0 0.0
    %476 = vmatprep.subr.mxu0 0.0
    %477 = vmatpush1.xpose.msra.mxu0 0.0
    %478 = vmatprep.subr.mxu0 0.0
    %479 = vmatpush1.xpose.msra.mxu0 0.0
    %480 = vmatprep.subr.mxu0 0.0
    %481 = vmatpush1.xpose.msra.mxu0 0.0
    %482 = vmatprep.subr.mxu0 0.0
    %483 = vmatpush1.xpose.msra.mxu0 0.0
    %484 = vmatprep.subr.mxu0 0.0
    %485 = vmatpush1.xpose.msra.mxu0 0.0
    %486 = vmatprep.subr.mxu0 0.0
    %487 = vmatpush1.xpose.msra.mxu0 0.0
    %488 = vmatprep.subr.mxu0 0.0
    %489 = vmatpush1.xpose.msra.mxu0 0.0
    %490 = vmatprep.subr.mxu0 0.0
    %491 = vmatpush1.xpose.msra.mxu0 0.0
    %492 = vmatprep.subr.mxu0 0.0
    %493 = vmatpush1.xpose.msra.mxu0 0.0
    %494 = vmatprep.subr.mxu0 0.0
    %495 = vmatpush1.xpose.msra.mxu0 0.0
    %496 = vmatprep.subr.mxu0 0.0
    %497 = vmatpush1.xpose.msra.mxu0 0.0
    %498 = vmatprep.subr.mxu0 0.0
    %499 = vmatpush1.xpose.msra.mxu0 0.0
    %500 = vmatprep.subr.mxu0 0.0
    %501 = vmatpush1.xpose.msra.mxu0 0.0
    %502 = vmatprep.subr.mxu0 0.0
    %503 = vmatpush1.xpose.msra.mxu0 0.0
    %504 = vmatprep.subr.mxu0 0.0
    %505 = vmatpush1.xpose.msra.mxu0 0.0
    %506 = vmatprep.subr.mxu0 0.0
    %507 = vmatpush1.xpose.msra.mxu0 0.0
    %508 = vmatprep.subr.mxu0 0.0
    %509 = vmatpush1.xpose.msra.mxu0 0.0
    %510 = vmatprep.subr.mxu0 0.0
    %511 = vmatpush1.xpose.msra.mxu0 0.0
    %512 = vmatprep.subr.mxu0 0.0
    %513 = vmatpush1.xpose.msra.mxu0 0.0
    %514 = vmatprep.subr.mxu0 0.0
    %515 = vmatpush1.xpose.msra.mxu0 0.0
    %516 = vmatprep.subr.mxu0 0.0
    %517 = vmatpush1.xpose.msra.mxu0 0.0
    %518 = vmatprep.subr.mxu0 0.0
    %519 = vmatpush1.xpose.msra.mxu0 0.0
    %520 = vmatprep.subr.mxu0 0.0
    %521 = vmatpush1.xpose.msra.mxu0 0.0
    %522 = vmatprep.subr.mxu0 0.0
    %523 = vmatpush1.xpose.msra.mxu0 0.0
    %524 = vmatprep.subr.mxu0 0.0
    %525 = vmatpush1.xpose.msra.mxu0 0.0
    %526 = vmatprep.subr.mxu0 0.0
    %527 = vmatpush1.xpose.msra.mxu0 0.0
    %528 = vmatprep.subr.mxu0 0.0
    %529 = vmatpush1.xpose.msra.mxu0 0.0
    %530 = vmatprep.subr.mxu0 0.0
    %531 = vmatpush1.xpose.msra.mxu0 0.0
    %532 = vmatprep.subr.mxu0 0.0
    %533 = vmatpush1.xpose.msra.mxu0 0.0
    %534 = vmatprep.mubr.f32.mxu0 0.0
    %535 = vmatmul.mubr.f32.gmra.mrb[0].mxu0 %v465
    %v536 = vpop.f32.mrb[0].mxu0
    %v537 = vadd.f32 0.0, %v536
    %v538 = vpop.f32.mrb[0].mxu0
    %539 = vdwg.mxu0
    %v540 = vmul.f32 %v461, 0.5
    %v541 = vmul.f32 %v537, 0.5
    %vm542 = vcmask 64512
    %v543 = vsel %vm542, %v540, -inf
    %544 = vmax.xlane.f32.xlu0 %v543
    %v545 = vpop.xlane.xlu0 %544
    %v546 = vsel %vm542, %v541, -inf
    %547 = vmax.xlane.f32.xlu0 %v546
    %v548 = vpop.xlane.xlu0 %547
    %v549 = vsub.f32 %v540, %v545
    %v550 = vsub.f32 %v541, %v548
    %v551 = vmul.f32 %v549, 1.442695
    %v552 = vpow.pop %v551
    %v553 = vmul.f32 %v550, 1.442695
    %v554 = vpow.pop %v553
    %v555 = vsel %vm542, %v552, 0.0
    %556 = vadd.xlane.f32.xlu0 %v555
    %v557 = vpop.xlane.xlu0 %556
    %v558 = vsel %vm542, %v554, 0.0
    %559 = vadd.xlane.f32.xlu0 %v558
    %v560 = vpop.xlane.xlu0 %559
    %v561 = vrcp.pop %v557
    %v562 = vrcp.pop %v560
    %v563 = vmul.f32 %v552, %v561
    %v564 = vmul.f32 %v554, %v562
    %v566 = vsel %vm542, %v563, 0
    %568 = vmatprep.subr.mxu0 0.0
    %569 = vmatpush1.msra.mxu0 %v379
    %570 = vmatprep.subr.mxu0 0.0
    %571 = vmatpush1.msra.mxu0 0.0
    %572 = vmatprep.subr.mxu0 0.0
    %573 = vmatpush1.msra.mxu0 0.0
    %574 = vmatprep.subr.mxu0 0.0
    %575 = vmatpush1.msra.mxu0 0.0
    %576 = vmatprep.subr.mxu0 0.0
    %577 = vmatpush1.msra.mxu0 0.0
    %578 = vmatprep.subr.mxu0 0.0
    %579 = vmatpush1.msra.mxu0 0.0
    %580 = vmatprep.subr.mxu0 0.0
    %581 = vmatpush1.msra.mxu0 0.0
    %582 = vmatprep.subr.mxu0 0.0
    %583 = vmatpush1.msra.mxu0 0.0
    %584 = vmatprep.subr.mxu0 0.0
    %585 = vmatpush1.msra.mxu0 0.0
    %586 = vmatprep.subr.mxu0 0.0
    %587 = vmatpush1.msra.mxu0 0.0
    %588 = vmatprep.subr.mxu0 0.0
    %589 = vmatpush1.msra.mxu0 0.0
    %590 = vmatprep.subr.mxu0 0.0
    %591 = vmatpush1.msra.mxu0 0.0
    %592 = vmatprep.subr.mxu0 0.0
    %593 = vmatpush1.msra.mxu0 0.0
    %594 = vmatprep.subr.mxu0 0.0
    %595 = vmatpush1.msra.mxu0 0.0
    %596 = vmatprep.subr.mxu0 0.0
    %597 = vmatpush1.msra.mxu0 0.0
    %598 = vmatprep.subr.mxu0 0.0
    %599 = vmatpush1.msra.mxu0 0.0
    %600 = vmatprep.subr.mxu0 0.0
    %601 = vmatpush1.msra.mxu0 0.0
    %602 = vmatprep.subr.mxu0 0.0
    %603 = vmatpush1.msra.mxu0 0.0
    %604 = vmatprep.subr.mxu0 0.0
    %605 = vmatpush1.msra.mxu0 0.0
    %606 = vmatprep.subr.mxu0 0.0
    %607 = vmatpush1.msra.mxu0 0.0
    %608 = vmatprep.subr.mxu0 0.0
    %609 = vmatpush1.msra.mxu0 0.0
    %610 = vmatprep.subr.mxu0 0.0
    %611 = vmatpush1.msra.mxu0 0.0
    %612 = vmatprep.subr.mxu0 0.0
    %613 = vmatpush1.msra.mxu0 0.0
    %614 = vmatprep.subr.mxu0 0.0
    %615 = vmatpush1.msra.mxu0 0.0
    %616 = vmatprep.subr.mxu0 0.0
    %617 = vmatpush1.msra.mxu0 0.0
    %618 = vmatprep.subr.mxu0 0.0
    %619 = vmatpush1.msra.mxu0 0.0
    %620 = vmatprep.subr.mxu0 0.0
    %621 = vmatpush1.msra.mxu0 0.0
    %622 = vmatprep.subr.mxu0 0.0
    %623 = vmatpush1.msra.mxu0 0.0
    %624 = vmatprep.subr.mxu0 0.0
    %625 = vmatpush1.msra.mxu0 0.0
    %626 = vmatprep.subr.mxu0 0.0
    %627 = vmatpush1.msra.mxu0 0.0
    %628 = vmatprep.subr.mxu0 0.0
    %629 = vmatpush1.msra.mxu0 0.0
    %630 = vmatprep.subr.mxu0 0.0
    %631 = vmatpush1.msra.mxu0 0.0
    %632 = vmatprep.mubr.f32.mxu0 0.0
    %633 = vmatmul.mubr.f32.gmra.mrb[0].mxu0 %v566
    %v634 = vpop.f32.mrb[0].mxu0
    %v635 = vadd.f32 0.0, %v634
    %v636 = vpop.f32.mrb[0].mxu0
    %637 = vdwg.mxu0
    %v639 = vsel %vm542, %v564, 0
    %641 = vmatprep.subr.mxu0 0.0
    %642 = vmatpush1.msra.mxu0 %v384
    %643 = vmatprep.subr.mxu0 0.0
    %644 = vmatpush1.msra.mxu0 0.0
    %645 = vmatprep.subr.mxu0 0.0
    %646 = vmatpush1.msra.mxu0 0.0
    %647 = vmatprep.subr.mxu0 0.0
    %648 = vmatpush1.msra.mxu0 0.0
    %649 = vmatprep.subr.mxu0 0.0
    %650 = vmatpush1.msra.mxu0 0.0
    %651 = vmatprep.subr.mxu0 0.0
    %652 = vmatpush1.msra.mxu0 0.0
    %653 = vmatprep.subr.mxu0 0.0
    %654 = vmatpush1.msra.mxu0 0.0
    %655 = vmatprep.subr.mxu0 0.0
    %656 = vmatpush1.msra.mxu0 0.0
    %657 = vmatprep.subr.mxu0 0.0
    %658 = vmatpush1.msra.mxu0 0.0
    %659 = vmatprep.subr.mxu0 0.0
    %660 = vmatpush1.msra.mxu0 0.0
    %661 = vmatprep.subr.mxu0 0.0
    %662 = vmatpush1.msra.mxu0 0.0
    %663 = vmatprep.subr.mxu0 0.0
    %664 = vmatpush1.msra.mxu0 0.0
    %665 = vmatprep.subr.mxu0 0.0
    %666 = vmatpush1.msra.mxu0 0.0
    %667 = vmatprep.subr.mxu0 0.0
    %668 = vmatpush1.msra.mxu0 0.0
    %669 = vmatprep.subr.mxu0 0.0
    %670 = vmatpush1.msra.mxu0 0.0
    %671 = vmatprep.subr.mxu0 0.0
    %672 = vmatpush1.msra.mxu0 0.0
    %673 = vmatprep.subr.mxu0 0.0
    %674 = vmatpush1.msra.mxu0 0.0
    %675 = vmatprep.subr.mxu0 0.0
    %676 = vmatpush1.msra.mxu0 0.0
    %677 = vmatprep.subr.mxu0 0.0
    %678 = vmatpush1.msra.mxu0 0.0
    %679 = vmatprep.subr.mxu0 0.0
    %680 = vmatpush1.msra.mxu0 0.0
    %681 = vmatprep.subr.mxu0 0.0
    %682 = vmatpush1.msra.mxu0 0.0
    %683 = vmatprep.subr.mxu0 0.0
    %684 = vmatpush1.msra.mxu0 0.0
    %685 = vmatprep.subr.mxu0 0.0
    %686 = vmatpush1.msra.mxu0 0.0
    %687 = vmatprep.subr.mxu0 0.0
    %688 = vmatpush1.msra.mxu0 0.0
    %689 = vmatprep.subr.mxu0 0.0
    %690 = vmatpush1.msra.mxu0 0.0
    %691 = vmatprep.subr.mxu0 0.0
    %692 = vmatpush1.msra.mxu0 0.0
    %693 = vmatprep.subr.mxu0 0.0
    %694 = vmatpush1.msra.mxu0 0.0
    %695 = vmatprep.subr.mxu0 0.0
    %696 = vmatpush1.msra.mxu0 0.0
    %697 = vmatprep.subr.mxu0 0.0
    %698 = vmatpush1.msra.mxu0 0.0
    %699 = vmatprep.subr.mxu0 0.0
    %700 = vmatpush1.msra.mxu0 0.0
    %701 = vmatprep.subr.mxu0 0.0
    %702 = vmatpush1.msra.mxu0 0.0
    %703 = vmatprep.subr.mxu0 0.0
    %704 = vmatpush1.msra.mxu0 0.0
    %705 = vmatprep.mubr.f32.mxu0 0.0
    %706 = vmatmul.mubr.f32.gmra.mrb[0].mxu0 %v639
    %v707 = vpop.f32.mrb[0].mxu0
    %v708 = vadd.f32 0.0, %v707
    %v709 = vpop.f32.mrb[0].mxu0
    %710 = vdwg.mxu0
    %711 = vst.msk [vmem:[#allocation2] sm:$0xff] %vm387, %v635
    %712 = vst.msk [vmem:[#allocation2 + $0x8] sm:$0xff] %vm387, %v708
    %713 = vrot.lane.b32.xlu0 %v209, 124
    %v714 = vpop.permute.xlu0 %713
    %715 = vrot.lane.b32.xlu0 %v294, 124
    %v716 = vpop.permute.xlu0 %715
    %v717 = vsel %vm387, %v714, 0
    %v719 = vsel %vm387, %v716, 0
    %721 = vmatprep.subr.mxu0 0.0
    %722 = vmatpush1.xpose.msra.mxu0 %v719
    %723 = vmatprep.subr.mxu0 0.0
    %724 = vmatpush1.xpose.msra.mxu0 0.0
    %725 = vmatprep.subr.mxu0 0.0
    %726 = vmatpush1.xpose.msra.mxu0 0.0
    %727 = vmatprep.subr.mxu0 0.0
    %728 = vmatpush1.xpose.msra.mxu0 0.0
    %729 = vmatprep.subr.mxu0 0.0
    %730 = vmatpush1.xpose.msra.mxu0 0.0
    %731 = vmatprep.subr.mxu0 0.0
    %732 = vmatpush1.xpose.msra.mxu0 0.0
    %733 = vmatprep.subr.mxu0 0.0
    %734 = vmatpush1.xpose.msra.mxu0 0.0
    %735 = vmatprep.subr.mxu0 0.0
    %736 = vmatpush1.xpose.msra.mxu0 0.0
    %737 = vmatprep.subr.mxu0 0.0
    %738 = vmatpush1.xpose.msra.mxu0 0.0
    %739 = vmatprep.subr.mxu0 0.0
    %740 = vmatpush1.xpose.msra.mxu0 0.0
    %741 = vmatprep.subr.mxu0 0.0
    %742 = vmatpush1.xpose.msra.mxu0 0.0
    %743 = vmatprep.subr.mxu0 0.0
    %744 = vmatpush1.xpose.msra.mxu0 0.0
    %745 = vmatprep.subr.mxu0 0.0
    %746 = vmatpush1.xpose.msra.mxu0 0.0
    %747 = vmatprep.subr.mxu0 0.0
    %748 = vmatpush1.xpose.msra.mxu0 0.0
    %749 = vmatprep.subr.mxu0 0.0
    %750 = vmatpush1.xpose.msra.mxu0 0.0
    %751 = vmatprep.subr.mxu0 0.0
    %752 = vmatpush1.xpose.msra.mxu0 0.0
    %753 = vmatprep.subr.mxu0 0.0
    %754 = vmatpush1.xpose.msra.mxu0 0.0
    %755 = vmatprep.subr.mxu0 0.0
    %756 = vmatpush1.xpose.msra.mxu0 0.0
    %757 = vmatprep.subr.mxu0 0.0
    %758 = vmatpush1.xpose.msra.mxu0 0.0
    %759 = vmatprep.subr.mxu0 0.0
    %760 = vmatpush1.xpose.msra.mxu0 0.0
    %761 = vmatprep.subr.mxu0 0.0
    %762 = vmatpush1.xpose.msra.mxu0 0.0
    %763 = vmatprep.subr.mxu0 0.0
    %764 = vmatpush1.xpose.msra.mxu0 0.0
    %765 = vmatprep.subr.mxu0 0.0
    %766 = vmatpush1.xpose.msra.mxu0 0.0
    %767 = vmatprep.subr.mxu0 0.0
    %768 = vmatpush1.xpose.msra.mxu0 0.0
    %769 = vmatprep.subr.mxu0 0.0
    %770 = vmatpush1.xpose.msra.mxu0 0.0
    %771 = vmatprep.subr.mxu0 0.0
    %772 = vmatpush1.xpose.msra.mxu0 0.0
    %773 = vmatprep.subr.mxu0 0.0
    %774 = vmatpush1.xpose.msra.mxu0 0.0
    %775 = vmatprep.subr.mxu0 0.0
    %776 = vmatpush1.xpose.msra.mxu0 0.0
    %777 = vmatprep.subr.mxu0 0.0
    %778 = vmatpush1.xpose.msra.mxu0 0.0
    %779 = vmatprep.subr.mxu0 0.0
    %780 = vmatpush1.xpose.msra.mxu0 0.0
    %781 = vmatprep.subr.mxu0 0.0
    %782 = vmatpush1.xpose.msra.mxu0 0.0
    %783 = vmatprep.subr.mxu0 0.0
    %784 = vmatpush1.xpose.msra.mxu0 0.0
    %785 = vmatprep.mubr.f32.mxu0 0.0
    %786 = vmatmul.mubr.f32.gmra.mrb[0].mxu0 %v717
    %v787 = vpop.f32.mrb[0].mxu0
    %v788 = vadd.f32 0.0, %v787
    %v789 = vpop.f32.mrb[0].mxu0
    %790 = vdwg.mxu0
    %791 = vrot.lane.b32.xlu0 %v214, 124
    %v792 = vpop.permute.xlu0 %791
    %793 = vrot.lane.b32.xlu0 %v299, 124
    %v794 = vpop.permute.xlu0 %793
    %v795 = vsel %vm387, %v792, 0
    %v797 = vsel %vm387, %v794, 0
    %799 = vmatprep.subr.mxu0 0.0
    %800 = vmatpush1.xpose.msra.mxu0 %v797
    %801 = vmatprep.subr.mxu0 0.0
    %802 = vmatpush1.xpose.msra.mxu0 0.0
    %803 = vmatprep.subr.mxu0 0.0
    %804 = vmatpush1.xpose.msra.mxu0 0.0
    %805 = vmatprep.subr.mxu0 0.0
    %806 = vmatpush1.xpose.msra.mxu0 0.0
    %807 = vmatprep.subr.mxu0 0.0
    %808 = vmatpush1.xpose.msra.mxu0 0.0
    %809 = vmatprep.subr.mxu0 0.0
    %810 = vmatpush1.xpose.msra.mxu0 0.0
    %811 = vmatprep.subr.mxu0 0.0
    %812 = vmatpush1.xpose.msra.mxu0 0.0
    %813 = vmatprep.subr.mxu0 0.0
    %814 = vmatpush1.xpose.msra.mxu0 0.0
    %815 = vmatprep.subr.mxu0 0.0
    %816 = vmatpush1.xpose.msra.mxu0 0.0
    %817 = vmatprep.subr.mxu0 0.0
    %818 = vmatpush1.xpose.msra.mxu0 0.0
    %819 = vmatprep.subr.mxu0 0.0
    %820 = vmatpush1.xpose.msra.mxu0 0.0
    %821 = vmatprep.subr.mxu0 0.0
    %822 = vmatpush1.xpose.msra.mxu0 0.0
    %823 = vmatprep.subr.mxu0 0.0
    %824 = vmatpush1.xpose.msra.mxu0 0.0
    %825 = vmatprep.subr.mxu0 0.0
    %826 = vmatpush1.xpose.msra.mxu0 0.0
    %827 = vmatprep.subr.mxu0 0.0
    %828 = vmatpush1.xpose.msra.mxu0 0.0
    %829 = vmatprep.subr.mxu0 0.0
    %830 = vmatpush1.xpose.msra.mxu0 0.0
    %831 = vmatprep.subr.mxu0 0.0
    %832 = vmatpush1.xpose.msra.mxu0 0.0
    %833 = vmatprep.subr.mxu0 0.0
    %834 = vmatpush1.xpose.msra.mxu0 0.0
    %835 = vmatprep.subr.mxu0 0.0
    %836 = vmatpush1.xpose.msra.mxu0 0.0
    %837 = vmatprep.subr.mxu0 0.0
    %838 = vmatpush1.xpose.msra.mxu0 0.0
    %839 = vmatprep.subr.mxu0 0.0
    %840 = vmatpush1.xpose.msra.mxu0 0.0
    %841 = vmatprep.subr.mxu0 0.0
    %842 = vmatpush1.xpose.msra.mxu0 0.0
    %843 = vmatprep.subr.mxu0 0.0
    %844 = vmatpush1.xpose.msra.mxu0 0.0
    %845 = vmatprep.subr.mxu0 0.0
    %846 = vmatpush1.xpose.msra.mxu0 0.0
    %847 = vmatprep.subr.mxu0 0.0
    %848 = vmatpush1.xpose.msra.mxu0 0.0
    %849 = vmatprep.subr.mxu0 0.0
    %850 = vmatpush1.xpose.msra.mxu0 0.0
    %851 = vmatprep.subr.mxu0 0.0
    %852 = vmatpush1.xpose.msra.mxu0 0.0
    %853 = vmatprep.subr.mxu0 0.0
    %854 = vmatpush1.xpose.msra.mxu0 0.0
    %855 = vmatprep.subr.mxu0 0.0
    %856 = vmatpush1.xpose.msra.mxu0 0.0
    %857 = vmatprep.subr.mxu0 0.0
    %858 = vmatpush1.xpose.msra.mxu0 0.0
    %859 = vmatprep.subr.mxu0 0.0
    %860 = vmatpush1.xpose.msra.mxu0 0.0
    %861 = vmatprep.subr.mxu0 0.0
    %862 = vmatpush1.xpose.msra.mxu0 0.0
    %863 = vmatprep.mubr.f32.mxu0 0.0
    %864 = vmatmul.mubr.f32.gmra.mrb[0].mxu0 %v795
    %v865 = vpop.f32.mrb[0].mxu0
    %v866 = vadd.f32 0.0, %v865
    %v867 = vpop.f32.mrb[0].mxu0
    %868 = vdwg.mxu0
    %v869 = vmul.f32 %v788, 0.5
    %v870 = vmul.f32 %v866, 0.5
    %v871 = vsel %vm542, %v869, -inf
    %872 = vmax.xlane.f32.xlu0 %v871
    %v873 = vpop.xlane.xlu0 %872
    %v874 = vsel %vm542, %v870, -inf
    %875 = vmax.xlane.f32.xlu0 %v874
    %v876 = vpop.xlane.xlu0 %875
    %v877 = vsub.f32 %v869, %v873
    %v878 = vsub.f32 %v870, %v876
    %v879 = vmul.f32 %v877, 1.442695
    %v880 = vpow.pop %v879
    %v881 = vmul.f32 %v878, 1.442695
    %v882 = vpow.pop %v881
    %v883 = vsel %vm542, %v880, 0.0
    %884 = vadd.xlane.f32.xlu0 %v883
    %v885 = vpop.xlane.xlu0 %884
    %v886 = vsel %vm542, %v882, 0.0
    %887 = vadd.xlane.f32.xlu0 %v886
    %v888 = vpop.xlane.xlu0 %887
    %v889 = vrcp.pop %v885
    %v890 = vrcp.pop %v888
    %v891 = vmul.f32 %v880, %v889
    %v892 = vmul.f32 %v882, %v890
    %894 = vrot.lane.b32.xlu0 %v379, 124
    %v895 = vpop.permute.xlu0 %894
    %v898 = vsel %vm542, %v891, 0
    %900 = vmatprep.subr.mxu0 0.0
    %901 = vmatpush1.msra.mxu0 %v895
    %902 = vmatprep.subr.mxu0 0.0
    %903 = vmatpush1.msra.mxu0 0.0
    %904 = vmatprep.subr.mxu0 0.0
    %905 = vmatpush1.msra.mxu0 0.0
    %906 = vmatprep.subr.mxu0 0.0
    %907 = vmatpush1.msra.mxu0 0.0
    %908 = vmatprep.subr.mxu0 0.0
    %909 = vmatpush1.msra.mxu0 0.0
    %910 = vmatprep.subr.mxu0 0.0
    %911 = vmatpush1.msra.mxu0 0.0
    %912 = vmatprep.subr.mxu0 0.0
    %913 = vmatpush1.msra.mxu0 0.0
    %914 = vmatprep.subr.mxu0 0.0
    %915 = vmatpush1.msra.mxu0 0.0
    %916 = vmatprep.subr.mxu0 0.0
    %917 = vmatpush1.msra.mxu0 0.0
    %918 = vmatprep.subr.mxu0 0.0
    %919 = vmatpush1.msra.mxu0 0.0
    %920 = vmatprep.subr.mxu0 0.0
    %921 = vmatpush1.msra.mxu0 0.0
    %922 = vmatprep.subr.mxu0 0.0
    %923 = vmatpush1.msra.mxu0 0.0
    %924 = vmatprep.subr.mxu0 0.0
    %925 = vmatpush1.msra.mxu0 0.0
    %926 = vmatprep.subr.mxu0 0.0
    %927 = vmatpush1.msra.mxu0 0.0
    %928 = vmatprep.subr.mxu0 0.0
    %929 = vmatpush1.msra.mxu0 0.0
    %930 = vmatprep.subr.mxu0 0.0
    %931 = vmatpush1.msra.mxu0 0.0
    %932 = vmatprep.subr.mxu0 0.0
    %933 = vmatpush1.msra.mxu0 0.0
    %934 = vmatprep.subr.mxu0 0.0
    %935 = vmatpush1.msra.mxu0 0.0
    %936 = vmatprep.subr.mxu0 0.0
    %937 = vmatpush1.msra.mxu0 0.0
    %938 = vmatprep.subr.mxu0 0.0
    %939 = vmatpush1.msra.mxu0 0.0
    %940 = vmatprep.subr.mxu0 0.0
    %941 = vmatpush1.msra.mxu0 0.0
    %942 = vmatprep.subr.mxu0 0.0
    %943 = vmatpush1.msra.mxu0 0.0
    %944 = vmatprep.subr.mxu0 0.0
    %945 = vmatpush1.msra.mxu0 0.0
    %946 = vmatprep.subr.mxu0 0.0
    %947 = vmatpush1.msra.mxu0 0.0
    %948 = vmatprep.subr.mxu0 0.0
    %949 = vmatpush1.msra.mxu0 0.0
    %950 = vmatprep.subr.mxu0 0.0
    %951 = vmatpush1.msra.mxu0 0.0
    %952 = vmatprep.subr.mxu0 0.0
    %953 = vmatpush1.msra.mxu0 0.0
    %954 = vmatprep.subr.mxu0 0.0
    %955 = vmatpush1.msra.mxu0 0.0
    %956 = vmatprep.subr.mxu0 0.0
    %957 = vmatpush1.msra.mxu0 0.0
    %958 = vmatprep.subr.mxu0 0.0
    %959 = vmatpush1.msra.mxu0 0.0
    %960 = vmatprep.subr.mxu0 0.0
    %961 = vmatpush1.msra.mxu0 0.0
    %962 = vmatprep.subr.mxu0 0.0
    %963 = vmatpush1.msra.mxu0 0.0
    %964 = vmatprep.mubr.f32.mxu0 0.0
    %965 = vmatmul.mubr.f32.gmra.mrb[0].mxu0 %v898
    %v966 = vpop.f32.mrb[0].mxu0
    %v967 = vadd.f32 0.0, %v966
    %v968 = vpop.f32.mrb[0].mxu0
    %969 = vdwg.mxu0
    %971 = vrot.lane.b32.xlu0 %v384, 124
    %v972 = vpop.permute.xlu0 %971
    %v975 = vsel %vm542, %v892, 0
    %977 = vmatprep.subr.mxu0 0.0
    %978 = vmatpush1.msra.mxu0 %v972
    %979 = vmatprep.subr.mxu0 0.0
    %980 = vmatpush1.msra.mxu0 0.0
    %981 = vmatprep.subr.mxu0 0.0
    %982 = vmatpush1.msra.mxu0 0.0
    %983 = vmatprep.subr.mxu0 0.0
    %984 = vmatpush1.msra.mxu0 0.0
    %985 = vmatprep.subr.mxu0 0.0
    %986 = vmatpush1.msra.mxu0 0.0
    %987 = vmatprep.subr.mxu0 0.0
    %988 = vmatpush1.msra.mxu0 0.0
    %989 = vmatprep.subr.mxu0 0.0
    %990 = vmatpush1.msra.mxu0 0.0
    %991 = vmatprep.subr.mxu0 0.0
    %992 = vmatpush1.msra.mxu0 0.0
    %993 = vmatprep.subr.mxu0 0.0
    %994 = vmatpush1.msra.mxu0 0.0
    %995 = vmatprep.subr.mxu0 0.0
    %996 = vmatpush1.msra.mxu0 0.0
    %997 = vmatprep.subr.mxu0 0.0
    %998 = vmatpush1.msra.mxu0 0.0
    %999 = vmatprep.subr.mxu0 0.0
    %1000 = vmatpush1.msra.mxu0 0.0
    %1001 = vmatprep.subr.mxu0 0.0
    %1002 = vmatpush1.msra.mxu0 0.0
    %1003 = vmatprep.subr.mxu0 0.0
    %1004 = vmatpush1.msra.mxu0 0.0
    %1005 = vmatprep.subr.mxu0 0.0
    %1006 = vmatpush1.msra.mxu0 0.0
    %1007 = vmatprep.subr.mxu0 0.0
    %1008 = vmatpush1.msra.mxu0 0.0
    %1009 = vmatprep.subr.mxu0 0.0
    %1010 = vmatpush1.msra.mxu0 0.0
    %1011 = vmatprep.subr.mxu0 0.0
    %1012 = vmatpush1.msra.mxu0 0.0
    %1013 = vmatprep.subr.mxu0 0.0
    %1014 = vmatpush1.msra.mxu0 0.0
    %1015 = vmatprep.subr.mxu0 0.0
    %1016 = vmatpush1.msra.mxu0 0.0
    %1017 = vmatprep.subr.mxu0 0.0
    %1018 = vmatpush1.msra.mxu0 0.0
    %1019 = vmatprep.subr.mxu0 0.0
    %1020 = vmatpush1.msra.mxu0 0.0
    %1021 = vmatprep.subr.mxu0 0.0
    %1022 = vmatpush1.msra.mxu0 0.0
    %1023 = vmatprep.subr.mxu0 0.0
    %1024 = vmatpush1.msra.mxu0 0.0
    %1025 = vmatprep.subr.mxu0 0.0
    %1026 = vmatpush1.msra.mxu0 0.0
    %1027 = vmatprep.subr.mxu0 0.0
    %1028 = vmatpush1.msra.mxu0 0.0
    %1029 = vmatprep.subr.mxu0 0.0
    %1030 = vmatpush1.msra.mxu0 0.0
    %1031 = vmatprep.subr.mxu0 0.0
    %1032 = vmatpush1.msra.mxu0 0.0
    %1033 = vmatprep.subr.mxu0 0.0
    %1034 = vmatpush1.msra.mxu0 0.0
    %1035 = vmatprep.subr.mxu0 0.0
    %1036 = vmatpush1.msra.mxu0 0.0
    %1037 = vmatprep.subr.mxu0 0.0
    %1038 = vmatpush1.msra.mxu0 0.0
    %1039 = vmatprep.subr.mxu0 0.0
    %1040 = vmatpush1.msra.mxu0 0.0
    %1041 = vmatprep.mubr.f32.mxu0 0.0
    %1042 = vmatmul.mubr.f32.gmra.mrb[0].mxu0 %v975
    %v1043 = vpop.f32.mrb[0].mxu0
    %v1044 = vadd.f32 0.0, %v1043
    %v1045 = vpop.f32.mrb[0].mxu0
    %1046 = vdwg.mxu0
    %1049 = vrot.lane.b32.xlu0 %v967, 4
    %v1050 = vpop.permute.xlu0 %1049
    %1051 = vrot.lane.b32.xlu0 %v1044, 4
    %v1052 = vpop.permute.xlu0 %1051
    %vm1055 = vcmask 64544
    %1056 = vst.msk [vmem:[#allocation2] sm:$0xff] %vm1055, %v1050
    %1057 = vst.msk [vmem:[#allocation2 + $0x8] sm:$0xff] %vm1055, %v1052
    %1058 = vrot.lane.b32.xlu0 %v209, 120
    %v1059 = vpop.permute.xlu0 %1058
    %1060 = vrot.lane.b32.xlu0 %v294, 120
    %v1061 = vpop.permute.xlu0 %1060
    %v1062 = vsel %vm387, %v1059, 0
    %v1064 = vsel %vm387, %v1061, 0
    %1066 = vmatprep.subr.mxu0 0.0
    %1067 = vmatpush1.xpose.msra.mxu0 %v1064
    %1068 = vmatprep.subr.mxu0 0.0
    %1069 = vmatpush1.xpose.msra.mxu0 0.0
    %1070 = vmatprep.subr.mxu0 0.0
    %1071 = vmatpush1.xpose.msra.mxu0 0.0
    %1072 = vmatprep.subr.mxu0 0.0
    %1073 = vmatpush1.xpose.msra.mxu0 0.0
    %1074 = vmatprep.subr.mxu0 0.0
    %1075 = vmatpush1.xpose.msra.mxu0 0.0
    %1076 = vmatprep.subr.mxu0 0.0
    %1077 = vmatpush1.xpose.msra.mxu0 0.0
    %1078 = vmatprep.subr.mxu0 0.0
    %1079 = vmatpush1.xpose.msra.mxu0 0.0
    %1080 = vmatprep.subr.mxu0 0.0
    %1081 = vmatpush1.xpose.msra.mxu0 0.0
    %1082 = vmatprep.subr.mxu0 0.0
    %1083 = vmatpush1.xpose.msra.mxu0 0.0
    %1084 = vmatprep.subr.mxu0 0.0
    %1085 = vmatpush1.xpose.msra.mxu0 0.0
    %1086 = vmatprep.subr.mxu0 0.0
    %1087 = vmatpush1.xpose.msra.mxu0 0.0
    %1088 = vmatprep.subr.mxu0 0.0
    %1089 = vmatpush1.xpose.msra.mxu0 0.0
    %1090 = vmatprep.subr.mxu0 0.0
    %1091 = vmatpush1.xpose.msra.mxu0 0.0
    %1092 = vmatprep.subr.mxu0 0.0
    %1093 = vmatpush1.xpose.msra.mxu0 0.0
    %1094 = vmatprep.subr.mxu0 0.0
    %1095 = vmatpush1.xpose.msra.mxu0 0.0
    %1096 = vmatprep.subr.mxu0 0.0
    %1097 = vmatpush1.xpose.msra.mxu0 0.0
    %1098 = vmatprep.subr.mxu0 0.0
    %1099 = vmatpush1.xpose.msra.mxu0 0.0
    %1100 = vmatprep.subr.mxu0 0.0
    %1101 = vmatpush1.xpose.msra.mxu0 0.0
    %1102 = vmatprep.subr.mxu0 0.0
    %1103 = vmatpush1.xpose.msra.mxu0 0.0
    %1104 = vmatprep.subr.mxu0 0.0
    %1105 = vmatpush1.xpose.msra.mxu0 0.0
    %1106 = vmatprep.subr.mxu0 0.0
    %1107 = vmatpush1.xpose.msra.mxu0 0.0
    %1108 = vmatprep.subr.mxu0 0.0
    %1109 = vmatpush1.xpose.msra.mxu0 0.0
    %1110 = vmatprep.subr.mxu0 0.0
    %1111 = vmatpush1.xpose.msra.mxu0 0.0
    %1112 = vmatprep.subr.mxu0 0.0
    %1113 = vmatpush1.xpose.msra.mxu0 0.0
    %1114 = vmatprep.subr.mxu0 0.0
    %1115 = vmatpush1.xpose.msra.mxu0 0.0
    %1116 = vmatprep.subr.mxu0 0.0
    %1117 = vmatpush1.xpose.msra.mxu0 0.0
    %1118 = vmatprep.subr.mxu0 0.0
    %1119 = vmatpush1.xpose.msra.mxu0 0.0
    %1120 = vmatprep.subr.mxu0 0.0
    %1121 = vmatpush1.xpose.msra.mxu0 0.0
    %1122 = vmatprep.subr.mxu0 0.0
    %1123 = vmatpush1.xpose.msra.mxu0 0.0
    %1124 = vmatprep.subr.mxu0 0.0
    %1125 = vmatpush1.xpose.msra.mxu0 0.0
    %1126 = vmatprep.subr.mxu0 0.0
    %1127 = vmatpush1.xpose.msra.mxu0 0.0
    %1128 = vmatprep.subr.mxu0 0.0
    %1129 = vmatpush1.xpose.msra.mxu0 0.0
    %1130 = vmatprep.mubr.f32.mxu0 0.0
    %1131 = vmatmul.mubr.f32.gmra.mrb[0].mxu0 %v1062
    %v1132 = vpop.f32.mrb[0].mxu0
    %v1133 = vadd.f32 0.0, %v1132
    %v1134 = vpop.f32.mrb[0].mxu0
    %1135 = vdwg.mxu0
    %1136 = vrot.lane.b32.xlu0 %v214, 120
    %v1137 = vpop.permute.xlu0 %1136
    %1138 = vrot.lane.b32.xlu0 %v299, 120
    %v1139 = vpop.permute.xlu0 %1138
    %v1140 = vsel %vm387, %v1137, 0
    %v1142 = vsel %vm387, %v1139, 0
    %1144 = vmatprep.subr.mxu0 0.0
    %1145 = vmatpush1.xpose.msra.mxu0 %v1142
    %1146 = vmatprep.subr.mxu0 0.0
    %1147 = vmatpush1.xpose.msra.mxu0 0.0
    %1148 = vmatprep.subr.mxu0 0.0
    %1149 = vmatpush1.xpose.msra.mxu0 0.0
    %1150 = vmatprep.subr.mxu0 0.0
    %1151 = vmatpush1.xpose.msra.mxu0 0.0
    %1152 = vmatprep.subr.mxu0 0.0
    %1153 = vmatpush1.xpose.msra.mxu0 0.0
    %1154 = vmatprep.subr.mxu0 0.0
    %1155 = vmatpush1.xpose.msra.mxu0 0.0
    %1156 = vmatprep.subr.mxu0 0.0
    %1157 = vmatpush1.xpose.msra.mxu0 0.0
    %1158 = vmatprep.subr.mxu0 0.0
    %1159 = vmatpush1.xpose.msra.mxu0 0.0
    %1160 = vmatprep.subr.mxu0 0.0
    %1161 = vmatpush1.xpose.msra.mxu0 0.0
    %1162 = vmatprep.subr.mxu0 0.0
    %1163 = vmatpush1.xpose.msra.mxu0 0.0
    %1164 = vmatprep.subr.mxu0 0.0
    %1165 = vmatpush1.xpose.msra.mxu0 0.0
    %1166 = vmatprep.subr.mxu0 0.0
    %1167 = vmatpush1.xpose.msra.mxu0 0.0
    %1168 = vmatprep.subr.mxu0 0.0
    %1169 = vmatpush1.xpose.msra.mxu0 0.0
    %1170 = vmatprep.subr.mxu0 0.0
    %1171 = vmatpush1.xpose.msra.mxu0 0.0
    %1172 = vmatprep.subr.mxu0 0.0
    %1173 = vmatpush1.xpose.msra.mxu0 0.0
    %1174 = vmatprep.subr.mxu0 0.0
    %1175 = vmatpush1.xpose.msra.mxu0 0.0
    %1176 = vmatprep.subr.mxu0 0.0
    %1177 = vmatpush1.xpose.msra.mxu0 0.0
    %1178 = vmatprep.subr.mxu0 0.0
    %1179 = vmatpush1.xpose.msra.mxu0 0.0
    %1180 = vmatprep.subr.mxu0 0.0
    %1181 = vmatpush1.xpose.msra.mxu0 0.0
    %1182 = vmatprep.subr.mxu0 0.0
    %1183 = vmatpush1.xpose.msra.mxu0 0.0
    %1184 = vmatprep.subr.mxu0 0.0
    %1185 = vmatpush1.xpose.msra.mxu0 0.0
    %1186 = vmatprep.subr.mxu0 0.0
    %1187 = vmatpush1.xpose.msra.mxu0 0.0
    %1188 = vmatprep.subr.mxu0 0.0
    %1189 = vmatpush1.xpose.msra.mxu0 0.0
    %1190 = vmatprep.subr.mxu0 0.0
    %1191 = vmatpush1.xpose.msra.mxu0 0.0
    %1192 = vmatprep.subr.mxu0 0.0
    %1193 = vmatpush1.xpose.msra.mxu0 0.0
    %1194 = vmatprep.subr.mxu0 0.0
    %1195 = vmatpush1.xpose.msra.mxu0 0.0
    %1196 = vmatprep.subr.mxu0 0.0
    %1197 = vmatpush1.xpose.msra.mxu0 0.0
    %1198 = vmatprep.subr.mxu0 0.0
    %1199 = vmatpush1.xpose.msra.mxu0 0.0
    %1200 = vmatprep.subr.mxu0 0.0
    %1201 = vmatpush1.xpose.msra.mxu0 0.0
    %1202 = vmatprep.subr.mxu0 0.0
    %1203 = vmatpush1.xpose.msra.mxu0 0.0
    %1204 = vmatprep.subr.mxu0 0.0
    %1205 = vmatpush1.xpose.msra.mxu0 0.0
    %1206 = vmatprep.subr.mxu0 0.0
    %1207 = vmatpush1.xpose.msra.mxu0 0.0
    %1208 = vmatprep.mubr.f32.mxu0 0.0
    %1209 = vmatmul.mubr.f32.gmra.mrb[0].mxu0 %v1140
    %v1210 = vpop.f32.mrb[0].mxu0
    %v1211 = vadd.f32 0.0, %v1210
    %v1212 = vpop.f32.mrb[0].mxu0
    %1213 = vdwg.mxu0
    %v1214 = vmul.f32 %v1133, 0.5
    %v1215 = vmul.f32 %v1211, 0.5
    %v1216 = vsel %vm542, %v1214, -inf
    %1217 = vmax.xlane.f32.xlu0 %v1216
    %v1218 = vpop.xlane.xlu0 %1217
    %v1219 = vsel %vm542, %v1215, -inf
    %1220 = vmax.xlane.f32.xlu0 %v1219
    %v1221 = vpop.xlane.xlu0 %1220
    %v1222 = vsub.f32 %v1214, %v1218
    %v1223 = vsub.f32 %v1215, %v1221
    %v1224 = vmul.f32 %v1222, 1.442695
    %v1225 = vpow.pop %v1224
    %v1226 = vmul.f32 %v1223, 1.442695
    %v1227 = vpow.pop %v1226
    %v1228 = vsel %vm542, %v1225, 0.0
    %1229 = vadd.xlane.f32.xlu0 %v1228
    %v1230 = vpop.xlane.xlu0 %1229
    %v1231 = vsel %vm542, %v1227, 0.0
    %1232 = vadd.xlane.f32.xlu0 %v1231
    %v1233 = vpop.xlane.xlu0 %1232
    %v1234 = vrcp.pop %v1230
    %v1235 = vrcp.pop %v1233
    %v1236 = vmul.f32 %v1225, %v1234
    %v1237 = vmul.f32 %v1227, %v1235
    %1238 = vrot.lane.b32.xlu0 %v379, 120
    %v1239 = vpop.permute.xlu0 %1238
    %v1242 = vsel %vm542, %v1236, 0
    %1244 = vmatprep.subr.mxu0 0.0
    %1245 = vmatpush1.msra.mxu0 %v1239
    %1246 = vmatprep.subr.mxu0 0.0
    %1247 = vmatpush1.msra.mxu0 0.0
    %1248 = vmatprep.subr.mxu0 0.0
    %1249 = vmatpush1.msra.mxu0 0.0
    %1250 = vmatprep.subr.mxu0 0.0
    %1251 = vmatpush1.msra.mxu0 0.0
    %1252 = vmatprep.subr.mxu0 0.0
    %1253 = vmatpush1.msra.mxu0 0.0
    %1254 = vmatprep.subr.mxu0 0.0
    %1255 = vmatpush1.msra.mxu0 0.0
    %1256 = vmatprep.subr.mxu0 0.0
    %1257 = vmatpush1.msra.mxu0 0.0
    %1258 = vmatprep.subr.mxu0 0.0
    %1259 = vmatpush1.msra.mxu0 0.0
    %1260 = vmatprep.subr.mxu0 0.0
    %1261 = vmatpush1.msra.mxu0 0.0
    %1262 = vmatprep.subr.mxu0 0.0
    %1263 = vmatpush1.msra.mxu0 0.0
    %1264 = vmatprep.subr.mxu0 0.0
    %1265 = vmatpush1.msra.mxu0 0.0
    %1266 = vmatprep.subr.mxu0 0.0
    %1267 = vmatpush1.msra.mxu0 0.0
    %1268 = vmatprep.subr.mxu0 0.0
    %1269 = vmatpush1.msra.mxu0 0.0
    %1270 = vmatprep.subr.mxu0 0.0
    %1271 = vmatpush1.msra.mxu0 0.0
    %1272 = vmatprep.subr.mxu0 0.0
    %1273 = vmatpush1.msra.mxu0 0.0
    %1274 = vmatprep.subr.mxu0 0.0
    %1275 = vmatpush1.msra.mxu0 0.0
    %1276 = vmatprep.subr.mxu0 0.0
    %1277 = vmatpush1.msra.mxu0 0.0
    %1278 = vmatprep.subr.mxu0 0.0
    %1279 = vmatpush1.msra.mxu0 0.0
    %1280 = vmatprep.subr.mxu0 0.0
    %1281 = vmatpush1.msra.mxu0 0.0
    %1282 = vmatprep.subr.mxu0 0.0
    %1283 = vmatpush1.msra.mxu0 0.0
    %1284 = vmatprep.subr.mxu0 0.0
    %1285 = vmatpush1.msra.mxu0 0.0
    %1286 = vmatprep.subr.mxu0 0.0
    %1287 = vmatpush1.msra.mxu0 0.0
    %1288 = vmatprep.subr.mxu0 0.0
    %1289 = vmatpush1.msra.mxu0 0.0
    %1290 = vmatprep.subr.mxu0 0.0
    %1291 = vmatpush1.msra.mxu0 0.0
    %1292 = vmatprep.subr.mxu0 0.0
    %1293 = vmatpush1.msra.mxu0 0.0
    %1294 = vmatprep.subr.mxu0 0.0
    %1295 = vmatpush1.msra.mxu0 0.0
    %1296 = vmatprep.subr.mxu0 0.0
    %1297 = vmatpush1.msra.mxu0 0.0
    %1298 = vmatprep.subr.mxu0 0.0
    %1299 = vmatpush1.msra.mxu0 0.0
    %1300 = vmatprep.subr.mxu0 0.0
    %1301 = vmatpush1.msra.mxu0 0.0
    %1302 = vmatprep.subr.mxu0 0.0
    %1303 = vmatpush1.msra.mxu0 0.0
    %1304 = vmatprep.subr.mxu0 0.0
    %1305 = vmatpush1.msra.mxu0 0.0
    %1306 = vmatprep.subr.mxu0 0.0
    %1307 = vmatpush1.msra.mxu0 0.0
    %1308 = vmatprep.mubr.f32.mxu0 0.0
    %1309 = vmatmul.mubr.f32.gmra.mrb[0].mxu0 %v1242
    %v1310 = vpop.f32.mrb[0].mxu0
    %v1311 = vadd.f32 0.0, %v1310
    %v1312 = vpop.f32.mrb[0].mxu0
    %1313 = vdwg.mxu0
    %1314 = vrot.lane.b32.xlu0 %v384, 120
    %v1315 = vpop.permute.xlu0 %1314
    %v1318 = vsel %vm542, %v1237, 0
    %1320 = vmatprep.subr.mxu0 0.0
    %1321 = vmatpush1.msra.mxu0 %v1315
    %1322 = vmatprep.subr.mxu0 0.0
    %1323 = vmatpush1.msra.mxu0 0.0
    %1324 = vmatprep.subr.mxu0 0.0
    %1325 = vmatpush1.msra.mxu0 0.0
    %1326 = vmatprep.subr.mxu0 0.0
    %1327 = vmatpush1.msra.mxu0 0.0
    %1328 = vmatprep.subr.mxu0 0.0
    %1329 = vmatpush1.msra.mxu0 0.0
    %1330 = vmatprep.subr.mxu0 0.0
    %1331 = vmatpush1.msra.mxu0 0.0
    %1332 = vmatprep.subr.mxu0 0.0
    %1333 = vmatpush1.msra.mxu0 0.0
    %1334 = vmatprep.subr.mxu0 0.0
    %1335 = vmatpush1.msra.mxu0 0.0
    %1336 = vmatprep.subr.mxu0 0.0
    %1337 = vmatpush1.msra.mxu0 0.0
    %1338 = vmatprep.subr.mxu0 0.0
    %1339 = vmatpush1.msra.mxu0 0.0
    %1340 = vmatprep.subr.mxu0 0.0
    %1341 = vmatpush1.msra.mxu0 0.0
    %1342 = vmatprep.subr.mxu0 0.0
    %1343 = vmatpush1.msra.mxu0 0.0
    %1344 = vmatprep.subr.mxu0 0.0
    %1345 = vmatpush1.msra.mxu0 0.0
    %1346 = vmatprep.subr.mxu0 0.0
    %1347 = vmatpush1.msra.mxu0 0.0
    %1348 = vmatprep.subr.mxu0 0.0
    %1349 = vmatpush1.msra.mxu0 0.0
    %1350 = vmatprep.subr.mxu0 0.0
    %1351 = vmatpush1.msra.mxu0 0.0
    %1352 = vmatprep.subr.mxu0 0.0
    %1353 = vmatpush1.msra.mxu0 0.0
    %1354 = vmatprep.subr.mxu0 0.0
    %1355 = vmatpush1.msra.mxu0 0.0
    %1356 = vmatprep.subr.mxu0 0.0
    %1357 = vmatpush1.msra.mxu0 0.0
    %1358 = vmatprep.subr.mxu0 0.0
    %1359 = vmatpush1.msra.mxu0 0.0
    %1360 = vmatprep.subr.mxu0 0.0
    %1361 = vmatpush1.msra.mxu0 0.0
    %1362 = vmatprep.subr.mxu0 0.0
    %1363 = vmatpush1.msra.mxu0 0.0
    %1364 = vmatprep.subr.mxu0 0.0
    %1365 = vmatpush1.msra.mxu0 0.0
    %1366 = vmatprep.subr.mxu0 0.0
    %1367 = vmatpush1.msra.mxu0 0.0
    %1368 = vmatprep.subr.mxu0 0.0
    %1369 = vmatpush1.msra.mxu0 0.0
    %1370 = vmatprep.subr.mxu0 0.0
    %1371 = vmatpush1.msra.mxu0 0.0
    %1372 = vmatprep.subr.mxu0 0.0
    %1373 = vmatpush1.msra.mxu0 0.0
    %1374 = vmatprep.subr.mxu0 0.0
    %1375 = vmatpush1.msra.mxu0 0.0
    %1376 = vmatprep.subr.mxu0 0.0
    %1377 = vmatpush1.msra.mxu0 0.0
    %1378 = vmatprep.subr.mxu0 0.0
    %1379 = vmatpush1.msra.mxu0 0.0
    %1380 = vmatprep.subr.mxu0 0.0
    %1381 = vmatpush1.msra.mxu0 0.0
    %1382 = vmatprep.subr.mxu0 0.0
    %1383 = vmatpush1.msra.mxu0 0.0
    %1384 = vmatprep.mubr.f32.mxu0 0.0
    %1385 = vmatmul.mubr.f32.gmra.mrb[0].mxu0 %v1318
    %v1386 = vpop.f32.mrb[0].mxu0
    %v1387 = vadd.f32 0.0, %v1386
    %v1388 = vpop.f32.mrb[0].mxu0
    %1389 = vdwg.mxu0
    %1392 = vrot.lane.b32.xlu0 %v1311, 8
    %v1393 = vpop.permute.xlu0 %1392
    %1394 = vrot.lane.b32.xlu0 %v1387, 8
    %v1395 = vpop.permute.xlu0 %1394
    %vm1398 = vcmask 97344
    %1399 = vst.msk [vmem:[#allocation2] sm:$0xff] %vm1398, %v1393
    %1400 = vst.msk [vmem:[#allocation2 + $0x8] sm:$0xff] %vm1398, %v1395
    %1401 = vrot.lane.b32.xlu0 %v209, 116
    %v1402 = vpop.permute.xlu0 %1401
    %1403 = vrot.lane.b32.xlu0 %v294, 116
    %v1404 = vpop.permute.xlu0 %1403
    %v1405 = vsel %vm387, %v1402, 0
    %v1407 = vsel %vm387, %v1404, 0
    %1409 = vmatprep.subr.mxu0 0.0
    %1410 = vmatpush1.xpose.msra.mxu0 %v1407
    %1411 = vmatprep.subr.mxu0 0.0
    %1412 = vmatpush1.xpose.msra.mxu0 0.0
    %1413 = vmatprep.subr.mxu0 0.0
    %1414 = vmatpush1.xpose.msra.mxu0 0.0
    %1415 = vmatprep.subr.mxu0 0.0
    %1416 = vmatpush1.xpose.msra.mxu0 0.0
    %1417 = vmatprep.subr.mxu0 0.0
    %1418 = vmatpush1.xpose.msra.mxu0 0.0
    %1419 = vmatprep.subr.mxu0 0.0
    %1420 = vmatpush1.xpose.msra.mxu0 0.0
    %1421 = vmatprep.subr.mxu0 0.0
    %1422 = vmatpush1.xpose.msra.mxu0 0.0
    %1423 = vmatprep.subr.mxu0 0.0
    %1424 = vmatpush1.xpose.msra.mxu0 0.0
    %1425 = vmatprep.subr.mxu0 0.0
    %1426 = vmatpush1.xpose.msra.mxu0 0.0
    %1427 = vmatprep.subr.mxu0 0.0
    %1428 = vmatpush1.xpose.msra.mxu0 0.0
    %1429 = vmatprep.subr.mxu0 0.0
    %1430 = vmatpush1.xpose.msra.mxu0 0.0
    %1431 = vmatprep.subr.mxu0 0.0
    %1432 = vmatpush1.xpose.msra.mxu0 0.0
    %1433 = vmatprep.subr.mxu0 0.0
    %1434 = vmatpush1.xpose.msra.mxu0 0.0
    %1435 = vmatprep.subr.mxu0 0.0
    %1436 = vmatpush1.xpose.msra.mxu0 0.0
    %1437 = vmatprep.subr.mxu0 0.0
    %1438 = vmatpush1.xpose.msra.mxu0 0.0
    %1439 = vmatprep.subr.mxu0 0.0
    %1440 = vmatpush1.xpose.msra.mxu0 0.0
    %1441 = vmatprep.subr.mxu0 0.0
    %1442 = vmatpush1.xpose.msra.mxu0 0.0
    %1443 = vmatprep.subr.mxu0 0.0
    %1444 = vmatpush1.xpose.msra.mxu0 0.0
    %1445 = vmatprep.subr.mxu0 0.0
    %1446 = vmatpush1.xpose.msra.mxu0 0.0
    %1447 = vmatprep.subr.mxu0 0.0
    %1448 = vmatpush1.xpose.msra.mxu0 0.0
    %1449 = vmatprep.subr.mxu0 0.0
    %1450 = vmatpush1.xpose.msra.mxu0 0.0
    %1451 = vmatprep.subr.mxu0 0.0
    %1452 = vmatpush1.xpose.msra.mxu0 0.0
    %1453 = vmatprep.subr.mxu0 0.0
    %1454 = vmatpush1.xpose.msra.mxu0 0.0
    %1455 = vmatprep.subr.mxu0 0.0
    %1456 = vmatpush1.xpose.msra.mxu0 0.0
    %1457 = vmatprep.subr.mxu0 0.0
    %1458 = vmatpush1.xpose.msra.mxu0 0.0
    %1459 = vmatprep.subr.mxu0 0.0
    %1460 = vmatpush1.xpose.msra.mxu0 0.0
    %1461 = vmatprep.subr.mxu0 0.0
    %1462 = vmatpush1.xpose.msra.mxu0 0.0
    %1463 = vmatprep.subr.mxu0 0.0
    %1464 = vmatpush1.xpose.msra.mxu0 0.0
    %1465 = vmatprep.subr.mxu0 0.0
    %1466 = vmatpush1.xpose.msra.mxu0 0.0
    %1467 = vmatprep.subr.mxu0 0.0
    %1468 = vmatpush1.xpose.msra.mxu0 0.0
    %1469 = vmatprep.subr.mxu0 0.0
    %1470 = vmatpush1.xpose.msra.mxu0 0.0
    %1471 = vmatprep.subr.mxu0 0.0
    %1472 = vmatpush1.xpose.msra.mxu0 0.0
    %1473 = vmatprep.mubr.f32.mxu0 0.0
    %1474 = vmatmul.mubr.f32.gmra.mrb[0].mxu0 %v1405
    %v1475 = vpop.f32.mrb[0].mxu0
    %v1476 = vadd.f32 0.0, %v1475
    %v1477 = vpop.f32.mrb[0].mxu0
    %1478 = vdwg.mxu0
    %1479 = vrot.lane.b32.xlu0 %v214, 116
    %v1480 = vpop.permute.xlu0 %1479
    %1481 = vrot.lane.b32.xlu0 %v299, 116
    %v1482 = vpop.permute.xlu0 %1481
    %v1483 = vsel %vm387, %v1480, 0
    %v1485 = vsel %vm387, %v1482, 0
    %1487 = vmatprep.subr.mxu0 0.0
    %1488 = vmatpush1.xpose.msra.mxu0 %v1485
    %1489 = vmatprep.subr.mxu0 0.0
    %1490 = vmatpush1.xpose.msra.mxu0 0.0
    %1491 = vmatprep.subr.mxu0 0.0
    %1492 = vmatpush1.xpose.msra.mxu0 0.0
    %1493 = vmatprep.subr.mxu0 0.0
    %1494 = vmatpush1.xpose.msra.mxu0 0.0
    %1495 = vmatprep.subr.mxu0 0.0
    %1496 = vmatpush1.xpose.msra.mxu0 0.0
    %1497 = vmatprep.subr.mxu0 0.0
    %1498 = vmatpush1.xpose.msra.mxu0 0.0
    %1499 = vmatprep.subr.mxu0 0.0
    %1500 = vmatpush1.xpose.msra.mxu0 0.0
    %1501 = vmatprep.subr.mxu0 0.0
    %1502 = vmatpush1.xpose.msra.mxu0 0.0
    %1503 = vmatprep.subr.mxu0 0.0
    %1504 = vmatpush1.xpose.msra.mxu0 0.0
    %1505 = vmatprep.subr.mxu0 0.0
    %1506 = vmatpush1.xpose.msra.mxu0 0.0
    %1507 = vmatprep.subr.mxu0 0.0
    %1508 = vmatpush1.xpose.msra.mxu0 0.0
    %1509 = vmatprep.subr.mxu0 0.0
    %1510 = vmatpush1.xpose.msra.mxu0 0.0
    %1511 = vmatprep.subr.mxu0 0.0
    %1512 = vmatpush1.xpose.msra.mxu0 0.0
    %1513 = vmatprep.subr.mxu0 0.0
    %1514 = vmatpush1.xpose.msra.mxu0 0.0
    %1515 = vmatprep.subr.mxu0 0.0
    %1516 = vmatpush1.xpose.msra.mxu0 0.0
    %1517 = vmatprep.subr.mxu0 0.0
    %1518 = vmatpush1.xpose.msra.mxu0 0.0
    %1519 = vmatprep.subr.mxu0 0.0
    %1520 = vmatpush1.xpose.msra.mxu0 0.0
    %1521 = vmatprep.subr.mxu0 0.0
    %1522 = vmatpush1.xpose.msra.mxu0 0.0
    %1523 = vmatprep.subr.mxu0 0.0
    %1524 = vmatpush1.xpose.msra.mxu0 0.0
    %1525 = vmatprep.subr.mxu0 0.0
    %1526 = vmatpush1.xpose.msra.mxu0 0.0
    %1527 = vmatprep.subr.mxu0 0.0
    %1528 = vmatpush1.xpose.msra.mxu0 0.0
    %1529 = vmatprep.subr.mxu0 0.0
    %1530 = vmatpush1.xpose.msra.mxu0 0.0
    %1531 = vmatprep.subr.mxu0 0.0
    %1532 = vmatpush1.xpose.msra.mxu0 0.0
    %1533 = vmatprep.subr.mxu0 0.0
    %1534 = vmatpush1.xpose.msra.mxu0 0.0
    %1535 = vmatprep.subr.mxu0 0.0
    %1536 = vmatpush1.xpose.msra.mxu0 0.0
    %1537 = vmatprep.subr.mxu0 0.0
    %1538 = vmatpush1.xpose.msra.mxu0 0.0
    %1539 = vmatprep.subr.mxu0 0.0
    %1540 = vmatpush1.xpose.msra.mxu0 0.0
    %1541 = vmatprep.subr.mxu0 0.0
    %1542 = vmatpush1.xpose.msra.mxu0 0.0
    %1543 = vmatprep.subr.mxu0 0.0
    %1544 = vmatpush1.xpose.msra.mxu0 0.0
    %1545 = vmatprep.subr.mxu0 0.0
    %1546 = vmatpush1.xpose.msra.mxu0 0.0
    %1547 = vmatprep.subr.mxu0 0.0
    %1548 = vmatpush1.xpose.msra.mxu0 0.0
    %1549 = vmatprep.subr.mxu0 0.0
    %1550 = vmatpush1.xpose.msra.mxu0 0.0
    %1551 = vmatprep.mubr.f32.mxu0 0.0
    %1552 = vmatmul.mubr.f32.gmra.mrb[0].mxu0 %v1483
    %v1553 = vpop.f32.mrb[0].mxu0
    %v1554 = vadd.f32 0.0, %v1553
    %v1555 = vpop.f32.mrb[0].mxu0
    %1556 = vdwg.mxu0
    %v1557 = vmul.f32 %v1476, 0.5
    %v1558 = vmul.f32 %v1554, 0.5
    %v1559 = vsel %vm542, %v1557, -inf
    %1560 = vmax.xlane.f32.xlu0 %v1559
    %v1561 = vpop.xlane.xlu0 %1560
    %v1562 = vsel %vm542, %v1558, -inf
    %1563 = vmax.xlane.f32.xlu0 %v1562
    %v1564 = vpop.xlane.xlu0 %1563
    %v1565 = vsub.f32 %v1557, %v1561
    %v1566 = vsub.f32 %v1558, %v1564
    %v1567 = vmul.f32 %v1565, 1.442695
    %v1568 = vpow.pop %v1567
    %v1569 = vmul.f32 %v1566, 1.442695
    %v1570 = vpow.pop %v1569
    %v1571 = vsel %vm542, %v1568, 0.0
    %1572 = vadd.xlane.f32.xlu0 %v1571
    %v1573 = vpop.xlane.xlu0 %1572
    %v1574 = vsel %vm542, %v1570, 0.0
    %1575 = vadd.xlane.f32.xlu0 %v1574
    %v1576 = vpop.xlane.xlu0 %1575
    %v1577 = vrcp.pop %v1573
    %v1578 = vrcp.pop %v1576
    %v1579 = vmul.f32 %v1568, %v1577
    %v1580 = vmul.f32 %v1570, %v1578
    %1581 = vrot.lane.b32.xlu0 %v379, 116
    %v1582 = vpop.permute.xlu0 %1581
    %v1585 = vsel %vm542, %v1579, 0
    %1587 = vmatprep.subr.mxu0 0.0
    %1588 = vmatpush1.msra.mxu0 %v1582
    %1589 = vmatprep.subr.mxu0 0.0
    %1590 = vmatpush1.msra.mxu0 0.0
    %1591 = vmatprep.subr.mxu0 0.0
    %1592 = vmatpush1.msra.mxu0 0.0
    %1593 = vmatprep.subr.mxu0 0.0
    %1594 = vmatpush1.msra.mxu0 0.0
    %1595 = vmatprep.subr.mxu0 0.0
    %1596 = vmatpush1.msra.mxu0 0.0
    %1597 = vmatprep.subr.mxu0 0.0
    %1598 = vmatpush1.msra.mxu0 0.0
    %1599 = vmatprep.subr.mxu0 0.0
    %1600 = vmatpush1.msra.mxu0 0.0
    %1601 = vmatprep.subr.mxu0 0.0
    %1602 = vmatpush1.msra.mxu0 0.0
    %1603 = vmatprep.subr.mxu0 0.0
    %1604 = vmatpush1.msra.mxu0 0.0
    %1605 = vmatprep.subr.mxu0 0.0
    %1606 = vmatpush1.msra.mxu0 0.0
    %1607 = vmatprep.subr.mxu0 0.0
    %1608 = vmatpush1.msra.mxu0 0.0
    %1609 = vmatprep.subr.mxu0 0.0
    %1610 = vmatpush1.msra.mxu0 0.0
    %1611 = vmatprep.subr.mxu0 0.0
    %1612 = vmatpush1.msra.mxu0 0.0
    %1613 = vmatprep.subr.mxu0 0.0
    %1614 = vmatpush1.msra.mxu0 0.0
    %1615 = vmatprep.subr.mxu0 0.0
    %1616 = vmatpush1.msra.mxu0 0.0
    %1617 = vmatprep.subr.mxu0 0.0
    %1618 = vmatpush1.msra.mxu0 0.0
    %1619 = vmatprep.subr.mxu0 0.0
    %1620 = vmatpush1.msra.mxu0 0.0
    %1621 = vmatprep.subr.mxu0 0.0
    %1622 = vmatpush1.msra.mxu0 0.0
    %1623 = vmatprep.subr.mxu0 0.0
    %1624 = vmatpush1.msra.mxu0 0.0
    %1625 = vmatprep.subr.mxu0 0.0
    %1626 = vmatpush1.msra.mxu0 0.0
    %1627 = vmatprep.subr.mxu0 0.0
    %1628 = vmatpush1.msra.mxu0 0.0
    %1629 = vmatprep.subr.mxu0 0.0
    %1630 = vmatpush1.msra.mxu0 0.0
    %1631 = vmatprep.subr.mxu0 0.0
    %1632 = vmatpush1.msra.mxu0 0.0
    %1633 = vmatprep.subr.mxu0 0.0
    %1634 = vmatpush1.msra.mxu0 0.0
    %1635 = vmatprep.subr.mxu0 0.0
    %1636 = vmatpush1.msra.mxu0 0.0
    %1637 = vmatprep.subr.mxu0 0.0
    %1638 = vmatpush1.msra.mxu0 0.0
    %1639 = vmatprep.subr.mxu0 0.0
    %1640 = vmatpush1.msra.mxu0 0.0
    %1641 = vmatprep.subr.mxu0 0.0
    %1642 = vmatpush1.msra.mxu0 0.0
    %1643 = vmatprep.subr.mxu0 0.0
    %1644 = vmatpush1.msra.mxu0 0.0
    %1645 = vmatprep.subr.mxu0 0.0
    %1646 = vmatpush1.msra.mxu0 0.0
    %1647 = vmatprep.subr.mxu0 0.0
    %1648 = vmatpush1.msra.mxu0 0.0
    %1649 = vmatprep.subr.mxu0 0.0
    %1650 = vmatpush1.msra.mxu0 0.0
    %1651 = vmatprep.mubr.f32.mxu0 0.0
    %1652 = vmatmul.mubr.f32.gmra.mrb[0].mxu0 %v1585
    %v1653 = vpop.f32.mrb[0].mxu0
    %v1654 = vadd.f32 0.0, %v1653
    %v1655 = vpop.f32.mrb[0].mxu0
    %1656 = vdwg.mxu0
    %1657 = vrot.lane.b32.xlu0 %v384, 116
    %v1658 = vpop.permute.xlu0 %1657
    %v1661 = vsel %vm542, %v1580, 0
    %1663 = vmatprep.subr.mxu0 0.0
    %1664 = vmatpush1.msra.mxu0 %v1658
    %1665 = vmatprep.subr.mxu0 0.0
    %1666 = vmatpush1.msra.mxu0 0.0
    %1667 = vmatprep.subr.mxu0 0.0
    %1668 = vmatpush1.msra.mxu0 0.0
    %1669 = vmatprep.subr.mxu0 0.0
    %1670 = vmatpush1.msra.mxu0 0.0
    %1671 = vmatprep.subr.mxu0 0.0
    %1672 = vmatpush1.msra.mxu0 0.0
    %1673 = vmatprep.subr.mxu0 0.0
    %1674 = vmatpush1.msra.mxu0 0.0
    %1675 = vmatprep.subr.mxu0 0.0
    %1676 = vmatpush1.msra.mxu0 0.0
    %1677 = vmatprep.subr.mxu0 0.0
    %1678 = vmatpush1.msra.mxu0 0.0
    %1679 = vmatprep.subr.mxu0 0.0
    %1680 = vmatpush1.msra.mxu0 0.0
    %1681 = vmatprep.subr.mxu0 0.0
    %1682 = vmatpush1.msra.mxu0 0.0
    %1683 = vmatprep.subr.mxu0 0.0
    %1684 = vmatpush1.msra.mxu0 0.0
    %1685 = vmatprep.subr.mxu0 0.0
    %1686 = vmatpush1.msra.mxu0 0.0
    %1687 = vmatprep.subr.mxu0 0.0
    %1688 = vmatpush1.msra.mxu0 0.0
    %1689 = vmatprep.subr.mxu0 0.0
    %1690 = vmatpush1.msra.mxu0 0.0
    %1691 = vmatprep.subr.mxu0 0.0
    %1692 = vmatpush1.msra.mxu0 0.0
    %1693 = vmatprep.subr.mxu0 0.0
    %1694 = vmatpush1.msra.mxu0 0.0
    %1695 = vmatprep.subr.mxu0 0.0
    %1696 = vmatpush1.msra.mxu0 0.0
    %1697 = vmatprep.subr.mxu0 0.0
    %1698 = vmatpush1.msra.mxu0 0.0
    %1699 = vmatprep.subr.mxu0 0.0
    %1700 = vmatpush1.msra.mxu0 0.0
    %1701 = vmatprep.subr.mxu0 0.0
    %1702 = vmatpush1.msra.mxu0 0.0
    %1703 = vmatprep.subr.mxu0 0.0
    %1704 = vmatpush1.msra.mxu0 0.0
    %1705 = vmatprep.subr.mxu0 0.0
    %1706 = vmatpush1.msra.mxu0 0.0
    %1707 = vmatprep.subr.mxu0 0.0
    %1708 = vmatpush1.msra.mxu0 0.0
    %1709 = vmatprep.subr.mxu0 0.0
    %1710 = vmatpush1.msra.mxu0 0.0
    %1711 = vmatprep.subr.mxu0 0.0
    %1712 = vmatpush1.msra.mxu0 0.0
    %1713 = vmatprep.subr.mxu0 0.0
    %1714 = vmatpush1.msra.mxu0 0.0
    %1715 = vmatprep.subr.mxu0 0.0
    %1716 = vmatpush1.msra.mxu0 0.0
    %1717 = vmatprep.subr.mxu0 0.0
    %1718 = vmatpush1.msra.mxu0 0.0
    %1719 = vmatprep.subr.mxu0 0.0
    %1720 = vmatpush1.msra.mxu0 0.0
    %1721 = vmatprep.subr.mxu0 0.0
    %1722 = vmatpush1.msra.mxu0 0.0
    %1723 = vmatprep.subr.mxu0 0.0
    %1724 = vmatpush1.msra.mxu0 0.0
    %1725 = vmatprep.subr.mxu0 0.0
    %1726 = vmatpush1.msra.mxu0 0.0
    %1727 = vmatprep.mubr.f32.mxu0 0.0
    %1728 = vmatmul.mubr.f32.gmra.mrb[0].mxu0 %v1661
    %v1729 = vpop.f32.mrb[0].mxu0
    %v1730 = vadd.f32 0.0, %v1729
    %v1731 = vpop.f32.mrb[0].mxu0
    %1732 = vdwg.mxu0
    %1735 = vrot.lane.b32.xlu0 %v1654, 12
    %v1736 = vpop.permute.xlu0 %1735
    %1737 = vrot.lane.b32.xlu0 %v1730, 12
    %v1738 = vpop.permute.xlu0 %1737
    %vm1741 = vcmask 130144
    %1742 = vst.msk [vmem:[#allocation2] sm:$0xff] %vm1741, %v1736
    %1743 = vst.msk [vmem:[#allocation2 + $0x8] sm:$0xff] %vm1741, %v1738
    %1744 = vrot.lane.b32.xlu0 %v209, 112
    %v1745 = vpop.permute.xlu0 %1744
    %1746 = vrot.lane.b32.xlu0 %v294, 112
    %v1747 = vpop.permute.xlu0 %1746
    %v1748 = vsel %vm387, %v1745, 0
    %v1750 = vsel %vm387, %v1747, 0
    %1752 = vmatprep.subr.mxu0 0.0
    %1753 = vmatpush1.xpose.msra.mxu0 %v1750
    %1754 = vmatprep.subr.mxu0 0.0
    %1755 = vmatpush1.xpose.msra.mxu0 0.0
    %1756 = vmatprep.subr.mxu0 0.0
    %1757 = vmatpush1.xpose.msra.mxu0 0.0
    %1758 = vmatprep.subr.mxu0 0.0
    %1759 = vmatpush1.xpose.msra.mxu0 0.0
    %1760 = vmatprep.subr.mxu0 0.0
    %1761 = vmatpush1.xpose.msra.mxu0 0.0
    %1762 = vmatprep.subr.mxu0 0.0
    %1763 = vmatpush1.xpose.msra.mxu0 0.0
    %1764 = vmatprep.subr.mxu0 0.0
    %1765 = vmatpush1.xpose.msra.mxu0 0.0
    %1766 = vmatprep.subr.mxu0 0.0
    %1767 = vmatpush1.xpose.msra.mxu0 0.0
    %1768 = vmatprep.subr.mxu0 0.0
    %1769 = vmatpush1.xpose.msra.mxu0 0.0
    %1770 = vmatprep.subr.mxu0 0.0
    %1771 = vmatpush1.xpose.msra.mxu0 0.0
    %1772 = vmatprep.subr.mxu0 0.0
    %1773 = vmatpush1.xpose.msra.mxu0 0.0
    %1774 = vmatprep.subr.mxu0 0.0
    %1775 = vmatpush1.xpose.msra.mxu0 0.0
    %1776 = vmatprep.subr.mxu0 0.0
    %1777 = vmatpush1.xpose.msra.mxu0 0.0
    %1778 = vmatprep.subr.mxu0 0.0
    %1779 = vmatpush1.xpose.msra.mxu0 0.0
    %1780 = vmatprep.subr.mxu0 0.0
    %1781 = vmatpush1.xpose.msra.mxu0 0.0
    %1782 = vmatprep.subr.mxu0 0.0
    %1783 = vmatpush1.xpose.msra.mxu0 0.0
    %1784 = vmatprep.subr.mxu0 0.0
    %1785 = vmatpush1.xpose.msra.mxu0 0.0
    %1786 = vmatprep.subr.mxu0 0.0
    %1787 = vmatpush1.xpose.msra.mxu0 0.0
    %1788 = vmatprep.subr.mxu0 0.0
    %1789 = vmatpush1.xpose.msra.mxu0 0.0
    %1790 = vmatprep.subr.mxu0 0.0
    %1791 = vmatpush1.xpose.msra.mxu0 0.0
    %1792 = vmatprep.subr.mxu0 0.0
    %1793 = vmatpush1.xpose.msra.mxu0 0.0
    %1794 = vmatprep.subr.mxu0 0.0
    %1795 = vmatpush1.xpose.msra.mxu0 0.0
    %1796 = vmatprep.subr.mxu0 0.0
    %1797 = vmatpush1.xpose.msra.mxu0 0.0
    %1798 = vmatprep.subr.mxu0 0.0
    %1799 = vmatpush1.xpose.msra.mxu0 0.0
    %1800 = vmatprep.subr.mxu0 0.0
    %1801 = vmatpush1.xpose.msra.mxu0 0.0
    %1802 = vmatprep.subr.mxu0 0.0
    %1803 = vmatpush1.xpose.msra.mxu0 0.0
    %1804 = vmatprep.subr.mxu0 0.0
    %1805 = vmatpush1.xpose.msra.mxu0 0.0
    %1806 = vmatprep.subr.mxu0 0.0
    %1807 = vmatpush1.xpose.msra.mxu0 0.0
    %1808 = vmatprep.subr.mxu0 0.0
    %1809 = vmatpush1.xpose.msra.mxu0 0.0
    %1810 = vmatprep.subr.mxu0 0.0
    %1811 = vmatpush1.xpose.msra.mxu0 0.0
    %1812 = vmatprep.subr.mxu0 0.0
    %1813 = vmatpush1.xpose.msra.mxu0 0.0
    %1814 = vmatprep.subr.mxu0 0.0
    %1815 = vmatpush1.xpose.msra.mxu0 0.0
    %1816 = vmatprep.mubr.f32.mxu0 0.0
    %1817 = vmatmul.mubr.f32.gmra.mrb[0].mxu0 %v1748
    %v1818 = vpop.f32.mrb[0].mxu0
    %v1819 = vadd.f32 0.0, %v1818
    %v1820 = vpop.f32.mrb[0].mxu0
    %1821 = vdwg.mxu0
    %1822 = vrot.lane.b32.xlu0 %v214, 112
    %v1823 = vpop.permute.xlu0 %1822
    %1824 = vrot.lane.b32.xlu0 %v299, 112
    %v1825 = vpop.permute.xlu0 %1824
    %v1826 = vsel %vm387, %v1823, 0
    %v1828 = vsel %vm387, %v1825, 0
    %1830 = vmatprep.subr.mxu0 0.0
    %1831 = vmatpush1.xpose.msra.mxu0 %v1828
    %1832 = vmatprep.subr.mxu0 0.0
    %1833 = vmatpush1.xpose.msra.mxu0 0.0
    %1834 = vmatprep.subr.mxu0 0.0
    %1835 = vmatpush1.xpose.msra.mxu0 0.0
    %1836 = vmatprep.subr.mxu0 0.0
    %1837 = vmatpush1.xpose.msra.mxu0 0.0
    %1838 = vmatprep.subr.mxu0 0.0
    %1839 = vmatpush1.xpose.msra.mxu0 0.0
    %1840 = vmatprep.subr.mxu0 0.0
    %1841 = vmatpush1.xpose.msra.mxu0 0.0
    %1842 = vmatprep.subr.mxu0 0.0
    %1843 = vmatpush1.xpose.msra.mxu0 0.0
    %1844 = vmatprep.subr.mxu0 0.0
    %1845 = vmatpush1.xpose.msra.mxu0 0.0
    %1846 = vmatprep.subr.mxu0 0.0
    %1847 = vmatpush1.xpose.msra.mxu0 0.0
    %1848 = vmatprep.subr.mxu0 0.0
    %1849 = vmatpush1.xpose.msra.mxu0 0.0
    %1850 = vmatprep.subr.mxu0 0.0
    %1851 = vmatpush1.xpose.msra.mxu0 0.0
    %1852 = vmatprep.subr.mxu0 0.0
    %1853 = vmatpush1.xpose.msra.mxu0 0.0
    %1854 = vmatprep.subr.mxu0 0.0
    %1855 = vmatpush1.xpose.msra.mxu0 0.0
    %1856 = vmatprep.subr.mxu0 0.0
    %1857 = vmatpush1.xpose.msra.mxu0 0.0
    %1858 = vmatprep.subr.mxu0 0.0
    %1859 = vmatpush1.xpose.msra.mxu0 0.0
    %1860 = vmatprep.subr.mxu0 0.0
    %1861 = vmatpush1.xpose.msra.mxu0 0.0
    %1862 = vmatprep.subr.mxu0 0.0
    %1863 = vmatpush1.xpose.msra.mxu0 0.0
    %1864 = vmatprep.subr.mxu0 0.0
    %1865 = vmatpush1.xpose.msra.mxu0 0.0
    %1866 = vmatprep.subr.mxu0 0.0
    %1867 = vmatpush1.xpose.msra.mxu0 0.0
    %1868 = vmatprep.subr.mxu0 0.0
    %1869 = vmatpush1.xpose.msra.mxu0 0.0
    %1870 = vmatprep.subr.mxu0 0.0
    %1871 = vmatpush1.xpose.msra.mxu0 0.0
    %1872 = vmatprep.subr.mxu0 0.0
    %1873 = vmatpush1.xpose.msra.mxu0 0.0
    %1874 = vmatprep.subr.mxu0 0.0
    %1875 = vmatpush1.xpose.msra.mxu0 0.0
    %1876 = vmatprep.subr.mxu0 0.0
    %1877 = vmatpush1.xpose.msra.mxu0 0.0
    %1878 = vmatprep.subr.mxu0 0.0
    %1879 = vmatpush1.xpose.msra.mxu0 0.0
    %1880 = vmatprep.subr.mxu0 0.0
    %1881 = vmatpush1.xpose.msra.mxu0 0.0
    %1882 = vmatprep.subr.mxu0 0.0
    %1883 = vmatpush1.xpose.msra.mxu0 0.0
    %1884 = vmatprep.subr.mxu0 0.0
    %1885 = vmatpush1.xpose.msra.mxu0 0.0
    %1886 = vmatprep.subr.mxu0 0.0
    %1887 = vmatpush1.xpose.msra.mxu0 0.0
    %1888 = vmatprep.subr.mxu0 0.0
    %1889 = vmatpush1.xpose.msra.mxu0 0.0
    %1890 = vmatprep.subr.mxu0 0.0
    %1891 = vmatpush1.xpose.msra.mxu0 0.0
    %1892 = vmatprep.subr.mxu0 0.0
    %1893 = vmatpush1.xpose.msra.mxu0 0.0
    %1894 = vmatprep.mubr.f32.mxu0 0.0
    %1895 = vmatmul.mubr.f32.gmra.mrb[0].mxu0 %v1826
    %v1896 = vpop.f32.mrb[0].mxu0
    %v1897 = vadd.f32 0.0, %v1896
    %v1898 = vpop.f32.mrb[0].mxu0
    %1899 = vdwg.mxu0
    %v1900 = vmul.f32 %v1819, 0.5
    %v1901 = vmul.f32 %v1897, 0.5
    %v1902 = vsel %vm542, %v1900, -inf
    %1903 = vmax.xlane.f32.xlu0 %v1902
    %v1904 = vpop.xlane.xlu0 %1903
    %v1905 = vsel %vm542, %v1901, -inf
    %1906 = vmax.xlane.f32.xlu0 %v1905
    %v1907 = vpop.xlane.xlu0 %1906
    %v1908 = vsub.f32 %v1900, %v1904
    %v1909 = vsub.f32 %v1901, %v1907
    %v1910 = vmul.f32 %v1908, 1.442695
    %v1911 = vpow.pop %v1910
    %v1912 = vmul.f32 %v1909, 1.442695
    %v1913 = vpow.pop %v1912
    %v1914 = vsel %vm542, %v1911, 0.0
    %1915 = vadd.xlane.f32.xlu0 %v1914
    %v1916 = vpop.xlane.xlu0 %1915
    %v1917 = vsel %vm542, %v1913, 0.0
    %1918 = vadd.xlane.f32.xlu0 %v1917
    %v1919 = vpop.xlane.xlu0 %1918
    %v1920 = vrcp.pop %v1916
    %v1921 = vrcp.pop %v1919
    %v1922 = vmul.f32 %v1911, %v1920
    %v1923 = vmul.f32 %v1913, %v1921
    %1924 = vrot.lane.b32.xlu0 %v379, 112
    %v1925 = vpop.permute.xlu0 %1924
    %v1928 = vsel %vm542, %v1922, 0
    %1930 = vmatprep.subr.mxu0 0.0
    %1931 = vmatpush1.msra.mxu0 %v1925
    %1932 = vmatprep.subr.mxu0 0.0
    %1933 = vmatpush1.msra.mxu0 0.0
    %1934 = vmatprep.subr.mxu0 0.0
    %1935 = vmatpush1.msra.mxu0 0.0
    %1936 = vmatprep.subr.mxu0 0.0
    %1937 = vmatpush1.msra.mxu0 0.0
    %1938 = vmatprep.subr.mxu0 0.0
    %1939 = vmatpush1.msra.mxu0 0.0
    %1940 = vmatprep.subr.mxu0 0.0
    %1941 = vmatpush1.msra.mxu0 0.0
    %1942 = vmatprep.subr.mxu0 0.0
    %1943 = vmatpush1.msra.mxu0 0.0
    %1944 = vmatprep.subr.mxu0 0.0
    %1945 = vmatpush1.msra.mxu0 0.0
    %1946 = vmatprep.subr.mxu0 0.0
    %1947 = vmatpush1.msra.mxu0 0.0
    %1948 = vmatprep.subr.mxu0 0.0
    %1949 = vmatpush1.msra.mxu0 0.0
    %1950 = vmatprep.subr.mxu0 0.0
    %1951 = vmatpush1.msra.mxu0 0.0
    %1952 = vmatprep.subr.mxu0 0.0
    %1953 = vmatpush1.msra.mxu0 0.0
    %1954 = vmatprep.subr.mxu0 0.0
    %1955 = vmatpush1.msra.mxu0 0.0
    %1956 = vmatprep.subr.mxu0 0.0
    %1957 = vmatpush1.msra.mxu0 0.0
    %1958 = vmatprep.subr.mxu0 0.0
    %1959 = vmatpush1.msra.mxu0 0.0
    %1960 = vmatprep.subr.mxu0 0.0
    %1961 = vmatpush1.msra.mxu0 0.0
    %1962 = vmatprep.subr.mxu0 0.0
    %1963 = vmatpush1.msra.mxu0 0.0
    %1964 = vmatprep.subr.mxu0 0.0
    %1965 = vmatpush1.msra.mxu0 0.0
    %1966 = vmatprep.subr.mxu0 0.0
    %1967 = vmatpush1.msra.mxu0 0.0
    %1968 = vmatprep.subr.mxu0 0.0
    %1969 = vmatpush1.msra.mxu0 0.0
    %1970 = vmatprep.subr.mxu0 0.0
    %1971 = vmatpush1.msra.mxu0 0.0
    %1972 = vmatprep.subr.mxu0 0.0
    %1973 = vmatpush1.msra.mxu0 0.0
    %1974 = vmatprep.subr.mxu0 0.0
    %1975 = vmatpush1.msra.mxu0 0.0
    %1976 = vmatprep.subr.mxu0 0.0
    %1977 = vmatpush1.msra.mxu0 0.0
    %1978 = vmatprep.subr.mxu0 0.0
    %1979 = vmatpush1.msra.mxu0 0.0
    %1980 = vmatprep.subr.mxu0 0.0
    %1981 = vmatpush1.msra.mxu0 0.0
    %1982 = vmatprep.subr.mxu0 0.0
    %1983 = vmatpush1.msra.mxu0 0.0
    %1984 = vmatprep.subr.mxu0 0.0
    %1985 = vmatpush1.msra.mxu0 0.0
    %1986 = vmatprep.subr.mxu0 0.0
    %1987 = vmatpush1.msra.mxu0 0.0
    %1988 = vmatprep.subr.mxu0 0.0
    %1989 = vmatpush1.msra.mxu0 0.0
    %1990 = vmatprep.subr.mxu0 0.0
    %1991 = vmatpush1.msra.mxu0 0.0
    %1992 = vmatprep.subr.mxu0 0.0
    %1993 = vmatpush1.msra.mxu0 0.0
    %1994 = vmatprep.mubr.f32.mxu0 0.0
    %1995 = vmatmul.mubr.f32.gmra.mrb[0].mxu0 %v1928
    %v1996 = vpop.f32.mrb[0].mxu0
    %v1997 = vadd.f32 0.0, %v1996
    %v1998 = vpop.f32.mrb[0].mxu0
    %1999 = vdwg.mxu0
    %2000 = vrot.lane.b32.xlu0 %v384, 112
    %v2001 = vpop.permute.xlu0 %2000
    %v2004 = vsel %vm542, %v1923, 0
    %2006 = vmatprep.subr.mxu0 0.0
    %2007 = vmatpush1.msra.mxu0 %v2001
    %2008 = vmatprep.subr.mxu0 0.0
    %2009 = vmatpush1.msra.mxu0 0.0
    %2010 = vmatprep.subr.mxu0 0.0
    %2011 = vmatpush1.msra.mxu0 0.0
    %2012 = vmatprep.subr.mxu0 0.0
    %2013 = vmatpush1.msra.mxu0 0.0
    %2014 = vmatprep.subr.mxu0 0.0
    %2015 = vmatpush1.msra.mxu0 0.0
    %2016 = vmatprep.subr.mxu0 0.0
    %2017 = vmatpush1.msra.mxu0 0.0
    %2018 = vmatprep.subr.mxu0 0.0
    %2019 = vmatpush1.msra.mxu0 0.0
    %2020 = vmatprep.subr.mxu0 0.0
    %2021 = vmatpush1.msra.mxu0 0.0
    %2022 = vmatprep.subr.mxu0 0.0
    %2023 = vmatpush1.msra.mxu0 0.0
    %2024 = vmatprep.subr.mxu0 0.0
    %2025 = vmatpush1.msra.mxu0 0.0
    %2026 = vmatprep.subr.mxu0 0.0
    %2027 = vmatpush1.msra.mxu0 0.0
    %2028 = vmatprep.subr.mxu0 0.0
    %2029 = vmatpush1.msra.mxu0 0.0
    %2030 = vmatprep.subr.mxu0 0.0
    %2031 = vmatpush1.msra.mxu0 0.0
    %2032 = vmatprep.subr.mxu0 0.0
    %2033 = vmatpush1.msra.mxu0 0.0
    %2034 = vmatprep.subr.mxu0 0.0
    %2035 = vmatpush1.msra.mxu0 0.0
    %2036 = vmatprep.subr.mxu0 0.0
    %2037 = vmatpush1.msra.mxu0 0.0
    %2038 = vmatprep.subr.mxu0 0.0
    %2039 = vmatpush1.msra.mxu0 0.0
    %2040 = vmatprep.subr.mxu0 0.0
    %2041 = vmatpush1.msra.mxu0 0.0
    %2042 = vmatprep.subr.mxu0 0.0
    %2043 = vmatpush1.msra.mxu0 0.0
    %2044 = vmatprep.subr.mxu0 0.0
    %2045 = vmatpush1.msra.mxu0 0.0
    %2046 = vmatprep.subr.mxu0 0.0
    %2047 = vmatpush1.msra.mxu0 0.0
    %2048 = vmatprep.subr.mxu0 0.0
    %2049 = vmatpush1.msra.mxu0 0.0
    %2050 = vmatprep.subr.mxu0 0.0
    %2051 = vmatpush1.msra.mxu0 0.0
    %2052 = vmatprep.subr.mxu0 0.0
    %2053 = vmatpush1.msra.mxu0 0.0
    %2054 = vmatprep.subr.mxu0 0.0
    %2055 = vmatpush1.msra.mxu0 0.0
    %2056 = vmatprep.subr.mxu0 0.0
    %2057 = vmatpush1.msra.mxu0 0.0
    %2058 = vmatprep.subr.mxu0 0.0
    %2059 = vmatpush1.msra.mxu0 0.0
    %2060 = vmatprep.subr.mxu0 0.0
    %2061 = vmatpush1.msra.mxu0 0.0
    %2062 = vmatprep.subr.mxu0 0.0
    %2063 = vmatpush1.msra.mxu0 0.0
    %2064 = vmatprep.subr.mxu0 0.0
    %2065 = vmatpush1.msra.mxu0 0.0
    %2066 = vmatprep.subr.mxu0 0.0
    %2067 = vmatpush1.msra.mxu0 0.0
    %2068 = vmatprep.subr.mxu0 0.0
    %2069 = vmatpush1.msra.mxu0 0.0
    %2070 = vmatprep.mubr.f32.mxu0 0.0
    %2071 = vmatmul.mubr.f32.gmra.mrb[0].mxu0 %v2004
    %v2072 = vpop.f32.mrb[0].mxu0
    %v2073 = vadd.f32 0.0, %v2072
    %v2074 = vpop.f32.mrb[0].mxu0
    %2075 = vdwg.mxu0
    %2078 = vrot.lane.b32.xlu0 %v1997, 16
    %v2079 = vpop.permute.xlu0 %2078
    %2080 = vrot.lane.b32.xlu0 %v2073, 16
    %v2081 = vpop.permute.xlu0 %2080
    %vm2084 = vcmask 162944
    %2085 = vst.msk [vmem:[#allocation2] sm:$0xff] %vm2084, %v2079
    %2086 = vst.msk [vmem:[#allocation2 + $0x8] sm:$0xff] %vm2084, %v2081
    %2087 = vrot.lane.b32.xlu0 %v209, 108
    %v2088 = vpop.permute.xlu0 %2087
    %2089 = vrot.lane.b32.xlu0 %v294, 108
    %v2090 = vpop.permute.xlu0 %2089
    %v2091 = vsel %vm387, %v2088, 0
    %v2093 = vsel %vm387, %v2090, 0
    %2095 = vmatprep.subr.mxu0 0.0
    %2096 = vmatpush1.xpose.msra.mxu0 %v2093
    %2097 = vmatprep.subr.mxu0 0.0
    %2098 = vmatpush1.xpose.msra.mxu0 0.0
    %2099 = vmatprep.subr.mxu0 0.0
    %2100 = vmatpush1.xpose.msra.mxu0 0.0
    %2101 = vmatprep.subr.mxu0 0.0
    %2102 = vmatpush1.xpose.msra.mxu0 0.0
    %2103 = vmatprep.subr.mxu0 0.0
    %2104 = vmatpush1.xpose.msra.mxu0 0.0
    %2105 = vmatprep.subr.mxu0 0.0
    %2106 = vmatpush1.xpose.msra.mxu0 0.0
    %2107 = vmatprep.subr.mxu0 0.0
    %2108 = vmatpush1.xpose.msra.mxu0 0.0
    %2109 = vmatprep.subr.mxu0 0.0
    %2110 = vmatpush1.xpose.msra.mxu0 0.0
    %2111 = vmatprep.subr.mxu0 0.0
    %2112 = vmatpush1.xpose.msra.mxu0 0.0
    %2113 = vmatprep.subr.mxu0 0.0
    %2114 = vmatpush1.xpose.msra.mxu0 0.0
    %2115 = vmatprep.subr.mxu0 0.0
    %2116 = vmatpush1.xpose.msra.mxu0 0.0
    %2117 = vmatprep.subr.mxu0 0.0
    %2118 = vmatpush1.xpose.msra.mxu0 0.0
    %2119 = vmatprep.subr.mxu0 0.0
    %2120 = vmatpush1.xpose.msra.mxu0 0.0
    %2121 = vmatprep.subr.mxu0 0.0
    %2122 = vmatpush1.xpose.msra.mxu0 0.0
    %2123 = vmatprep.subr.mxu0 0.0
    %2124 = vmatpush1.xpose.msra.mxu0 0.0
    %2125 = vmatprep.subr.mxu0 0.0
    %2126 = vmatpush1.xpose.msra.mxu0 0.0
    %2127 = vmatprep.subr.mxu0 0.0
    %2128 = vmatpush1.xpose.msra.mxu0 0.0
    %2129 = vmatprep.subr.mxu0 0.0
    %2130 = vmatpush1.xpose.msra.mxu0 0.0
    %2131 = vmatprep.subr.mxu0 0.0
    %2132 = vmatpush1.xpose.msra.mxu0 0.0
    %2133 = vmatprep.subr.mxu0 0.0
    %2134 = vmatpush1.xpose.msra.mxu0 0.0
    %2135 = vmatprep.subr.mxu0 0.0
    %2136 = vmatpush1.xpose.msra.mxu0 0.0
    %2137 = vmatprep.subr.mxu0 0.0
    %2138 = vmatpush1.xpose.msra.mxu0 0.0
    %2139 = vmatprep.subr.mxu0 0.0
    %2140 = vmatpush1.xpose.msra.mxu0 0.0
    %2141 = vmatprep.subr.mxu0 0.0
    %2142 = vmatpush1.xpose.msra.mxu0 0.0
    %2143 = vmatprep.subr.mxu0 0.0
    %2144 = vmatpush1.xpose.msra.mxu0 0.0
    %2145 = vmatprep.subr.mxu0 0.0
    %2146 = vmatpush1.xpose.msra.mxu0 0.0
    %2147 = vmatprep.subr.mxu0 0.0
    %2148 = vmatpush1.xpose.msra.mxu0 0.0
    %2149 = vmatprep.subr.mxu0 0.0
    %2150 = vmatpush1.xpose.msra.mxu0 0.0
    %2151 = vmatprep.subr.mxu0 0.0
    %2152 = vmatpush1.xpose.msra.mxu0 0.0
    %2153 = vmatprep.subr.mxu0 0.0
    %2154 = vmatpush1.xpose.msra.mxu0 0.0
    %2155 = vmatprep.subr.mxu0 0.0
    %2156 = vmatpush1.xpose.msra.mxu0 0.0
    %2157 = vmatprep.subr.mxu0 0.0
    %2158 = vmatpush1.xpose.msra.mxu0 0.0
    %2159 = vmatprep.mubr.f32.mxu0 0.0
    %2160 = vmatmul.mubr.f32.gmra.mrb[0].mxu0 %v2091
    %v2161 = vpop.f32.mrb[0].mxu0
    %v2162 = vadd.f32 0.0, %v2161
    %v2163 = vpop.f32.mrb[0].mxu0
    %2164 = vdwg.mxu0
    %2165 = vrot.lane.b32.xlu0 %v214, 108
    %v2166 = vpop.permute.xlu0 %2165
    %2167 = vrot.lane.b32.xlu0 %v299, 108
    %v2168 = vpop.permute.xlu0 %2167
    %v2169 = vsel %vm387, %v2166, 0
    %v2171 = vsel %vm387, %v2168, 0
    %2173 = vmatprep.subr.mxu0 0.0
    %2174 = vmatpush1.xpose.msra.mxu0 %v2171
    %2175 = vmatprep.subr.mxu0 0.0
    %2176 = vmatpush1.xpose.msra.mxu0 0.0
    %2177 = vmatprep.subr.mxu0 0.0
    %2178 = vmatpush1.xpose.msra.mxu0 0.0
    %2179 = vmatprep.subr.mxu0 0.0
    %2180 = vmatpush1.xpose.msra.mxu0 0.0
    %2181 = vmatprep.subr.mxu0 0.0
    %2182 = vmatpush1.xpose.msra.mxu0 0.0
    %2183 = vmatprep.subr.mxu0 0.0
    %2184 = vmatpush1.xpose.msra.mxu0 0.0
    %2185 = vmatprep.subr.mxu0 0.0
    %2186 = vmatpush1.xpose.msra.mxu0 0.0
    %2187 = vmatprep.subr.mxu0 0.0
    %2188 = vmatpush1.xpose.msra.mxu0 0.0
    %2189 = vmatprep.subr.mxu0 0.0
    %2190 = vmatpush1.xpose.msra.mxu0 0.0
    %2191 = vmatprep.subr.mxu0 0.0
    %2192 = vmatpush1.xpose.msra.mxu0 0.0
    %2193 = vmatprep.subr.mxu0 0.0
    %2194 = vmatpush1.xpose.msra.mxu0 0.0
    %2195 = vmatprep.subr.mxu0 0.0
    %2196 = vmatpush1.xpose.msra.mxu0 0.0
    %2197 = vmatprep.subr.mxu0 0.0
    %2198 = vmatpush1.xpose.msra.mxu0 0.0
    %2199 = vmatprep.subr.mxu0 0.0
    %2200 = vmatpush1.xpose.msra.mxu0 0.0
    %2201 = vmatprep.subr.mxu0 0.0
    %2202 = vmatpush1.xpose.msra.mxu0 0.0
    %2203 = vmatprep.subr.mxu0 0.0
    %2204 = vmatpush1.xpose.msra.mxu0 0.0
    %2205 = vmatprep.subr.mxu0 0.0
    %2206 = vmatpush1.xpose.msra.mxu0 0.0
    %2207 = vmatprep.subr.mxu0 0.0
    %2208 = vmatpush1.xpose.msra.mxu0 0.0
    %2209 = vmatprep.subr.mxu0 0.0
    %2210 = vmatpush1.xpose.msra.mxu0 0.0
    %2211 = vmatprep.subr.mxu0 0.0
    %2212 = vmatpush1.xpose.msra.mxu0 0.0
    %2213 = vmatprep.subr.mxu0 0.0
    %2214 = vmatpush1.xpose.msra.mxu0 0.0
    %2215 = vmatprep.subr.mxu0 0.0
    %2216 = vmatpush1.xpose.msra.mxu0 0.0
    %2217 = vmatprep.subr.mxu0 0.0
    %2218 = vmatpush1.xpose.msra.mxu0 0.0
    %2219 = vmatprep.subr.mxu0 0.0
    %2220 = vmatpush1.xpose.msra.mxu0 0.0
    %2221 = vmatprep.subr.mxu0 0.0
    %2222 = vmatpush1.xpose.msra.mxu0 0.0
    %2223 = vmatprep.subr.mxu0 0.0
    %2224 = vmatpush1.xpose.msra.mxu0 0.0
    %2225 = vmatprep.subr.mxu0 0.0
    %2226 = vmatpush1.xpose.msra.mxu0 0.0
    %2227 = vmatprep.subr.mxu0 0.0
    %2228 = vmatpush1.xpose.msra.mxu0 0.0
    %2229 = vmatprep.subr.mxu0 0.0
    %2230 = vmatpush1.xpose.msra.mxu0 0.0
    %2231 = vmatprep.subr.mxu0 0.0
    %2232 = vmatpush1.xpose.msra.mxu0 0.0
    %2233 = vmatprep.subr.mxu0 0.0
    %2234 = vmatpush1.xpose.msra.mxu0 0.0
    %2235 = vmatprep.subr.mxu0 0.0
    %2236 = vmatpush1.xpose.msra.mxu0 0.0
    %2237 = vmatprep.mubr.f32.mxu0 0.0
    %2238 = vmatmul.mubr.f32.gmra.mrb[0].mxu0 %v2169
    %v2239 = vpop.f32.mrb[0].mxu0
    %v2240 = vadd.f32 0.0, %v2239
    %v2241 = vpop.f32.mrb[0].mxu0
    %2242 = vdwg.mxu0
    %v2243 = vmul.f32 %v2162, 0.5
    %v2244 = vmul.f32 %v2240, 0.5
    %v2245 = vsel %vm542, %v2243, -inf
    %2246 = vmax.xlane.f32.xlu0 %v2245
    %v2247 = vpop.xlane.xlu0 %2246
    %v2248 = vsel %vm542, %v2244, -inf
    %2249 = vmax.xlane.f32.xlu0 %v2248
    %v2250 = vpop.xlane.xlu0 %2249
    %v2251 = vsub.f32 %v2243, %v2247
    %v2252 = vsub.f32 %v2244, %v2250
    %v2253 = vmul.f32 %v2251, 1.442695
    %v2254 = vpow.pop %v2253
    %v2255 = vmul.f32 %v2252, 1.442695
    %v2256 = vpow.pop %v2255
    %v2257 = vsel %vm542, %v2254, 0.0
    %2258 = vadd.xlane.f32.xlu0 %v2257
    %v2259 = vpop.xlane.xlu0 %2258
    %v2260 = vsel %vm542, %v2256, 0.0
    %2261 = vadd.xlane.f32.xlu0 %v2260
    %v2262 = vpop.xlane.xlu0 %2261
    %v2263 = vrcp.pop %v2259
    %v2264 = vrcp.pop %v2262
    %v2265 = vmul.f32 %v2254, %v2263
    %v2266 = vmul.f32 %v2256, %v2264
    %2267 = vrot.lane.b32.xlu0 %v379, 108
    %v2268 = vpop.permute.xlu0 %2267
    %v2271 = vsel %vm542, %v2265, 0
    %2273 = vmatprep.subr.mxu0 0.0
    %2274 = vmatpush1.msra.mxu0 %v2268
    %2275 = vmatprep.subr.mxu0 0.0
    %2276 = vmatpush1.msra.mxu0 0.0
    %2277 = vmatprep.subr.mxu0 0.0
    %2278 = vmatpush1.msra.mxu0 0.0
    %2279 = vmatprep.subr.mxu0 0.0
    %2280 = vmatpush1.msra.mxu0 0.0
    %2281 = vmatprep.subr.mxu0 0.0
    %2282 = vmatpush1.msra.mxu0 0.0
    %2283 = vmatprep.subr.mxu0 0.0
    %2284 = vmatpush1.msra.mxu0 0.0
    %2285 = vmatprep.subr.mxu0 0.0
    %2286 = vmatpush1.msra.mxu0 0.0
    %2287 = vmatprep.subr.mxu0 0.0
    %2288 = vmatpush1.msra.mxu0 0.0
    %2289 = vmatprep.subr.mxu0 0.0
    %2290 = vmatpush1.msra.mxu0 0.0
    %2291 = vmatprep.subr.mxu0 0.0
    %2292 = vmatpush1.msra.mxu0 0.0
    %2293 = vmatprep.subr.mxu0 0.0
    %2294 = vmatpush1.msra.mxu0 0.0
    %2295 = vmatprep.subr.mxu0 0.0
    %2296 = vmatpush1.msra.mxu0 0.0
    %2297 = vmatprep.subr.mxu0 0.0
    %2298 = vmatpush1.msra.mxu0 0.0
    %2299 = vmatprep.subr.mxu0 0.0
    %2300 = vmatpush1.msra.mxu0 0.0
    %2301 = vmatprep.subr.mxu0 0.0
    %2302 = vmatpush1.msra.mxu0 0.0
    %2303 = vmatprep.subr.mxu0 0.0
    %2304 = vmatpush1.msra.mxu0 0.0
    %2305 = vmatprep.subr.mxu0 0.0
    %2306 = vmatpush1.msra.mxu0 0.0
    %2307 = vmatprep.subr.mxu0 0.0
    %2308 = vmatpush1.msra.mxu0 0.0
    %2309 = vmatprep.subr.mxu0 0.0
    %2310 = vmatpush1.msra.mxu0 0.0
    %2311 = vmatprep.subr.mxu0 0.0
    %2312 = vmatpush1.msra.mxu0 0.0
    %2313 = vmatprep.subr.mxu0 0.0
    %2314 = vmatpush1.msra.mxu0 0.0
    %2315 = vmatprep.subr.mxu0 0.0
    %2316 = vmatpush1.msra.mxu0 0.0
    %2317 = vmatprep.subr.mxu0 0.0
    %2318 = vmatpush1.msra.mxu0 0.0
    %2319 = vmatprep.subr.mxu0 0.0
    %2320 = vmatpush1.msra.mxu0 0.0
    %2321 = vmatprep.subr.mxu0 0.0
    %2322 = vmatpush1.msra.mxu0 0.0
    %2323 = vmatprep.subr.mxu0 0.0
    %2324 = vmatpush1.msra.mxu0 0.0
    %2325 = vmatprep.subr.mxu0 0.0
    %2326 = vmatpush1.msra.mxu0 0.0
    %2327 = vmatprep.subr.mxu0 0.0
    %2328 = vmatpush1.msra.mxu0 0.0
    %2329 = vmatprep.subr.mxu0 0.0
    %2330 = vmatpush1.msra.mxu0 0.0
    %2331 = vmatprep.subr.mxu0 0.0
    %2332 = vmatpush1.msra.mxu0 0.0
    %2333 = vmatprep.subr.mxu0 0.0
    %2334 = vmatpush1.msra.mxu0 0.0
    %2335 = vmatprep.subr.mxu0 0.0
    %2336 = vmatpush1.msra.mxu0 0.0
    %2337 = vmatprep.mubr.f32.mxu0 0.0
    %2338 = vmatmul.mubr.f32.gmra.mrb[0].mxu0 %v2271
    %v2339 = vpop.f32.mrb[0].mxu0
    %v2340 = vadd.f32 0.0, %v2339
    %v2341 = vpop.f32.mrb[0].mxu0
    %2342 = vdwg.mxu0
    %2343 = vrot.lane.b32.xlu0 %v384, 108
    %v2344 = vpop.permute.xlu0 %2343
    %v2347 = vsel %vm542, %v2266, 0
    %2349 = vmatprep.subr.mxu0 0.0
    %2350 = vmatpush1.msra.mxu0 %v2344
    %2351 = vmatprep.subr.mxu0 0.0
    %2352 = vmatpush1.msra.mxu0 0.0
    %2353 = vmatprep.subr.mxu0 0.0
    %2354 = vmatpush1.msra.mxu0 0.0
    %2355 = vmatprep.subr.mxu0 0.0
    %2356 = vmatpush1.msra.mxu0 0.0
    %2357 = vmatprep.subr.mxu0 0.0
    %2358 = vmatpush1.msra.mxu0 0.0
    %2359 = vmatprep.subr.mxu0 0.0
    %2360 = vmatpush1.msra.mxu0 0.0
    %2361 = vmatprep.subr.mxu0 0.0
    %2362 = vmatpush1.msra.mxu0 0.0
    %2363 = vmatprep.subr.mxu0 0.0
    %2364 = vmatpush1.msra.mxu0 0.0
    %2365 = vmatprep.subr.mxu0 0.0
    %2366 = vmatpush1.msra.mxu0 0.0
    %2367 = vmatprep.subr.mxu0 0.0
    %2368 = vmatpush1.msra.mxu0 0.0
    %2369 = vmatprep.subr.mxu0 0.0
    %2370 = vmatpush1.msra.mxu0 0.0
    %2371 = vmatprep.subr.mxu0 0.0
    %2372 = vmatpush1.msra.mxu0 0.0
    %2373 = vmatprep.subr.mxu0 0.0
    %2374 = vmatpush1.msra.mxu0 0.0
    %2375 = vmatprep.subr.mxu0 0.0
    %2376 = vmatpush1.msra.mxu0 0.0
    %2377 = vmatprep.subr.mxu0 0.0
    %2378 = vmatpush1.msra.mxu0 0.0
    %2379 = vmatprep.subr.mxu0 0.0
    %2380 = vmatpush1.msra.mxu0 0.0
    %2381 = vmatprep.subr.mxu0 0.0
    %2382 = vmatpush1.msra.mxu0 0.0
    %2383 = vmatprep.subr.mxu0 0.0
    %2384 = vmatpush1.msra.mxu0 0.0
    %2385 = vmatprep.subr.mxu0 0.0
    %2386 = vmatpush1.msra.mxu0 0.0
    %2387 = vmatprep.subr.mxu0 0.0
    %2388 = vmatpush1.msra.mxu0 0.0
    %2389 = vmatprep.subr.mxu0 0.0
    %2390 = vmatpush1.msra.mxu0 0.0
    %2391 = vmatprep.subr.mxu0 0.0
    %2392 = vmatpush1.msra.mxu0 0.0
    %2393 = vmatprep.subr.mxu0 0.0
    %2394 = vmatpush1.msra.mxu0 0.0
    %2395 = vmatprep.subr.mxu0 0.0
    %2396 = vmatpush1.msra.mxu0 0.0
    %2397 = vmatprep.subr.mxu0 0.0
    %2398 = vmatpush1.msra.mxu0 0.0
    %2399 = vmatprep.subr.mxu0 0.0
    %2400 = vmatpush1.msra.mxu0 0.0
    %2401 = vmatprep.subr.mxu0 0.0
    %2402 = vmatpush1.msra.mxu0 0.0
    %2403 = vmatprep.subr.mxu0 0.0
    %2404 = vmatpush1.msra.mxu0 0.0
    %2405 = vmatprep.subr.mxu0 0.0
    %2406 = vmatpush1.msra.mxu0 0.0
    %2407 = vmatprep.subr.mxu0 0.0
    %2408 = vmatpush1.msra.mxu0 0.0
    %2409 = vmatprep.subr.mxu0 0.0
    %2410 = vmatpush1.msra.mxu0 0.0
    %2411 = vmatprep.subr.mxu0 0.0
    %2412 = vmatpush1.msra.mxu0 0.0
    %2413 = vmatprep.mubr.f32.mxu0 0.0
    %2414 = vmatmul.mubr.f32.gmra.mrb[0].mxu0 %v2347
    %v2415 = vpop.f32.mrb[0].mxu0
    %v2416 = vadd.f32 0.0, %v2415
    %v2417 = vpop.f32.mrb[0].mxu0
    %2418 = vdwg.mxu0
    %2421 = vrot.lane.b32.xlu0 %v2340, 20
    %v2422 = vpop.permute.xlu0 %2421
    %2423 = vrot.lane.b32.xlu0 %v2416, 20
    %v2424 = vpop.permute.xlu0 %2423
    %vm2427 = vcmask 195744
    %2428 = vst.msk [vmem:[#allocation2] sm:$0xff] %vm2427, %v2422
    %2429 = vst.msk [vmem:[#allocation2 + $0x8] sm:$0xff] %vm2427, %v2424
    %2430 = vrot.lane.b32.xlu0 %v209, 104
    %v2431 = vpop.permute.xlu0 %2430
    %2432 = vrot.lane.b32.xlu0 %v294, 104
    %v2433 = vpop.permute.xlu0 %2432
    %v2434 = vsel %vm387, %v2431, 0
    %v2436 = vsel %vm387, %v2433, 0
    %2438 = vmatprep.subr.mxu0 0.0
    %2439 = vmatpush1.xpose.msra.mxu0 %v2436
    %2440 = vmatprep.subr.mxu0 0.0
    %2441 = vmatpush1.xpose.msra.mxu0 0.0
    %2442 = vmatprep.subr.mxu0 0.0
    %2443 = vmatpush1.xpose.msra.mxu0 0.0
    %2444 = vmatprep.subr.mxu0 0.0
    %2445 = vmatpush1.xpose.msra.mxu0 0.0
    %2446 = vmatprep.subr.mxu0 0.0
    %2447 = vmatpush1.xpose.msra.mxu0 0.0
    %2448 = vmatprep.subr.mxu0 0.0
    %2449 = vmatpush1.xpose.msra.mxu0 0.0
    %2450 = vmatprep.subr.mxu0 0.0
    %2451 = vmatpush1.xpose.msra.mxu0 0.0
    %2452 = vmatprep.subr.mxu0 0.0
    %2453 = vmatpush1.xpose.msra.mxu0 0.0
    %2454 = vmatprep.subr.mxu0 0.0
    %2455 = vmatpush1.xpose.msra.mxu0 0.0
    %2456 = vmatprep.subr.mxu0 0.0
    %2457 = vmatpush1.xpose.msra.mxu0 0.0
    %2458 = vmatprep.subr.mxu0 0.0
    %2459 = vmatpush1.xpose.msra.mxu0 0.0
    %2460 = vmatprep.subr.mxu0 0.0
    %2461 = vmatpush1.xpose.msra.mxu0 0.0
    %2462 = vmatprep.subr.mxu0 0.0
    %2463 = vmatpush1.xpose.msra.mxu0 0.0
    %2464 = vmatprep.subr.mxu0 0.0
    %2465 = vmatpush1.xpose.msra.mxu0 0.0
    %2466 = vmatprep.subr.mxu0 0.0
    %2467 = vmatpush1.xpose.msra.mxu0 0.0
    %2468 = vmatprep.subr.mxu0 0.0
    %2469 = vmatpush1.xpose.msra.mxu0 0.0
    %2470 = vmatprep.subr.mxu0 0.0
    %2471 = vmatpush1.xpose.msra.mxu0 0.0
    %2472 = vmatprep.subr.mxu0 0.0
    %2473 = vmatpush1.xpose.msra.mxu0 0.0
    %2474 = vmatprep.subr.mxu0 0.0
    %2475 = vmatpush1.xpose.msra.mxu0 0.0
    %2476 = vmatprep.subr.mxu0 0.0
    %2477 = vmatpush1.xpose.msra.mxu0 0.0
    %2478 = vmatprep.subr.mxu0 0.0
    %2479 = vmatpush1.xpose.msra.mxu0 0.0
    %2480 = vmatprep.subr.mxu0 0.0
    %2481 = vmatpush1.xpose.msra.mxu0 0.0
    %2482 = vmatprep.subr.mxu0 0.0
    %2483 = vmatpush1.xpose.msra.mxu0 0.0
    %2484 = vmatprep.subr.mxu0 0.0
    %2485 = vmatpush1.xpose.msra.mxu0 0.0
    %2486 = vmatprep.subr.mxu0 0.0
    %2487 = vmatpush1.xpose.msra.mxu0 0.0
    %2488 = vmatprep.subr.mxu0 0.0
    %2489 = vmatpush1.xpose.msra.mxu0 0.0
    %2490 = vmatprep.subr.mxu0 0.0
    %2491 = vmatpush1.xpose.msra.mxu0 0.0
    %2492 = vmatprep.subr.mxu0 0.0
    %2493 = vmatpush1.xpose.msra.mxu0 0.0
    %2494 = vmatprep.subr.mxu0 0.0
    %2495 = vmatpush1.xpose.msra.mxu0 0.0
    %2496 = vmatprep.subr.mxu0 0.0
    %2497 = vmatpush1.xpose.msra.mxu0 0.0
    %2498 = vmatprep.subr.mxu0 0.0
    %2499 = vmatpush1.xpose.msra.mxu0 0.0
    %2500 = vmatprep.subr.mxu0 0.0
    %2501 = vmatpush1.xpose.msra.mxu0 0.0
    %2502 = vmatprep.mubr.f32.mxu0 0.0
    %2503 = vmatmul.mubr.f32.gmra.mrb[0].mxu0 %v2434
    %v2504 = vpop.f32.mrb[0].mxu0
    %v2505 = vadd.f32 0.0, %v2504
    %v2506 = vpop.f32.mrb[0].mxu0
    %2507 = vdwg.mxu0
    %2508 = vrot.lane.b32.xlu0 %v214, 104
    %v2509 = vpop.permute.xlu0 %2508
    %2510 = vrot.lane.b32.xlu0 %v299, 104
    %v2511 = vpop.permute.xlu0 %2510
    %v2512 = vsel %vm387, %v2509, 0
    %v2514 = vsel %vm387, %v2511, 0
    %2516 = vmatprep.subr.mxu0 0.0
    %2517 = vmatpush1.xpose.msra.mxu0 %v2514
    %2518 = vmatprep.subr.mxu0 0.0
    %2519 = vmatpush1.xpose.msra.mxu0 0.0
    %2520 = vmatprep.subr.mxu0 0.0
    %2521 = vmatpush1.xpose.msra.mxu0 0.0
    %2522 = vmatprep.subr.mxu0 0.0
    %2523 = vmatpush1.xpose.msra.mxu0 0.0
    %2524 = vmatprep.subr.mxu0 0.0
    %2525 = vmatpush1.xpose.msra.mxu0 0.0
    %2526 = vmatprep.subr.mxu0 0.0
    %2527 = vmatpush1.xpose.msra.mxu0 0.0
    %2528 = vmatprep.subr.mxu0 0.0
    %2529 = vmatpush1.xpose.msra.mxu0 0.0
    %2530 = vmatprep.subr.mxu0 0.0
    %2531 = vmatpush1.xpose.msra.mxu0 0.0
    %2532 = vmatprep.subr.mxu0 0.0
    %2533 = vmatpush1.xpose.msra.mxu0 0.0
    %2534 = vmatprep.subr.mxu0 0.0
    %2535 = vmatpush1.xpose.msra.mxu0 0.0
    %2536 = vmatprep.subr.mxu0 0.0
    %2537 = vmatpush1.xpose.msra.mxu0 0.0
    %2538 = vmatprep.subr.mxu0 0.0
    %2539 = vmatpush1.xpose.msra.mxu0 0.0
    %2540 = vmatprep.subr.mxu0 0.0
    %2541 = vmatpush1.xpose.msra.mxu0 0.0
    %2542 = vmatprep.subr.mxu0 0.0
    %2543 = vmatpush1.xpose.msra.mxu0 0.0
    %2544 = vmatprep.subr.mxu0 0.0
    %2545 = vmatpush1.xpose.msra.mxu0 0.0
    %2546 = vmatprep.subr.mxu0 0.0
    %2547 = vmatpush1.xpose.msra.mxu0 0.0
    %2548 = vmatprep.subr.mxu0 0.0
    %2549 = vmatpush1.xpose.msra.mxu0 0.0
    %2550 = vmatprep.subr.mxu0 0.0
    %2551 = vmatpush1.xpose.msra.mxu0 0.0
    %2552 = vmatprep.subr.mxu0 0.0
    %2553 = vmatpush1.xpose.msra.mxu0 0.0
    %2554 = vmatprep.subr.mxu0 0.0
    %2555 = vmatpush1.xpose.msra.mxu0 0.0
    %2556 = vmatprep.subr.mxu0 0.0
    %2557 = vmatpush1.xpose.msra.mxu0 0.0
    %2558 = vmatprep.subr.mxu0 0.0
    %2559 = vmatpush1.xpose.msra.mxu0 0.0
    %2560 = vmatprep.subr.mxu0 0.0
    %2561 = vmatpush1.xpose.msra.mxu0 0.0
    %2562 = vmatprep.subr.mxu0 0.0
    %2563 = vmatpush1.xpose.msra.mxu0 0.0
    %2564 = vmatprep.subr.mxu0 0.0
    %2565 = vmatpush1.xpose.msra.mxu0 0.0
    %2566 = vmatprep.subr.mxu0 0.0
    %2567 = vmatpush1.xpose.msra.mxu0 0.0
    %2568 = vmatprep.subr.mxu0 0.0
    %2569 = vmatpush1.xpose.msra.mxu0 0.0
    %2570 = vmatprep.subr.mxu0 0.0
    %2571 = vmatpush1.xpose.msra.mxu0 0.0
    %2572 = vmatprep.subr.mxu0 0.0
    %2573 = vmatpush1.xpose.msra.mxu0 0.0
    %2574 = vmatprep.subr.mxu0 0.0
    %2575 = vmatpush1.xpose.msra.mxu0 0.0
    %2576 = vmatprep.subr.mxu0 0.0
    %2577 = vmatpush1.xpose.msra.mxu0 0.0
    %2578 = vmatprep.subr.mxu0 0.0
    %2579 = vmatpush1.xpose.msra.mxu0 0.0
    %2580 = vmatprep.mubr.f32.mxu0 0.0
    %2581 = vmatmul.mubr.f32.gmra.mrb[0].mxu0 %v2512
    %v2582 = vpop.f32.mrb[0].mxu0
    %v2583 = vadd.f32 0.0, %v2582
    %v2584 = vpop.f32.mrb[0].mxu0
    %2585 = vdwg.mxu0
    %v2586 = vmul.f32 %v2505, 0.5
    %v2587 = vmul.f32 %v2583, 0.5
    %v2588 = vsel %vm542, %v2586, -inf
    %2589 = vmax.xlane.f32.xlu0 %v2588
    %v2590 = vpop.xlane.xlu0 %2589
    %v2591 = vsel %vm542, %v2587, -inf
    %2592 = vmax.xlane.f32.xlu0 %v2591
    %v2593 = vpop.xlane.xlu0 %2592
    %v2594 = vsub.f32 %v2586, %v2590
    %v2595 = vsub.f32 %v2587, %v2593
    %v2596 = vmul.f32 %v2594, 1.442695
    %v2597 = vpow.pop %v2596
    %v2598 = vmul.f32 %v2595, 1.442695
    %v2599 = vpow.pop %v2598
    %v2600 = vsel %vm542, %v2597, 0.0
    %2601 = vadd.xlane.f32.xlu0 %v2600
    %v2602 = vpop.xlane.xlu0 %2601
    %v2603 = vsel %vm542, %v2599, 0.0
    %2604 = vadd.xlane.f32.xlu0 %v2603
    %v2605 = vpop.xlane.xlu0 %2604
    %v2606 = vrcp.pop %v2602
    %v2607 = vrcp.pop %v2605
    %v2608 = vmul.f32 %v2597, %v2606
    %v2609 = vmul.f32 %v2599, %v2607
    %2610 = vrot.lane.b32.xlu0 %v379, 104
    %v2611 = vpop.permute.xlu0 %2610
    %v2614 = vsel %vm542, %v2608, 0
    %2616 = vmatprep.subr.mxu0 0.0
    %2617 = vmatpush1.msra.mxu0 %v2611
    %2618 = vmatprep.subr.mxu0 0.0
    %2619 = vmatpush1.msra.mxu0 0.0
    %2620 = vmatprep.subr.mxu0 0.0
    %2621 = vmatpush1.msra.mxu0 0.0
    %2622 = vmatprep.subr.mxu0 0.0
    %2623 = vmatpush1.msra.mxu0 0.0
    %2624 = vmatprep.subr.mxu0 0.0
    %2625 = vmatpush1.msra.mxu0 0.0
    %2626 = vmatprep.subr.mxu0 0.0
    %2627 = vmatpush1.msra.mxu0 0.0
    %2628 = vmatprep.subr.mxu0 0.0
    %2629 = vmatpush1.msra.mxu0 0.0
    %2630 = vmatprep.subr.mxu0 0.0
    %2631 = vmatpush1.msra.mxu0 0.0
    %2632 = vmatprep.subr.mxu0 0.0
    %2633 = vmatpush1.msra.mxu0 0.0
    %2634 = vmatprep.subr.mxu0 0.0
    %2635 = vmatpush1.msra.mxu0 0.0
    %2636 = vmatprep.subr.mxu0 0.0
    %2637 = vmatpush1.msra.mxu0 0.0
    %2638 = vmatprep.subr.mxu0 0.0
    %2639 = vmatpush1.msra.mxu0 0.0
    %2640 = vmatprep.subr.mxu0 0.0
    %2641 = vmatpush1.msra.mxu0 0.0
    %2642 = vmatprep.subr.mxu0 0.0
    %2643 = vmatpush1.msra.mxu0 0.0
    %2644 = vmatprep.subr.mxu0 0.0
    %2645 = vmatpush1.msra.mxu0 0.0
    %2646 = vmatprep.subr.mxu0 0.0
    %2647 = vmatpush1.msra.mxu0 0.0
    %2648 = vmatprep.subr.mxu0 0.0
    %2649 = vmatpush1.msra.mxu0 0.0
    %2650 = vmatprep.subr.mxu0 0.0
    %2651 = vmatpush1.msra.mxu0 0.0
    %2652 = vmatprep.subr.mxu0 0.0
    %2653 = vmatpush1.msra.mxu0 0.0
    %2654 = vmatprep.subr.mxu0 0.0
    %2655 = vmatpush1.msra.mxu0 0.0
    %2656 = vmatprep.subr.mxu0 0.0
    %2657 = vmatpush1.msra.mxu0 0.0
    %2658 = vmatprep.subr.mxu0 0.0
    %2659 = vmatpush1.msra.mxu0 0.0
    %2660 = vmatprep.subr.mxu0 0.0
    %2661 = vmatpush1.msra.mxu0 0.0
    %2662 = vmatprep.subr.mxu0 0.0
    %2663 = vmatpush1.msra.mxu0 0.0
    %2664 = vmatprep.subr.mxu0 0.0
    %2665 = vmatpush1.msra.mxu0 0.0
    %2666 = vmatprep.subr.mxu0 0.0
    %2667 = vmatpush1.msra.mxu0 0.0
    %2668 = vmatprep.subr.mxu0 0.0
    %2669 = vmatpush1.msra.mxu0 0.0
    %2670 = vmatprep.subr.mxu0 0.0
    %2671 = vmatpush1.msra.mxu0 0.0
    %2672 = vmatprep.subr.mxu0 0.0
    %2673 = vmatpush1.msra.mxu0 0.0
    %2674 = vmatprep.subr.mxu0 0.0
    %2675 = vmatpush1.msra.mxu0 0.0
    %2676 = vmatprep.subr.mxu0 0.0
    %2677 = vmatpush1.msra.mxu0 0.0
    %2678 = vmatprep.subr.mxu0 0.0
    %2679 = vmatpush1.msra.mxu0 0.0
    %2680 = vmatprep.mubr.f32.mxu0 0.0
    %2681 = vmatmul.mubr.f32.gmra.mrb[0].mxu0 %v2614
    %v2682 = vpop.f32.mrb[0].mxu0
    %v2683 = vadd.f32 0.0, %v2682
    %v2684 = vpop.f32.mrb[0].mxu0
    %2685 = vdwg.mxu0
    %2686 = vrot.lane.b32.xlu0 %v384, 104
    %v2687 = vpop.permute.xlu0 %2686
    %v2690 = vsel %vm542, %v2609, 0
    %2692 = vmatprep.subr.mxu0 0.0
    %2693 = vmatpush1.msra.mxu0 %v2687
    %2694 = vmatprep.subr.mxu0 0.0
    %2695 = vmatpush1.msra.mxu0 0.0
    %2696 = vmatprep.subr.mxu0 0.0
    %2697 = vmatpush1.msra.mxu0 0.0
    %2698 = vmatprep.subr.mxu0 0.0
    %2699 = vmatpush1.msra.mxu0 0.0
    %2700 = vmatprep.subr.mxu0 0.0
    %2701 = vmatpush1.msra.mxu0 0.0
    %2702 = vmatprep.subr.mxu0 0.0
    %2703 = vmatpush1.msra.mxu0 0.0
    %2704 = vmatprep.subr.mxu0 0.0
    %2705 = vmatpush1.msra.mxu0 0.0
    %2706 = vmatprep.subr.mxu0 0.0
    %2707 = vmatpush1.msra.mxu0 0.0
    %2708 = vmatprep.subr.mxu0 0.0
    %2709 = vmatpush1.msra.mxu0 0.0
    %2710 = vmatprep.subr.mxu0 0.0
    %2711 = vmatpush1.msra.mxu0 0.0
    %2712 = vmatprep.subr.mxu0 0.0
    %2713 = vmatpush1.msra.mxu0 0.0
    %2714 = vmatprep.subr.mxu0 0.0
    %2715 = vmatpush1.msra.mxu0 0.0
    %2716 = vmatprep.subr.mxu0 0.0
    %2717 = vmatpush1.msra.mxu0 0.0
    %2718 = vmatprep.subr.mxu0 0.0
    %2719 = vmatpush1.msra.mxu0 0.0
    %2720 = vmatprep.subr.mxu0 0.0
    %2721 = vmatpush1.msra.mxu0 0.0
    %2722 = vmatprep.subr.mxu0 0.0
    %2723 = vmatpush1.msra.mxu0 0.0
    %2724 = vmatprep.subr.mxu0 0.0
    %2725 = vmatpush1.msra.mxu0 0.0
    %2726 = vmatprep.subr.mxu0 0.0
    %2727 = vmatpush1.msra.mxu0 0.0
    %2728 = vmatprep.subr.mxu0 0.0
    %2729 = vmatpush1.msra.mxu0 0.0
    %2730 = vmatprep.subr.mxu0 0.0
    %2731 = vmatpush1.msra.mxu0 0.0
    %2732 = vmatprep.subr.mxu0 0.0
    %2733 = vmatpush1.msra.mxu0 0.0
    %2734 = vmatprep.subr.mxu0 0.0
    %2735 = vmatpush1.msra.mxu0 0.0
    %2736 = vmatprep.subr.mxu0 0.0
    %2737 = vmatpush1.msra.mxu0 0.0
    %2738 = vmatprep.subr.mxu0 0.0
    %2739 = vmatpush1.msra.mxu0 0.0
    %2740 = vmatprep.subr.mxu0 0.0
    %2741 = vmatpush1.msra.mxu0 0.0
    %2742 = vmatprep.subr.mxu0 0.0
    %2743 = vmatpush1.msra.mxu0 0.0
    %2744 = vmatprep.subr.mxu0 0.0
    %2745 = vmatpush1.msra.mxu0 0.0
    %2746 = vmatprep.subr.mxu0 0.0
    %2747 = vmatpush1.msra.mxu0 0.0
    %2748 = vmatprep.subr.mxu0 0.0
    %2749 = vmatpush1.msra.mxu0 0.0
    %2750 = vmatprep.subr.mxu0 0.0
    %2751 = vmatpush1.msra.mxu0 0.0
    %2752 = vmatprep.subr.mxu0 0.0
    %2753 = vmatpush1.msra.mxu0 0.0
    %2754 = vmatprep.subr.mxu0 0.0
    %2755 = vmatpush1.msra.mxu0 0.0
    %2756 = vmatprep.mubr.f32.mxu0 0.0
    %2757 = vmatmul.mubr.f32.gmra.mrb[0].mxu0 %v2690
    %v2758 = vpop.f32.mrb[0].mxu0
    %v2759 = vadd.f32 0.0, %v2758
    %v2760 = vpop.f32.mrb[0].mxu0
    %2761 = vdwg.mxu0
    %2764 = vrot.lane.b32.xlu0 %v2683, 24
    %v2765 = vpop.permute.xlu0 %2764
    %2766 = vrot.lane.b32.xlu0 %v2759, 24
    %v2767 = vpop.permute.xlu0 %2766
    %vm2770 = vcmask 228544
    %2771 = vst.msk [vmem:[#allocation2] sm:$0xff] %vm2770, %v2765
    %2772 = vst.msk [vmem:[#allocation2 + $0x8] sm:$0xff] %vm2770, %v2767
    %2773 = vrot.lane.b32.xlu0 %v209, 100
    %v2774 = vpop.permute.xlu0 %2773
    %2775 = vrot.lane.b32.xlu0 %v294, 100
    %v2776 = vpop.permute.xlu0 %2775
    %v2777 = vsel %vm387, %v2774, 0
    %v2779 = vsel %vm387, %v2776, 0
    %2781 = vmatprep.subr.mxu0 0.0
    %2782 = vmatpush1.xpose.msra.mxu0 %v2779
    %2783 = vmatprep.subr.mxu0 0.0
    %2784 = vmatpush1.xpose.msra.mxu0 0.0
    %2785 = vmatprep.subr.mxu0 0.0
    %2786 = vmatpush1.xpose.msra.mxu0 0.0
    %2787 = vmatprep.subr.mxu0 0.0
    %2788 = vmatpush1.xpose.msra.mxu0 0.0
    %2789 = vmatprep.subr.mxu0 0.0
    %2790 = vmatpush1.xpose.msra.mxu0 0.0
    %2791 = vmatprep.subr.mxu0 0.0
    %2792 = vmatpush1.xpose.msra.mxu0 0.0
    %2793 = vmatprep.subr.mxu0 0.0
    %2794 = vmatpush1.xpose.msra.mxu0 0.0
    %2795 = vmatprep.subr.mxu0 0.0
    %2796 = vmatpush1.xpose.msra.mxu0 0.0
    %2797 = vmatprep.subr.mxu0 0.0
    %2798 = vmatpush1.xpose.msra.mxu0 0.0
    %2799 = vmatprep.subr.mxu0 0.0
    %2800 = vmatpush1.xpose.msra.mxu0 0.0
    %2801 = vmatprep.subr.mxu0 0.0
    %2802 = vmatpush1.xpose.msra.mxu0 0.0
    %2803 = vmatprep.subr.mxu0 0.0
    %2804 = vmatpush1.xpose.msra.mxu0 0.0
    %2805 = vmatprep.subr.mxu0 0.0
    %2806 = vmatpush1.xpose.msra.mxu0 0.0
    %2807 = vmatprep.subr.mxu0 0.0
    %2808 = vmatpush1.xpose.msra.mxu0 0.0
    %2809 = vmatprep.subr.mxu0 0.0
    %2810 = vmatpush1.xpose.msra.mxu0 0.0
    %2811 = vmatprep.subr.mxu0 0.0
    %2812 = vmatpush1.xpose.msra.mxu0 0.0
    %2813 = vmatprep.subr.mxu0 0.0
    %2814 = vmatpush1.xpose.msra.mxu0 0.0
    %2815 = vmatprep.subr.mxu0 0.0
    %2816 = vmatpush1.xpose.msra.mxu0 0.0
    %2817 = vmatprep.subr.mxu0 0.0
    %2818 = vmatpush1.xpose.msra.mxu0 0.0
    %2819 = vmatprep.subr.mxu0 0.0
    %2820 = vmatpush1.xpose.msra.mxu0 0.0
    %2821 = vmatprep.subr.mxu0 0.0
    %2822 = vmatpush1.xpose.msra.mxu0 0.0
    %2823 = vmatprep.subr.mxu0 0.0
    %2824 = vmatpush1.xpose.msra.mxu0 0.0
    %2825 = vmatprep.subr.mxu0 0.0
    %2826 = vmatpush1.xpose.msra.mxu0 0.0
    %2827 = vmatprep.subr.mxu0 0.0
    %2828 = vmatpush1.xpose.msra.mxu0 0.0
    %2829 = vmatprep.subr.mxu0 0.0
    %2830 = vmatpush1.xpose.msra.mxu0 0.0
    %2831 = vmatprep.subr.mxu0 0.0
    %2832 = vmatpush1.xpose.msra.mxu0 0.0
    %2833 = vmatprep.subr.mxu0 0.0
    %2834 = vmatpush1.xpose.msra.mxu0 0.0
    %2835 = vmatprep.subr.mxu0 0.0
    %2836 = vmatpush1.xpose.msra.mxu0 0.0
    %2837 = vmatprep.subr.mxu0 0.0
    %2838 = vmatpush1.xpose.msra.mxu0 0.0
    %2839 = vmatprep.subr.mxu0 0.0
    %2840 = vmatpush1.xpose.msra.mxu0 0.0
    %2841 = vmatprep.subr.mxu0 0.0
    %2842 = vmatpush1.xpose.msra.mxu0 0.0
    %2843 = vmatprep.subr.mxu0 0.0
    %2844 = vmatpush1.xpose.msra.mxu0 0.0
    %2845 = vmatprep.mubr.f32.mxu0 0.0
    %2846 = vmatmul.mubr.f32.gmra.mrb[0].mxu0 %v2777
    %v2847 = vpop.f32.mrb[0].mxu0
    %v2848 = vadd.f32 0.0, %v2847
    %v2849 = vpop.f32.mrb[0].mxu0
    %2850 = vdwg.mxu0
    %2851 = vrot.lane.b32.xlu0 %v214, 100
    %v2852 = vpop.permute.xlu0 %2851
    %2853 = vrot.lane.b32.xlu0 %v299, 100
    %v2854 = vpop.permute.xlu0 %2853
    %v2855 = vsel %vm387, %v2852, 0
    %v2857 = vsel %vm387, %v2854, 0
    %2859 = vmatprep.subr.mxu0 0.0
    %2860 = vmatpush1.xpose.msra.mxu0 %v2857
    %2861 = vmatprep.subr.mxu0 0.0
    %2862 = vmatpush1.xpose.msra.mxu0 0.0
    %2863 = vmatprep.subr.mxu0 0.0
    %2864 = vmatpush1.xpose.msra.mxu0 0.0
    %2865 = vmatprep.subr.mxu0 0.0
    %2866 = vmatpush1.xpose.msra.mxu0 0.0
    %2867 = vmatprep.subr.mxu0 0.0
    %2868 = vmatpush1.xpose.msra.mxu0 0.0
    %2869 = vmatprep.subr.mxu0 0.0
    %2870 = vmatpush1.xpose.msra.mxu0 0.0
    %2871 = vmatprep.subr.mxu0 0.0
    %2872 = vmatpush1.xpose.msra.mxu0 0.0
    %2873 = vmatprep.subr.mxu0 0.0
    %2874 = vmatpush1.xpose.msra.mxu0 0.0
    %2875 = vmatprep.subr.mxu0 0.0
    %2876 = vmatpush1.xpose.msra.mxu0 0.0
    %2877 = vmatprep.subr.mxu0 0.0
    %2878 = vmatpush1.xpose.msra.mxu0 0.0
    %2879 = vmatprep.subr.mxu0 0.0
    %2880 = vmatpush1.xpose.msra.mxu0 0.0
    %2881 = vmatprep.subr.mxu0 0.0
    %2882 = vmatpush1.xpose.msra.mxu0 0.0
    %2883 = vmatprep.subr.mxu0 0.0
    %2884 = vmatpush1.xpose.msra.mxu0 0.0
    %2885 = vmatprep.subr.mxu0 0.0
    %2886 = vmatpush1.xpose.msra.mxu0 0.0
    %2887 = vmatprep.subr.mxu0 0.0
    %2888 = vmatpush1.xpose.msra.mxu0 0.0
    %2889 = vmatprep.subr.mxu0 0.0
    %2890 = vmatpush1.xpose.msra.mxu0 0.0
    %2891 = vmatprep.subr.mxu0 0.0
    %2892 = vmatpush1.xpose.msra.mxu0 0.0
    %2893 = vmatprep.subr.mxu0 0.0
    %2894 = vmatpush1.xpose.msra.mxu0 0.0
    %2895 = vmatprep.subr.mxu0 0.0
    %2896 = vmatpush1.xpose.msra.mxu0 0.0
    %2897 = vmatprep.subr.mxu0 0.0
    %2898 = vmatpush1.xpose.msra.mxu0 0.0
    %2899 = vmatprep.subr.mxu0 0.0
    %2900 = vmatpush1.xpose.msra.mxu0 0.0
    %2901 = vmatprep.subr.mxu0 0.0
    %2902 = vmatpush1.xpose.msra.mxu0 0.0
    %2903 = vmatprep.subr.mxu0 0.0
    %2904 = vmatpush1.xpose.msra.mxu0 0.0
    %2905 = vmatprep.subr.mxu0 0.0
    %2906 = vmatpush1.xpose.msra.mxu0 0.0
    %2907 = vmatprep.subr.mxu0 0.0
    %2908 = vmatpush1.xpose.msra.mxu0 0.0
    %2909 = vmatprep.subr.mxu0 0.0
    %2910 = vmatpush1.xpose.msra.mxu0 0.0
    %2911 = vmatprep.subr.mxu0 0.0
    %2912 = vmatpush1.xpose.msra.mxu0 0.0
    %2913 = vmatprep.subr.mxu0 0.0
    %2914 = vmatpush1.xpose.msra.mxu0 0.0
    %2915 = vmatprep.subr.mxu0 0.0
    %2916 = vmatpush1.xpose.msra.mxu0 0.0
    %2917 = vmatprep.subr.mxu0 0.0
    %2918 = vmatpush1.xpose.msra.mxu0 0.0
    %2919 = vmatprep.subr.mxu0 0.0
    %2920 = vmatpush1.xpose.msra.mxu0 0.0
    %2921 = vmatprep.subr.mxu0 0.0
    %2922 = vmatpush1.xpose.msra.mxu0 0.0
    %2923 = vmatprep.mubr.f32.mxu0 0.0
    %2924 = vmatmul.mubr.f32.gmra.mrb[0].mxu0 %v2855
    %v2925 = vpop.f32.mrb[0].mxu0
    %v2926 = vadd.f32 0.0, %v2925
    %v2927 = vpop.f32.mrb[0].mxu0
    %2928 = vdwg.mxu0
    %v2929 = vmul.f32 %v2848, 0.5
    %v2930 = vmul.f32 %v2926, 0.5
    %v2931 = vsel %vm542, %v2929, -inf
    %2932 = vmax.xlane.f32.xlu0 %v2931
    %v2933 = vpop.xlane.xlu0 %2932
    %v2934 = vsel %vm542, %v2930, -inf
    %2935 = vmax.xlane.f32.xlu0 %v2934
    %v2936 = vpop.xlane.xlu0 %2935
    %v2937 = vsub.f32 %v2929, %v2933
    %v2938 = vsub.f32 %v2930, %v2936
    %v2939 = vmul.f32 %v2937, 1.442695
    %v2940 = vpow.pop %v2939
    %v2941 = vmul.f32 %v2938, 1.442695
    %v2942 = vpow.pop %v2941
    %v2943 = vsel %vm542, %v2940, 0.0
    %2944 = vadd.xlane.f32.xlu0 %v2943
    %v2945 = vpop.xlane.xlu0 %2944
    %v2946 = vsel %vm542, %v2942, 0.0
    %2947 = vadd.xlane.f32.xlu0 %v2946
    %v2948 = vpop.xlane.xlu0 %2947
    %v2949 = vrcp.pop %v2945
    %v2950 = vrcp.pop %v2948
    %v2951 = vmul.f32 %v2940, %v2949
    %v2952 = vmul.f32 %v2942, %v2950
    %2953 = vrot.lane.b32.xlu0 %v379, 100
    %v2954 = vpop.permute.xlu0 %2953
    %v2957 = vsel %vm542, %v2951, 0
    %2959 = vmatprep.subr.mxu0 0.0
    %2960 = vmatpush1.msra.mxu0 %v2954
    %2961 = vmatprep.subr.mxu0 0.0
    %2962 = vmatpush1.msra.mxu0 0.0
    %2963 = vmatprep.subr.mxu0 0.0
    %2964 = vmatpush1.msra.mxu0 0.0
    %2965 = vmatprep.subr.mxu0 0.0
    %2966 = vmatpush1.msra.mxu0 0.0
    %2967 = vmatprep.subr.mxu0 0.0
    %2968 = vmatpush1.msra.mxu0 0.0
    %2969 = vmatprep.subr.mxu0 0.0
    %2970 = vmatpush1.msra.mxu0 0.0
    %2971 = vmatprep.subr.mxu0 0.0
    %2972 = vmatpush1.msra.mxu0 0.0
    %2973 = vmatprep.subr.mxu0 0.0
    %2974 = vmatpush1.msra.mxu0 0.0
    %2975 = vmatprep.subr.mxu0 0.0
    %2976 = vmatpush1.msra.mxu0 0.0
    %2977 = vmatprep.subr.mxu0 0.0
    %2978 = vmatpush1.msra.mxu0 0.0
    %2979 = vmatprep.subr.mxu0 0.0
    %2980 = vmatpush1.msra.mxu0 0.0
    %2981 = vmatprep.subr.mxu0 0.0
    %2982 = vmatpush1.msra.mxu0 0.0
    %2983 = vmatprep.subr.mxu0 0.0
    %2984 = vmatpush1.msra.mxu0 0.0
    %2985 = vmatprep.subr.mxu0 0.0
    %2986 = vmatpush1.msra.mxu0 0.0
    %2987 = vmatprep.subr.mxu0 0.0
    %2988 = vmatpush1.msra.mxu0 0.0
    %2989 = vmatprep.subr.mxu0 0.0
    %2990 = vmatpush1.msra.mxu0 0.0
    %2991 = vmatprep.subr.mxu0 0.0
    %2992 = vmatpush1.msra.mxu0 0.0
    %2993 = vmatprep.subr.mxu0 0.0
    %2994 = vmatpush1.msra.mxu0 0.0
    %2995 = vmatprep.subr.mxu0 0.0
    %2996 = vmatpush1.msra.mxu0 0.0
    %2997 = vmatprep.subr.mxu0 0.0
    %2998 = vmatpush1.msra.mxu0 0.0
    %2999 = vmatprep.subr.mxu0 0.0
    %3000 = vmatpush1.msra.mxu0 0.0
    %3001 = vmatprep.subr.mxu0 0.0
    %3002 = vmatpush1.msra.mxu0 0.0
    %3003 = vmatprep.subr.mxu0 0.0
    %3004 = vmatpush1.msra.mxu0 0.0
    %3005 = vmatprep.subr.mxu0 0.0
    %3006 = vmatpush1.msra.mxu0 0.0
    %3007 = vmatprep.subr.mxu0 0.0
    %3008 = vmatpush1.msra.mxu0 0.0
    %3009 = vmatprep.subr.mxu0 0.0
    %3010 = vmatpush1.msra.mxu0 0.0
    %3011 = vmatprep.subr.mxu0 0.0
    %3012 = vmatpush1.msra.mxu0 0.0
    %3013 = vmatprep.subr.mxu0 0.0
    %3014 = vmatpush1.msra.mxu0 0.0
    %3015 = vmatprep.subr.mxu0 0.0
    %3016 = vmatpush1.msra.mxu0 0.0
    %3017 = vmatprep.subr.mxu0 0.0
    %3018 = vmatpush1.msra.mxu0 0.0
    %3019 = vmatprep.subr.mxu0 0.0
    %3020 = vmatpush1.msra.mxu0 0.0
    %3021 = vmatprep.subr.mxu0 0.0
    %3022 = vmatpush1.msra.mxu0 0.0
    %3023 = vmatprep.mubr.f32.mxu0 0.0
    %3024 = vmatmul.mubr.f32.gmra.mrb[0].mxu0 %v2957
    %v3025 = vpop.f32.mrb[0].mxu0
    %v3026 = vadd.f32 0.0, %v3025
    %v3027 = vpop.f32.mrb[0].mxu0
    %3028 = vdwg.mxu0
    %3029 = vrot.lane.b32.xlu0 %v384, 100
    %v3030 = vpop.permute.xlu0 %3029
    %v3033 = vsel %vm542, %v2952, 0
    %3035 = vmatprep.subr.mxu0 0.0
    %3036 = vmatpush1.msra.mxu0 %v3030
    %3037 = vmatprep.subr.mxu0 0.0
    %3038 = vmatpush1.msra.mxu0 0.0
    %3039 = vmatprep.subr.mxu0 0.0
    %3040 = vmatpush1.msra.mxu0 0.0
    %3041 = vmatprep.subr.mxu0 0.0
    %3042 = vmatpush1.msra.mxu0 0.0
    %3043 = vmatprep.subr.mxu0 0.0
    %3044 = vmatpush1.msra.mxu0 0.0
    %3045 = vmatprep.subr.mxu0 0.0
    %3046 = vmatpush1.msra.mxu0 0.0
    %3047 = vmatprep.subr.mxu0 0.0
    %3048 = vmatpush1.msra.mxu0 0.0
    %3049 = vmatprep.subr.mxu0 0.0
    %3050 = vmatpush1.msra.mxu0 0.0
    %3051 = vmatprep.subr.mxu0 0.0
    %3052 = vmatpush1.msra.mxu0 0.0
    %3053 = vmatprep.subr.mxu0 0.0
    %3054 = vmatpush1.msra.mxu0 0.0
    %3055 = vmatprep.subr.mxu0 0.0
    %3056 = vmatpush1.msra.mxu0 0.0
    %3057 = vmatprep.subr.mxu0 0.0
    %3058 = vmatpush1.msra.mxu0 0.0
    %3059 = vmatprep.subr.mxu0 0.0
    %3060 = vmatpush1.msra.mxu0 0.0
    %3061 = vmatprep.subr.mxu0 0.0
    %3062 = vmatpush1.msra.mxu0 0.0
    %3063 = vmatprep.subr.mxu0 0.0
    %3064 = vmatpush1.msra.mxu0 0.0
    %3065 = vmatprep.subr.mxu0 0.0
    %3066 = vmatpush1.msra.mxu0 0.0
    %3067 = vmatprep.subr.mxu0 0.0
    %3068 = vmatpush1.msra.mxu0 0.0
    %3069 = vmatprep.subr.mxu0 0.0
    %3070 = vmatpush1.msra.mxu0 0.0
    %3071 = vmatprep.subr.mxu0 0.0
    %3072 = vmatpush1.msra.mxu0 0.0
    %3073 = vmatprep.subr.mxu0 0.0
    %3074 = vmatpush1.msra.mxu0 0.0
    %3075 = vmatprep.subr.mxu0 0.0
    %3076 = vmatpush1.msra.mxu0 0.0
    %3077 = vmatprep.subr.mxu0 0.0
    %3078 = vmatpush1.msra.mxu0 0.0
    %3079 = vmatprep.subr.mxu0 0.0
    %3080 = vmatpush1.msra.mxu0 0.0
    %3081 = vmatprep.subr.mxu0 0.0
    %3082 = vmatpush1.msra.mxu0 0.0
    %3083 = vmatprep.subr.mxu0 0.0
    %3084 = vmatpush1.msra.mxu0 0.0
    %3085 = vmatprep.subr.mxu0 0.0
    %3086 = vmatpush1.msra.mxu0 0.0
    %3087 = vmatprep.subr.mxu0 0.0
    %3088 = vmatpush1.msra.mxu0 0.0
    %3089 = vmatprep.subr.mxu0 0.0
    %3090 = vmatpush1.msra.mxu0 0.0
    %3091 = vmatprep.subr.mxu0 0.0
    %3092 = vmatpush1.msra.mxu0 0.0
    %3093 = vmatprep.subr.mxu0 0.0
    %3094 = vmatpush1.msra.mxu0 0.0
    %3095 = vmatprep.subr.mxu0 0.0
    %3096 = vmatpush1.msra.mxu0 0.0
    %3097 = vmatprep.subr.mxu0 0.0
    %3098 = vmatpush1.msra.mxu0 0.0
    %3099 = vmatprep.mubr.f32.mxu0 0.0
    %3100 = vmatmul.mubr.f32.gmra.mrb[0].mxu0 %v3033
    %v3101 = vpop.f32.mrb[0].mxu0
    %v3102 = vadd.f32 0.0, %v3101
    %v3103 = vpop.f32.mrb[0].mxu0
    %3104 = vdwg.mxu0
    %3107 = vrot.lane.b32.xlu0 %v3026, 28
    %v3108 = vpop.permute.xlu0 %3107
    %3109 = vrot.lane.b32.xlu0 %v3102, 28
    %v3110 = vpop.permute.xlu0 %3109
    %vm3113 = vcmask 261344
    %3114 = vst.msk [vmem:[#allocation2] sm:$0xff] %vm3113, %v3108
    %3115 = vst.msk [vmem:[#allocation2 + $0x8] sm:$0xff] %vm3113, %v3110
    %v3116 = vld [vmem:[#allocation2] sm:$0xff]
    %v3117 = vld [vmem:[#allocation2 + $0x8] sm:$0xff]
    %v3118 = vld [vmem:[#allocation14] sm:$0xff]
    %v3119 = vld [vmem:[#allocation14 + $0x8] sm:$0xff]
    %v3120 = vld [vmem:[#allocation14 + $0x10] sm:$0xff]
    %v3121 = vld [vmem:[#allocation14 + $0x18] sm:$0xff]
    %v3122 = vld [vmem:[%s7] sm:$0x1]
    %v3124 = vlaneseq
    %v3125 = vshrl.u32 %v3124, 7
    %v3126 = vsub.s32 0, %v3125
    %v3127 = vrot.slane %v3122, %v3126
    %v3130 = vsel %vm135, %v3116, 0
    %v3133 = vsel %vm135, %v3117, 0
    %3135 = vmatprep.subr.mxu0 0.0
    %3136 = vmatpush1.msra.mxu0 %v3118
    %3137 = vmatprep.subr.mxu0 0.0
    %3138 = vmatpush1.msra.mxu0 %v3119
    %3139 = vmatprep.subr.mxu0 0.0
    %3140 = vmatpush1.msra.mxu0 %v3120
    %3141 = vmatprep.subr.mxu0 0.0
    %3142 = vmatpush1.msra.mxu0 %v3121
    %3143 = vmatprep.subr.mxu0 0.0
    %3144 = vmatpush1.msra.mxu0 0.0
    %3145 = vmatprep.subr.mxu0 0.0
    %3146 = vmatpush1.msra.mxu0 0.0
    %3147 = vmatprep.subr.mxu0 0.0
    %3148 = vmatpush1.msra.mxu0 0.0
    %3149 = vmatprep.subr.mxu0 0.0
    %3150 = vmatpush1.msra.mxu0 0.0
    %3151 = vmatprep.subr.mxu0 0.0
    %3152 = vmatpush1.msra.mxu0 0.0
    %3153 = vmatprep.subr.mxu0 0.0
    %3154 = vmatpush1.msra.mxu0 0.0
    %3155 = vmatprep.subr.mxu0 0.0
    %3156 = vmatpush1.msra.mxu0 0.0
    %3157 = vmatprep.subr.mxu0 0.0
    %3158 = vmatpush1.msra.mxu0 0.0
    %3159 = vmatprep.subr.mxu0 0.0
    %3160 = vmatpush1.msra.mxu0 0.0
    %3161 = vmatprep.subr.mxu0 0.0
    %3162 = vmatpush1.msra.mxu0 0.0
    %3163 = vmatprep.subr.mxu0 0.0
    %3164 = vmatpush1.msra.mxu0 0.0
    %3165 = vmatprep.subr.mxu0 0.0
    %3166 = vmatpush1.msra.mxu0 0.0
    %3167 = vmatprep.subr.mxu0 0.0
    %3168 = vmatpush1.msra.mxu0 0.0
    %3169 = vmatprep.subr.mxu0 0.0
    %3170 = vmatpush1.msra.mxu0 0.0
    %3171 = vmatprep.subr.mxu0 0.0
    %3172 = vmatpush1.msra.mxu0 0.0
    %3173 = vmatprep.subr.mxu0 0.0
    %3174 = vmatpush1.msra.mxu0 0.0
    %3175 = vmatprep.subr.mxu0 0.0
    %3176 = vmatpush1.msra.mxu0 0.0
    %3177 = vmatprep.subr.mxu0 0.0
    %3178 = vmatpush1.msra.mxu0 0.0
    %3179 = vmatprep.subr.mxu0 0.0
    %3180 = vmatpush1.msra.mxu0 0.0
    %3181 = vmatprep.subr.mxu0 0.0
    %3182 = vmatpush1.msra.mxu0 0.0
    %3183 = vmatprep.subr.mxu0 0.0
    %3184 = vmatpush1.msra.mxu0 0.0
    %3185 = vmatprep.subr.mxu0 0.0
    %3186 = vmatpush1.msra.mxu0 0.0
    %3187 = vmatprep.subr.mxu0 0.0
    %3188 = vmatpush1.msra.mxu0 0.0
    %3189 = vmatprep.subr.mxu0 0.0
    %3190 = vmatpush1.msra.mxu0 0.0
    %3191 = vmatprep.subr.mxu0 0.0
    %3192 = vmatpush1.msra.mxu0 0.0
    %3193 = vmatprep.subr.mxu0 0.0
    %3194 = vmatpush1.msra.mxu0 0.0
    %3195 = vmatprep.subr.mxu0 0.0
    %3196 = vmatpush1.msra.mxu0 0.0
    %3197 = vmatprep.subr.mxu0 0.0
    %3198 = vmatpush1.msra.mxu0 0.0
    %3199 = vmatprep.mubr.f32.mxu0 0.0
    %3200 = vmatmul.mubr.f32.gmra.mrb[0].mxu0 %v3130
    %v3201 = vpop.f32.mrb[0].mxu0
    %v3202 = vadd.f32 %v3127, %v3201
    %v3203 = vpop.f32.mrb[0].mxu0
    %3204 = vmatprep.mubr.f32.mxu0 0.0
    %3205 = vmatmul.mubr.f32.gmra.mrb[0].mxu0 %v3133
    %v3206 = vpop.f32.mrb[0].mxu0
    %v3207 = vadd.f32 %v3127, %v3206
    %v3208 = vpop.f32.mrb[0].mxu0
    %3209 = vdwg.mxu0
    %3210 = vst.msk [vmem:[#allocation15] sm:$0xff] %vm135, %v3202
    %3211 = vst.msk [vmem:[#allocation15 + $0x8] sm:$0xff] %vm135, %v3207
    // Predicated region
    $region62: #{tpu_custom_call.1} parent=1 // pred_check
      _
    $region63: #{tpu_custom_call.1} parent=1 // pred_check_branch
      %3213 = sbr.rel (0) target = $region65
    $region64: #{tpu_custom_call.1} parent=1 // pred_region
      %s3215 = ssub.s32 256, 256
      %3216 = vsyncadd [#allocation5], %s3215
      %s3217 = sshll.u32 [#allocation15], 4
      %s3218 = int_to_ptr.vmem [resolvable:$true] %s3217
      %3223 = dma.vmem_to_hbm [thread:$0]  %s3218, 256, %s8, [#allocation5], 128, 128, 8
    $region65: #{tpu_custom_call.1} parent=1 // pred_fallthru
      _
    // Predicated region
    $region66: #{tpu_custom_call.1} parent=1 // pred_check
      _
    $region67: #{tpu_custom_call.1} parent=1 // pred_check_branch
      %3225 = sbr.rel (0) target = $region69
    $region68: #{tpu_custom_call.1} parent=1 // pred_region
      %3226 = dma.done [#allocation5], 256
    $region69: #{tpu_custom_call.1} parent=1 // pred_fallthru
      _
    %3227 = vsyncpa [#allocation4], 1
    %3228 = vsyncpa [#allocation7], 1
    %3229 = vsyncpa [#allocation10], 1
    %3230 = vsyncpa [#allocation13], 1
    %3231 = vsyncpa [#allocation5], 1

</llo_original>
